<compile_context>
chip_gen: v5e
topology: v5e:2x2
jax: 0.10.0
libtpu: 0.0.40
codegen_flags: <defaults>
</compile_context>

<pallas_src>
import numpy as np
import jax
import jax.numpy as jnp
from jax import lax
from jax.experimental import pallas as pl
from jax.experimental.pallas import tpu as pltpu


def _nbytes(shape, dtype):
    return int(np.prod(shape)) * np.dtype(dtype).itemsize


def _build_banded_weight(w, H, W, phase_order):
    """Fold (kh, kw, ci) into the contraction of a banded matmul matrix.

    w: (Cout, Cin, K, K, K) conv weight.  Returns bf16 (K, H*W*Cin, H*W*Cout) so
    that for every output depth d:  out[d, col] = sum_kd x_fused[d + kd, :] @ band[kd].
    Input columns are the UN-padded (h', w', ci) row-major positions (zero-padded
    H/W columns contribute nothing, so they are dropped from the band).  Output
    columns are (h, w, co) row-major, or phase-grouped ((hz,wz), ho, wo, co) when
    phase_order=True (enables the fused 2x2 H/W max-pool).
    """
    Cout, Cin, K = w.shape[0], w.shape[1], w.shape[2]
    pad = K // 2
    sel_h = np.zeros((K, H, H), np.float32)
    sel_w = np.zeros((K, W, W), np.float32)
    for k in range(K):
        for y in range(H):
            src = y + k - pad
            if 0 <= src < H:
                sel_h[k, y, src] = 1.0
        for x in range(W):
            src = x + k - pad
            if 0 <= src < W:
                sel_w[k, x, src] = 1.0
    # band[kd, h', w', ci, h, w, co] = w[co, ci, kd, h'-h+pad, w'-w+pad] (0 outside band)
    band = jnp.einsum('oidhw,hyY,wxX->dYXiyxo', w.astype(jnp.float32),
                      jnp.asarray(sel_h), jnp.asarray(sel_w))
    if phase_order:
        Ho, Wo = H // 2, W // 2
        band = band.reshape(K, H, W, Cin, Ho, 2, Wo, 2, Cout)
        band = band.transpose(0, 1, 2, 3, 5, 7, 4, 6, 8)   # (..., hz, wz, ho, wo, co)
    return band.reshape(K, H * W * Cin, H * W * Cout).astype(jnp.bfloat16)


def _make_fused_kernel(N, D, H, W, Cin, Cout, K1, K2, apply_norm, eps=1e-5):
    """Fused Conv3d(5,p2) [+IN+ReLU] Conv3d(3,p1) [+IN+ReLU] MaxPool3d(2,2)."""
    pad1, pad2 = K1 // 2, K2 // 2
    Dp1 = D + 2 * pad1
    R1 = H * W * Cin                 # conv_11 banded contraction per depth tap
    L = H * W * Cout                 # lane-dense activation width
    Do, Ho, Wo = D // 2, H // 2, W // 2
    Lp = Ho * Wo * Cout              # pooled lane width (one 2x2 H/W phase block)

    def kernel(*refs):
        if apply_norm:
            (x_ref, w1_ref, w2_ref, b1_ref, b2_ref, pr_ref, pb_ref,
             o_ref, y1_ref, zp_ref) = refs
        else:
            (x_ref, w1_ref, w2_ref, b1_ref, b2_ref,
             o_ref, y1_ref, zp_ref) = refs
            pr_ref = pb_ref = None

        def in_relu(y):
            # InstanceNorm3d (affine=False, biased var, eps) + ReLU, f32 math.
            # Per-channel stats: sublane sum, then tiny (L,Cout)/(Cout,L) matmuls
            # (reduce + broadcast) instead of the old 1 MB (L,L) projector.
            s = jnp.sum(y, axis=0, keepdims=True)                          # (1, L)
            mean_b = jnp.dot(jnp.dot(s, pr_ref[...],
                                     preferred_element_type=jnp.float32),
                             pb_ref[...], preferred_element_type=jnp.float32)
            cen = y - mean_b
            v = jnp.sum(cen * cen, axis=0, keepdims=True)                  # (1, L)
            var_b = jnp.dot(jnp.dot(v, pr_ref[...],
                                    preferred_element_type=jnp.float32),
                            pb_ref[...], preferred_element_type=jnp.float32)
            return jnp.maximum(cen * lax.rsqrt(var_b + eps), 0.0)

        # ---- conv_11: K1 banded bf16 matmuls, bias folded into accumulator init ----
        acc = b1_ref[...] + jnp.dot(x_ref[0, 0:D, :], w1_ref[0],
                                    preferred_element_type=jnp.float32)    # (D, L) f32
        for kd in range(1, K1):
            acc = acc + jnp.dot(x_ref[0, kd:kd + D, :], w1_ref[kd],
                                preferred_element_type=jnp.float32)
        y1 = in_relu(acc) if apply_norm else acc

        # ---- stage y1 (D-padded) in VMEM; zeroed border rows = conv_2 depth pad ----
        y1_ref[0:pad2, :] = jnp.zeros((pad2, L), jnp.float32)
        y1_ref[pad2 + D:pad2 + D + pad2, :] = jnp.zeros((pad2, L), jnp.float32)
        y1_ref[pad2:pad2 + D, :] = y1

        # ---- conv_2: K2 banded bf16 matmuls over the staged activation ----
        acc2 = b2_ref[...] + jnp.dot(y1_ref[0:D, :].astype(jnp.bfloat16), w2_ref[0],
                                     preferred_element_type=jnp.float32)   # (D, L) f32
        for kd in range(1, K2):
            acc2 = acc2 + jnp.dot(y1_ref[kd:kd + D, :].astype(jnp.bfloat16),
                                  w2_ref[kd], preferred_element_type=jnp.float32)
        y2 = in_relu(acc2) if apply_norm else acc2

        # ---- MaxPool3d(2,2): H/W = max over 4 contiguous phase lane-blocks
        #      (pure VPU on the live value), then depth = strided sublane max via
        #      a small (D, Lp) scratch bounce.
        m = y2[:, 0:Lp]
        for ph in range(1, 4):
            m = jnp.maximum(m, y2[:, ph * Lp:(ph + 1) * Lp])               # (D, Lp)
        zp_ref[...] = m
        o_ref[...] = jnp.maximum(zp_ref[pl.ds(0, Do, stride=2), :],
                                 zp_ref[pl.ds(1, Do, stride=2), :]).reshape(1, Do, Lp)

    # VMEM budget: double-buffered blocks + scratch + headroom (do NOT request all
    # of v7x's 64 MiB).  The grid-invariant bands are only DMA'd once.
    per_step = (_nbytes((1, Dp1, R1), jnp.bfloat16)
                + _nbytes((K1, R1, L), jnp.bfloat16)
                + _nbytes((K2, L, L), jnp.bfloat16)
                + 2 * _nbytes((1, L), jnp.float32)
                + ((_nbytes((L, Cout), jnp.float32) + _nbytes((Cout, L), jnp.float32))
                   if apply_norm else 0)
                + _nbytes((1, Do, Lp), jnp.float32))
    scratch = _nbytes((D + 2 * pad2, L), jnp.float32) + _nbytes((D, Lp), jnp.float32)
    vmem_limit = int(2 * per_step + scratch + 8 * 1024 * 1024)

    def run(x_fused, band1, band2, bias1, bias2, p_red=None, p_bc=None):
        in_arrays = [x_fused, band1, band2, bias1, bias2]
        in_specs = [
            pl.BlockSpec((1, Dp1, R1), lambda n: (n, 0, 0)),
            pl.BlockSpec((K1, R1, L), lambda n: (0, 0, 0)),   # grid-invariant
            pl.BlockSpec((K2, L, L), lambda n: (0, 0, 0)),    # grid-invariant
            pl.BlockSpec((1, L), lambda n: (0, 0)),
            pl.BlockSpec((1, L), lambda n: (0, 0)),
        ]
        if apply_norm:
            in_arrays += [p_red, p_bc]
            in_specs += [pl.BlockSpec((L, Cout), lambda n: (0, 0)),
                         pl.BlockSpec((Cout, L), lambda n: (0, 0))]
        return pl.pallas_call(
            kernel,
            out_shape=jax.ShapeDtypeStruct((N, Do, Lp), jnp.float32),
            grid=(N,),
            in_specs=in_specs,
            out_specs=pl.BlockSpec((1, Do, Lp), lambda n: (n, 0, 0)),
            scratch_shapes=[pltpu.VMEM((D + 2 * pad2, L), jnp.float32),
                            pltpu.VMEM((D, Lp), jnp.float32)],
            compiler_params=pltpu.CompilerParams(
                dimension_semantics=("parallel",),
                vmem_limit_bytes=vmem_limit),
        )(*in_arrays)

    return run


def double_conv_in_forward(x, params, mode="MY"):
    """Pallas forward of double_conv_in.  x: (N, Cin, D, H, W) float32 (NCDHW)."""
    N, Cin, D, H, W = x.shape
    w1, b1, w2, b2 = params["w1"], params["b1"], params["w2"], params["b2"]
    Cout = w1.shape[0]
    K1, K2 = w1.shape[2], w2.shape[2]               # 5, 3
    pad1 = K1 // 2
    apply_norm = mode in ("MY", "GE")

    # NDHWC, flatten (h, w, c) -> lanes, pad along D only (no H/W pad pass), bf16.
    xl = jnp.transpose(x, (0, 2, 3, 4, 1)).reshape(N, D, H * W * Cin)
    x_fused = jnp.pad(xl, ((0, 0), (pad1, pad1), (0, 0))).astype(jnp.bfloat16)

    band1 = _build_banded_weight(w1, H, W, phase_order=False)     # (5, HWCin, L) bf16
    band2 = _build_banded_weight(w2, H, W, phase_order=True)      # (3, L, L)    bf16

    # Bias per output column (channel is fastest-varying in both column orderings).
    bias1 = jnp.tile(b1.astype(jnp.float32), H * W)[None, :]      # (1, L)
    bias2 = jnp.tile(b2.astype(jnp.float32), H * W)[None, :]      # (1, L)

    p_red = p_bc = None
    if apply_norm:
        eye = np.eye(Cout, dtype=np.float32)
        p_bc_np = np.tile(eye, (1, H * W))                        # (Cout, L) broadcast
        p_red = jnp.asarray(p_bc_np.T / float(D * H * W))         # (L, Cout) reduce
        p_bc = jnp.asarray(p_bc_np)

    run = _make_fused_kernel(N, D, H, W, Cin, Cout, K1, K2, apply_norm)
    y = run(x_fused, band1, band2, bias1, bias2, p_red, p_bc)

    Do, Ho, Wo = D // 2, H // 2, W // 2
    y = y.reshape(N, Do, Ho, Wo, Cout)
    return jnp.transpose(y, (0, 4, 1, 2, 3))        # back to NCDHW


def reference_forward(x, params, mode="MY", eps=1e-5):
    """Pure-JAX reference (matches PyTorch semantics) for validation."""
    w1, b1, w2, b2 = params["w1"], params["b1"], params["w2"], params["b2"]
    apply_norm = mode in ("MY", "GE")

    def conv(y, w, b, pad):
        dn = lax.conv_dimension_numbers(y.shape, w.shape, ("NCDHW", "OIDHW", "NCDHW"))
        y = lax.conv_general_dilated(y, w, (1, 1, 1), [(pad, pad)] * 3,
                                     dimension_numbers=dn,
                                     precision=lax.Precision.HIGHEST)
        return y + b[None, :, None, None, None]

    def in_relu(y):
        m = jnp.mean(y, axis=(2, 3, 4), keepdims=True)
        v = jnp.mean(jnp.square(y - m), axis=(2, 3, 4), keepdims=True)
        return jnp.maximum((y - m) * lax.rsqrt(v + eps), 0.0)

    y = conv(x, w1, b1, 2)
    if apply_norm:
        y = in_relu(y)
    y = conv(y, w2, b2, 1)
    if apply_norm:
        y = in_relu(y)
    return lax.reduce_window(y, -jnp.inf, lax.max,
                             (1, 1, 2, 2, 2), (1, 1, 2, 2, 2), "VALID")


def init_params(key, in_ch, out_ch):
    k1, k2, k3, k4 = jax.random.split(key, 4)
    s1 = 1.0 / float((in_ch * 5 ** 3) ** 0.5)
    s2 = 1.0 / float((out_ch * 3 ** 3) ** 0.5)
    return {
        "w1": jax.random.uniform(k1, (out_ch, in_ch, 5, 5, 5), jnp.float32, -s1, s1),
        "b1": jax.random.uniform(k2, (out_ch,), jnp.float32, -s1, s1),
        "w2": jax.random.uniform(k3, (out_ch, out_ch, 3, 3, 3), jnp.float32, -s2, s2),
        "b2": jax.random.uniform(k4, (out_ch,), jnp.float32, -s2, s2),
    }


if __name__ == "__main__":
    in_ch, out_ch = 4, 8
    N, D, H, W = 2, 8, 8, 8
    mode = "MY"

    key = jax.random.PRNGKey(0)
    kx, kp = jax.random.split(key)
    x = jax.random.normal(kx, (N, in_ch, D, H, W), dtype=jnp.float32)
    params = init_params(kp, in_ch, out_ch)

    out = double_conv_in_forward(x, params, mode=mode)
    out = jax.block_until_ready(out)
    assert out.shape == (N, out_ch, D // 2, H // 2, W // 2), out.shape

    ref = jax.block_until_ready(reference_forward(x, params, mode=mode))
    max_diff = float(jnp.max(jnp.abs(out - ref)))
    # bf16 weights/activations with f32 accumulation -> slightly looser tolerance
    # than the pure-f32 version.
    assert bool(jnp.allclose(out, ref, rtol=3e-2, atol=3e-2)), (
        "mismatch vs reference, max abs diff = %g" % max_diff)

    print("KERNEL_OK")
</pallas_src>

<mosaic_0001>
module attributes {stable_mosaic.version = 11 : i64} {
  func.func @kernel(%arg0: i32, %arg1: memref<1x12x256xbf16, #tpu.memory_space<vmem>>, %arg2: memref<5x256x512xbf16, #tpu.memory_space<vmem>>, %arg3: memref<3x512x512xbf16, #tpu.memory_space<vmem>>, %arg4: memref<1x512xf32, #tpu.memory_space<vmem>>, %arg5: memref<1x512xf32, #tpu.memory_space<vmem>>, %arg6: memref<512x8xf32, #tpu.memory_space<vmem>>, %arg7: memref<8x512xf32, #tpu.memory_space<vmem>>, %arg8: memref<1x4x128xf32, #tpu.memory_space<vmem>>, %arg9: memref<10x512xf32, #tpu.memory_space<vmem>>, %arg10: memref<8x128xf32, #tpu.memory_space<vmem>>) attributes {dimension_semantics = [#tpu.dimension_semantics<parallel>], iteration_bounds = array<i64: 2>, scalar_prefetch = 0 : i64, scratch_operands = 2 : i64, tpu.core_type = #tpu.core_type<tc>, window_params = [{transform_indices = @transform_0, window_bounds = array<i64: 1, 12, 256>}, {pipeline_mode = #tpu.pipeline_mode<synchronous>, transform_indices = @transform_1, window_bounds = array<i64: 5, 256, 512>}, {pipeline_mode = #tpu.pipeline_mode<synchronous>, transform_indices = @transform_2, window_bounds = array<i64: 3, 512, 512>}, {pipeline_mode = #tpu.pipeline_mode<synchronous>, transform_indices = @transform_3, window_bounds = array<i64: 1, 512>}, {pipeline_mode = #tpu.pipeline_mode<synchronous>, transform_indices = @transform_4, window_bounds = array<i64: 1, 512>}, {pipeline_mode = #tpu.pipeline_mode<synchronous>, transform_indices = @transform_5, window_bounds = array<i64: 512, 8>}, {pipeline_mode = #tpu.pipeline_mode<synchronous>, transform_indices = @transform_6, window_bounds = array<i64: 8, 512>}, {transform_indices = @transform_7, window_bounds = array<i64: 1, 4, 128>}]} {
    %c0 = arith.constant 0 : index
    %c0_0 = arith.constant 0 : index
    %0 = vector.load %arg4[%c0, %c0_0] : memref<1x512xf32, #tpu.memory_space<vmem>>, vector<1x512xf32>
    %c0_1 = arith.constant 0 : index
    %c0_2 = arith.constant 0 : index
    %c0_3 = arith.constant 0 : index
    %1 = vector.load %arg1[%c0_1, %c0_2, %c0_3] : memref<1x12x256xbf16, #tpu.memory_space<vmem>>, vector<1x8x256xbf16>
    %2 = vector.shape_cast %1 : vector<1x8x256xbf16> to vector<8x256xbf16>
    %c0_4 = arith.constant 0 : index
    %c0_5 = arith.constant 0 : index
    %c0_6 = arith.constant 0 : index
    %3 = vector.load %arg2[%c0_4, %c0_5, %c0_6] : memref<5x256x512xbf16, #tpu.memory_space<vmem>>, vector<1x256x512xbf16>
    %4 = vector.shape_cast %3 : vector<1x256x512xbf16> to vector<256x512xbf16>
    %cst = arith.constant dense<0.000000e+00> : vector<8x512xf32>
    %5 = tpu.matmul %2, %4, %cst {dimension_numbers = #tpu.dot_dimension_numbers<[1], [0], [0], [1], [0, 0, 1, 1], [], []>} : vector<8x256xbf16>, vector<256x512xbf16>, vector<8x512xf32> -> vector<8x512xf32>
    %6 = vector.broadcast %0 : vector<1x512xf32> to vector<8x512xf32>
    %7 = arith.addf %6, %5 : vector<8x512xf32>
    %c0_7 = arith.constant 0 : index
    %c1 = arith.constant 1 : index
    %c0_8 = arith.constant 0 : index
    %8 = vector.load %arg1[%c0_7, %c1, %c0_8] : memref<1x12x256xbf16, #tpu.memory_space<vmem>>, vector<1x8x256xbf16>
    %9 = vector.shape_cast %8 : vector<1x8x256xbf16> to vector<8x256xbf16>
    %c1_9 = arith.constant 1 : index
    %c0_10 = arith.constant 0 : index
    %c0_11 = arith.constant 0 : index
    %10 = vector.load %arg2[%c1_9, %c0_10, %c0_11] : memref<5x256x512xbf16, #tpu.memory_space<vmem>>, vector<1x256x512xbf16>
    %11 = vector.shape_cast %10 : vector<1x256x512xbf16> to vector<256x512xbf16>
    %cst_12 = arith.constant dense<0.000000e+00> : vector<8x512xf32>
    %12 = tpu.matmul %9, %11, %cst_12 {dimension_numbers = #tpu.dot_dimension_numbers<[1], [0], [0], [1], [0, 0, 1, 1], [], []>} : vector<8x256xbf16>, vector<256x512xbf16>, vector<8x512xf32> -> vector<8x512xf32>
    %13 = arith.addf %7, %12 : vector<8x512xf32>
    %c0_13 = arith.constant 0 : index
    %c2 = arith.constant 2 : index
    %c0_14 = arith.constant 0 : index
    %14 = vector.load %arg1[%c0_13, %c2, %c0_14] : memref<1x12x256xbf16, #tpu.memory_space<vmem>>, vector<1x8x256xbf16>
    %15 = vector.shape_cast %14 : vector<1x8x256xbf16> to vector<8x256xbf16>
    %c2_15 = arith.constant 2 : index
    %c0_16 = arith.constant 0 : index
    %c0_17 = arith.constant 0 : index
    %16 = vector.load %arg2[%c2_15, %c0_16, %c0_17] : memref<5x256x512xbf16, #tpu.memory_space<vmem>>, vector<1x256x512xbf16>
    %17 = vector.shape_cast %16 : vector<1x256x512xbf16> to vector<256x512xbf16>
    %cst_18 = arith.constant dense<0.000000e+00> : vector<8x512xf32>
    %18 = tpu.matmul %15, %17, %cst_18 {dimension_numbers = #tpu.dot_dimension_numbers<[1], [0], [0], [1], [0, 0, 1, 1], [], []>} : vector<8x256xbf16>, vector<256x512xbf16>, vector<8x512xf32> -> vector<8x512xf32>
    %19 = arith.addf %13, %18 : vector<8x512xf32>
    %c0_19 = arith.constant 0 : index
    %c3 = arith.constant 3 : index
    %c0_20 = arith.constant 0 : index
    %20 = vector.load %arg1[%c0_19, %c3, %c0_20] : memref<1x12x256xbf16, #tpu.memory_space<vmem>>, vector<1x8x256xbf16>
    %21 = vector.shape_cast %20 : vector<1x8x256xbf16> to vector<8x256xbf16>
    %c3_21 = arith.constant 3 : index
    %c0_22 = arith.constant 0 : index
    %c0_23 = arith.constant 0 : index
    %22 = vector.load %arg2[%c3_21, %c0_22, %c0_23] : memref<5x256x512xbf16, #tpu.memory_space<vmem>>, vector<1x256x512xbf16>
    %23 = vector.shape_cast %22 : vector<1x256x512xbf16> to vector<256x512xbf16>
    %cst_24 = arith.constant dense<0.000000e+00> : vector<8x512xf32>
    %24 = tpu.matmul %21, %23, %cst_24 {dimension_numbers = #tpu.dot_dimension_numbers<[1], [0], [0], [1], [0, 0, 1, 1], [], []>} : vector<8x256xbf16>, vector<256x512xbf16>, vector<8x512xf32> -> vector<8x512xf32>
    %25 = arith.addf %19, %24 : vector<8x512xf32>
    %c0_25 = arith.constant 0 : index
    %c4 = arith.constant 4 : index
    %c0_26 = arith.constant 0 : index
    %26 = vector.load %arg1[%c0_25, %c4, %c0_26] : memref<1x12x256xbf16, #tpu.memory_space<vmem>>, vector<1x8x256xbf16>
    %27 = vector.shape_cast %26 : vector<1x8x256xbf16> to vector<8x256xbf16>
    %c4_27 = arith.constant 4 : index
    %c0_28 = arith.constant 0 : index
    %c0_29 = arith.constant 0 : index
    %28 = vector.load %arg2[%c4_27, %c0_28, %c0_29] : memref<5x256x512xbf16, #tpu.memory_space<vmem>>, vector<1x256x512xbf16>
    %29 = vector.shape_cast %28 : vector<1x256x512xbf16> to vector<256x512xbf16>
    %cst_30 = arith.constant dense<0.000000e+00> : vector<8x512xf32>
    %30 = tpu.matmul %27, %29, %cst_30 {dimension_numbers = #tpu.dot_dimension_numbers<[1], [0], [0], [1], [0, 0, 1, 1], [], []>} : vector<8x256xbf16>, vector<256x512xbf16>, vector<8x512xf32> -> vector<8x512xf32>
    %31 = arith.addf %25, %30 : vector<8x512xf32>
    %cst_31 = arith.constant dense<0.000000e+00> : vector<512xf32>
    %32 = vector.multi_reduction <add>, %31, %cst_31 [0] : vector<8x512xf32> to vector<512xf32>
    %33 = vector.shape_cast %32 : vector<512xf32> to vector<1x512xf32>
    %c0_32 = arith.constant 0 : index
    %c0_33 = arith.constant 0 : index
    %34 = vector.load %arg6[%c0_32, %c0_33] : memref<512x8xf32, #tpu.memory_space<vmem>>, vector<512x8xf32>
    %cst_34 = arith.constant dense<0.000000e+00> : vector<1x8xf32>
    %35 = tpu.matmul %33, %34, %cst_34 {dimension_numbers = #tpu.dot_dimension_numbers<[1], [0], [0], [1], [0, 0, 1, 1], [], []>} : vector<1x512xf32>, vector<512x8xf32>, vector<1x8xf32> -> vector<1x8xf32>
    %c0_35 = arith.constant 0 : index
    %c0_36 = arith.constant 0 : index
    %36 = vector.load %arg7[%c0_35, %c0_36] : memref<8x512xf32, #tpu.memory_space<vmem>>, vector<8x512xf32>
    %cst_37 = arith.constant dense<0.000000e+00> : vector<1x512xf32>
    %37 = tpu.matmul %35, %36, %cst_37 {dimension_numbers = #tpu.dot_dimension_numbers<[1], [0], [0], [1], [0, 0, 1, 1], [], []>} : vector<1x8xf32>, vector<8x512xf32>, vector<1x512xf32> -> vector<1x512xf32>
    %38 = vector.broadcast %37 : vector<1x512xf32> to vector<8x512xf32>
    %39 = arith.subf %31, %38 : vector<8x512xf32>
    %40 = arith.mulf %39, %39 : vector<8x512xf32>
    %cst_38 = arith.constant dense<0.000000e+00> : vector<512xf32>
    %41 = vector.multi_reduction <add>, %40, %cst_38 [0] : vector<8x512xf32> to vector<512xf32>
    %42 = vector.shape_cast %41 : vector<512xf32> to vector<1x512xf32>
    %c0_39 = arith.constant 0 : index
    %c0_40 = arith.constant 0 : index
    %43 = vector.load %arg6[%c0_39, %c0_40] : memref<512x8xf32, #tpu.memory_space<vmem>>, vector<512x8xf32>
    %cst_41 = arith.constant dense<0.000000e+00> : vector<1x8xf32>
    %44 = tpu.matmul %42, %43, %cst_41 {dimension_numbers = #tpu.dot_dimension_numbers<[1], [0], [0], [1], [0, 0, 1, 1], [], []>} : vector<1x512xf32>, vector<512x8xf32>, vector<1x8xf32> -> vector<1x8xf32>
    %c0_42 = arith.constant 0 : index
    %c0_43 = arith.constant 0 : index
    %45 = vector.load %arg7[%c0_42, %c0_43] : memref<8x512xf32, #tpu.memory_space<vmem>>, vector<8x512xf32>
    %cst_44 = arith.constant dense<0.000000e+00> : vector<1x512xf32>
    %46 = tpu.matmul %44, %45, %cst_44 {dimension_numbers = #tpu.dot_dimension_numbers<[1], [0], [0], [1], [0, 0, 1, 1], [], []>} : vector<1x8xf32>, vector<8x512xf32>, vector<1x512xf32> -> vector<1x512xf32>
    %cst_45 = arith.constant 9.99999974E-6 : f32
    %47 = vector.broadcast %cst_45 : f32 to vector<1x512xf32>
    %48 = arith.addf %46, %47 : vector<1x512xf32>
    %49 = math.rsqrt %48 : vector<1x512xf32>
    %50 = vector.broadcast %49 : vector<1x512xf32> to vector<8x512xf32>
    %51 = arith.mulf %39, %50 : vector<8x512xf32>
    %cst_46 = arith.constant 0.000000e+00 : f32
    %52 = vector.broadcast %cst_46 : f32 to vector<8x512xf32>
    %53 = arith.maximumf %51, %52 : vector<8x512xf32>
    %cst_47 = arith.constant 0.000000e+00 : f32
    %54 = vector.broadcast %cst_47 : f32 to vector<1x512xf32>
    %c0_48 = arith.constant 0 : index
    %c0_49 = arith.constant 0 : index
    %55 = vector.load %arg9[%c0_48, %c0_49] : memref<10x512xf32, #tpu.memory_space<vmem>>, vector<1x512xf32>
    tpu.vector_store %arg9[%c0_48, %c0_49], %54 {strides = array<i32>} : memref<10x512xf32, #tpu.memory_space<vmem>>, vector<1x512xf32>,
    %cst_50 = arith.constant 0.000000e+00 : f32
    %56 = vector.broadcast %cst_50 : f32 to vector<1x512xf32>
    %c9 = arith.constant 9 : index
    %c0_51 = arith.constant 0 : index
    %57 = vector.load %arg9[%c9, %c0_51] : memref<10x512xf32, #tpu.memory_space<vmem>>, vector<1x512xf32>
    tpu.vector_store %arg9[%c9, %c0_51], %56 {strides = array<i32>} : memref<10x512xf32, #tpu.memory_space<vmem>>, vector<1x512xf32>,
    %c1_52 = arith.constant 1 : index
    %c0_53 = arith.constant 0 : index
    %58 = vector.load %arg9[%c1_52, %c0_53] : memref<10x512xf32, #tpu.memory_space<vmem>>, vector<8x512xf32>
    tpu.vector_store %arg9[%c1_52, %c0_53], %53 {strides = array<i32>} : memref<10x512xf32, #tpu.memory_space<vmem>>, vector<8x512xf32>,
    %c0_54 = arith.constant 0 : index
    %c0_55 = arith.constant 0 : index
    %59 = vector.load %arg5[%c0_54, %c0_55] : memref<1x512xf32, #tpu.memory_space<vmem>>, vector<1x512xf32>
    %c0_56 = arith.constant 0 : index
    %c0_57 = arith.constant 0 : index
    %60 = vector.load %arg9[%c0_56, %c0_57] : memref<10x512xf32, #tpu.memory_space<vmem>>, vector<8x512xf32>
    %61 = arith.truncf %60 : vector<8x512xf32> to vector<8x512xbf16>
    %c0_58 = arith.constant 0 : index
    %c0_59 = arith.constant 0 : index
    %c0_60 = arith.constant 0 : index
    %62 = vector.load %arg3[%c0_58, %c0_59, %c0_60] : memref<3x512x512xbf16, #tpu.memory_space<vmem>>, vector<1x512x512xbf16>
    %63 = vector.shape_cast %62 : vector<1x512x512xbf16> to vector<512x512xbf16>
    %cst_61 = arith.constant dense<0.000000e+00> : vector<8x512xf32>
    %64 = tpu.matmul %61, %63, %cst_61 {dimension_numbers = #tpu.dot_dimension_numbers<[1], [0], [0], [1], [0, 0, 1, 1], [], []>} : vector<8x512xbf16>, vector<512x512xbf16>, vector<8x512xf32> -> vector<8x512xf32>
    %65 = vector.broadcast %59 : vector<1x512xf32> to vector<8x512xf32>
    %66 = arith.addf %65, %64 : vector<8x512xf32>
    %c1_62 = arith.constant 1 : index
    %c0_63 = arith.constant 0 : index
    %67 = vector.load %arg9[%c1_62, %c0_63] : memref<10x512xf32, #tpu.memory_space<vmem>>, vector<8x512xf32>
    %68 = arith.truncf %67 : vector<8x512xf32> to vector<8x512xbf16>
    %c1_64 = arith.constant 1 : index
    %c0_65 = arith.constant 0 : index
    %c0_66 = arith.constant 0 : index
    %69 = vector.load %arg3[%c1_64, %c0_65, %c0_66] : memref<3x512x512xbf16, #tpu.memory_space<vmem>>, vector<1x512x512xbf16>
    %70 = vector.shape_cast %69 : vector<1x512x512xbf16> to vector<512x512xbf16>
    %cst_67 = arith.constant dense<0.000000e+00> : vector<8x512xf32>
    %71 = tpu.matmul %68, %70, %cst_67 {dimension_numbers = #tpu.dot_dimension_numbers<[1], [0], [0], [1], [0, 0, 1, 1], [], []>} : vector<8x512xbf16>, vector<512x512xbf16>, vector<8x512xf32> -> vector<8x512xf32>
    %72 = arith.addf %66, %71 : vector<8x512xf32>
    %c2_68 = arith.constant 2 : index
    %c0_69 = arith.constant 0 : index
    %73 = vector.load %arg9[%c2_68, %c0_69] : memref<10x512xf32, #tpu.memory_space<vmem>>, vector<8x512xf32>
    %74 = arith.truncf %73 : vector<8x512xf32> to vector<8x512xbf16>
    %c2_70 = arith.constant 2 : index
    %c0_71 = arith.constant 0 : index
    %c0_72 = arith.constant 0 : index
    %75 = vector.load %arg3[%c2_70, %c0_71, %c0_72] : memref<3x512x512xbf16, #tpu.memory_space<vmem>>, vector<1x512x512xbf16>
    %76 = vector.shape_cast %75 : vector<1x512x512xbf16> to vector<512x512xbf16>
    %cst_73 = arith.constant dense<0.000000e+00> : vector<8x512xf32>
    %77 = tpu.matmul %74, %76, %cst_73 {dimension_numbers = #tpu.dot_dimension_numbers<[1], [0], [0], [1], [0, 0, 1, 1], [], []>} : vector<8x512xbf16>, vector<512x512xbf16>, vector<8x512xf32> -> vector<8x512xf32>
    %78 = arith.addf %72, %77 : vector<8x512xf32>
    %cst_74 = arith.constant dense<0.000000e+00> : vector<512xf32>
    %79 = vector.multi_reduction <add>, %78, %cst_74 [0] : vector<8x512xf32> to vector<512xf32>
    %80 = vector.shape_cast %79 : vector<512xf32> to vector<1x512xf32>
    %c0_75 = arith.constant 0 : index
    %c0_76 = arith.constant 0 : index
    %81 = vector.load %arg6[%c0_75, %c0_76] : memref<512x8xf32, #tpu.memory_space<vmem>>, vector<512x8xf32>
    %cst_77 = arith.constant dense<0.000000e+00> : vector<1x8xf32>
    %82 = tpu.matmul %80, %81, %cst_77 {dimension_numbers = #tpu.dot_dimension_numbers<[1], [0], [0], [1], [0, 0, 1, 1], [], []>} : vector<1x512xf32>, vector<512x8xf32>, vector<1x8xf32> -> vector<1x8xf32>
    %c0_78 = arith.constant 0 : index
    %c0_79 = arith.constant 0 : index
    %83 = vector.load %arg7[%c0_78, %c0_79] : memref<8x512xf32, #tpu.memory_space<vmem>>, vector<8x512xf32>
    %cst_80 = arith.constant dense<0.000000e+00> : vector<1x512xf32>
    %84 = tpu.matmul %82, %83, %cst_80 {dimension_numbers = #tpu.dot_dimension_numbers<[1], [0], [0], [1], [0, 0, 1, 1], [], []>} : vector<1x8xf32>, vector<8x512xf32>, vector<1x512xf32> -> vector<1x512xf32>
    %85 = vector.broadcast %84 : vector<1x512xf32> to vector<8x512xf32>
    %86 = arith.subf %78, %85 : vector<8x512xf32>
    %87 = arith.mulf %86, %86 : vector<8x512xf32>
    %cst_81 = arith.constant dense<0.000000e+00> : vector<512xf32>
    %88 = vector.multi_reduction <add>, %87, %cst_81 [0] : vector<8x512xf32> to vector<512xf32>
    %89 = vector.shape_cast %88 : vector<512xf32> to vector<1x512xf32>
    %c0_82 = arith.constant 0 : index
    %c0_83 = arith.constant 0 : index
    %90 = vector.load %arg6[%c0_82, %c0_83] : memref<512x8xf32, #tpu.memory_space<vmem>>, vector<512x8xf32>
    %cst_84 = arith.constant dense<0.000000e+00> : vector<1x8xf32>
    %91 = tpu.matmul %89, %90, %cst_84 {dimension_numbers = #tpu.dot_dimension_numbers<[1], [0], [0], [1], [0, 0, 1, 1], [], []>} : vector<1x512xf32>, vector<512x8xf32>, vector<1x8xf32> -> vector<1x8xf32>
    %c0_85 = arith.constant 0 : index
    %c0_86 = arith.constant 0 : index
    %92 = vector.load %arg7[%c0_85, %c0_86] : memref<8x512xf32, #tpu.memory_space<vmem>>, vector<8x512xf32>
    %cst_87 = arith.constant dense<0.000000e+00> : vector<1x512xf32>
    %93 = tpu.matmul %91, %92, %cst_87 {dimension_numbers = #tpu.dot_dimension_numbers<[1], [0], [0], [1], [0, 0, 1, 1], [], []>} : vector<1x8xf32>, vector<8x512xf32>, vector<1x512xf32> -> vector<1x512xf32>
    %cst_88 = arith.constant 9.99999974E-6 : f32
    %94 = vector.broadcast %cst_88 : f32 to vector<1x512xf32>
    %95 = arith.addf %93, %94 : vector<1x512xf32>
    %96 = math.rsqrt %95 : vector<1x512xf32>
    %97 = vector.broadcast %96 : vector<1x512xf32> to vector<8x512xf32>
    %98 = arith.mulf %86, %97 : vector<8x512xf32>
    %cst_89 = arith.constant 0.000000e+00 : f32
    %99 = vector.broadcast %cst_89 : f32 to vector<8x512xf32>
    %100 = arith.maximumf %98, %99 : vector<8x512xf32>
    %101 = vector.extract_strided_slice %100 {offsets = [0, 0], sizes = [8, 128], strides = [1, 1]} : vector<8x512xf32> to vector<8x128xf32>
    %102 = vector.extract_strided_slice %100 {offsets = [0, 128], sizes = [8, 128], strides = [1, 1]} : vector<8x512xf32> to vector<8x128xf32>
    %103 = arith.maximumf %101, %102 : vector<8x128xf32>
    %104 = vector.extract_strided_slice %100 {offsets = [0, 256], sizes = [8, 128], strides = [1, 1]} : vector<8x512xf32> to vector<8x128xf32>
    %105 = arith.maximumf %103, %104 : vector<8x128xf32>
    %106 = vector.extract_strided_slice %100 {offsets = [0, 384], sizes = [8, 128], strides = [1, 1]} : vector<8x512xf32> to vector<8x128xf32>
    %107 = arith.maximumf %105, %106 : vector<8x128xf32>
    %c0_90 = arith.constant 0 : index
    %c0_91 = arith.constant 0 : index
    %108 = vector.load %arg10[%c0_90, %c0_91] : memref<8x128xf32, #tpu.memory_space<vmem>>, vector<8x128xf32>
    tpu.vector_store %arg10[%c0_90, %c0_91], %107 {strides = array<i32>} : memref<8x128xf32, #tpu.memory_space<vmem>>, vector<8x128xf32>,
    %c0_92 = arith.constant 0 : index
    %c0_93 = arith.constant 0 : index
    %109 = tpu.strided_load %arg10[%c0_92, %c0_93] {strides = array<i32: 2, 1>} : memref<8x128xf32, #tpu.memory_space<vmem>>, vector<4x128xf32>
    %c1_94 = arith.constant 1 : index
    %c0_95 = arith.constant 0 : index
    %110 = tpu.strided_load %arg10[%c1_94, %c0_95] {strides = array<i32: 2, 1>} : memref<8x128xf32, #tpu.memory_space<vmem>>, vector<4x128xf32>
    %111 = arith.maximumf %109, %110 : vector<4x128xf32>
    %112 = vector.shape_cast %111 : vector<4x128xf32> to vector<1x4x128xf32>
    %c0_96 = arith.constant 0 : index
    %c0_97 = arith.constant 0 : index
    %c0_98 = arith.constant 0 : index
    %113 = vector.load %arg8[%c0_96, %c0_97, %c0_98] : memref<1x4x128xf32, #tpu.memory_space<vmem>>, vector<1x4x128xf32>
    tpu.vector_store %arg8[%c0_96, %c0_97, %c0_98], %112 {strides = array<i32>} : memref<1x4x128xf32, #tpu.memory_space<vmem>>, vector<1x4x128xf32>,
    return
  }
  func.func @transform_0(%arg0: i32) -> (i32, i32, i32) {
    %c0_i32 = arith.constant 0 : i32
    %c0_i32_0 = arith.constant 0 : i32
    %c0_i32_1 = arith.constant 0 : i32
    return %arg0, %c0_i32, %c0_i32_0 : i32, i32, i32
  }
  func.func @transform_1(%arg0: i32) -> (i32, i32, i32) {
    %c0_i32 = arith.constant 0 : i32
    %c0_i32_0 = arith.constant 0 : i32
    %c0_i32_1 = arith.constant 0 : i32
    %c0_i32_2 = arith.constant 0 : i32
    return %c0_i32, %c0_i32_0, %c0_i32_1 : i32, i32, i32
  }
  func.func @transform_2(%arg0: i32) -> (i32, i32, i32) {
    %c0_i32 = arith.constant 0 : i32
    %c0_i32_0 = arith.constant 0 : i32
    %c0_i32_1 = arith.constant 0 : i32
    %c0_i32_2 = arith.constant 0 : i32
    return %c0_i32, %c0_i32_0, %c0_i32_1 : i32, i32, i32
  }
  func.func @transform_3(%arg0: i32) -> (i32, i32) {
    %c0_i32 = arith.constant 0 : i32
    %c0_i32_0 = arith.constant 0 : i32
    %c0_i32_1 = arith.constant 0 : i32
    return %c0_i32, %c0_i32_0 : i32, i32
  }
  func.func @transform_4(%arg0: i32) -> (i32, i32) {
    %c0_i32 = arith.constant 0 : i32
    %c0_i32_0 = arith.constant 0 : i32
    %c0_i32_1 = arith.constant 0 : i32
    return %c0_i32, %c0_i32_0 : i32, i32
  }
  func.func @transform_5(%arg0: i32) -> (i32, i32) {
    %c0_i32 = arith.constant 0 : i32
    %c0_i32_0 = arith.constant 0 : i32
    %c0_i32_1 = arith.constant 0 : i32
    return %c0_i32, %c0_i32_0 : i32, i32
  }
  func.func @transform_6(%arg0: i32) -> (i32, i32) {
    %c0_i32 = arith.constant 0 : i32
    %c0_i32_0 = arith.constant 0 : i32
    %c0_i32_1 = arith.constant 0 : i32
    return %c0_i32, %c0_i32_0 : i32, i32
  }
  func.func @transform_7(%arg0: i32) -> (i32, i32, i32) {
    %c0_i32 = arith.constant 0 : i32
    %c0_i32_0 = arith.constant 0 : i32
    %c0_i32_1 = arith.constant 0 : i32
    return %arg0, %c0_i32, %c0_i32_0 : i32, i32, i32
  }
}

</mosaic_0001>

<llo_original>
// kernel: tpu_custom_call.1
$region0: #{tpu_custom_call.1}
  #allocation0 [shape = 'u32[]', space=smem, size = 0x4, offset = 0x4, fixed_abs, tag = 'smem constant byte address 0x4 - core index']
  #allocation1 [shape = 'u32[72,128]{1,0:T(1,128)}', space=vmem, size = 0x9000, scoped, tag = 'internal scratch']
  #allocation2 [shape = 'f32[10,512]{1,0:T(8,128)}', space=vmem, size = 0x8000, scoped, tag = 'scratch operand']
  #allocation3 [shape = 'f32[8,128]{1,0:T(8,128)}', space=vmem, size = 0x1000, scoped, tag = 'scratch operand']
  %s0 = inlined_call_operand.vmem [shape: bf16[2,12,256], index: 0, kind: input, shape index: {}]
  %s1 = inlined_call_operand.hbm [shape: bf16[5,256,512], index: 1, kind: input, shape index: {}]
  %s2 = inlined_call_operand.hbm [shape: bf16[3,512,512], index: 2, kind: input, shape index: {}]
  %s3 = inlined_call_operand.hbm [shape: f32[1,512], index: 3, kind: input, shape index: {}]
  %s4 = inlined_call_operand.hbm [shape: f32[1,512], index: 4, kind: input, shape index: {}]
  %s5 = inlined_call_operand.vmem [shape: f32[512,8], index: 5, kind: input, shape index: {}]
  %s6 = inlined_call_operand.hbm [shape: f32[8,512], index: 6, kind: input, shape index: {}]
  %s7 = inlined_call_operand.hbm [shape: f32[2,4,128], index: 7, kind: output, shape index: {}]
  %s8 = sld [smem:[#allocation0]]
  $region81: #{tpu_custom_call.1} parent=0
    _
  %s10 = ssub.s32 1, %s8
  %s11 = scalar_select 0, %s10, %s8
  $region1: #{tpu_custom_call.1} parent=0
    #allocation4 [shape = 'u8[1310720]{0}', space=vmem, size = 0x140000, scoped, tag = 'input window, operand 1, single buffered']
    #allocation5 [shape = 's32[2]{0}', space=sflag, size = 0x8, scoped, tag = 'scoped memory for tpu_custom_call.1']
    #allocation6 [shape = 's32[2]{0}', space=sflag, size = 0x8, scoped, tag = 'scoped memory for tpu_custom_call.1']
    #allocation7 [shape = 'u8[1572864]{0}', space=vmem, size = 0x180000, scoped, tag = 'input window, operand 2, single buffered']
    #allocation8 [shape = 's32[1]{0}', space=sflag, size = 0x4, scoped, tag = 'scoped memory for tpu_custom_call.1']
    #allocation9 [shape = 'u8[2048]{0}', space=vmem, size = 0x800, scoped, tag = 'input window, operand 3, single buffered']
    #allocation10 [shape = 'u8[2048]{0}', space=vmem, size = 0x800, scoped, tag = 'input window, operand 4, single buffered']
    #allocation11 [shape = 's32[1]{0}', space=sflag, size = 0x4, scoped, tag = 'scoped memory for tpu_custom_call.1']
    #allocation12 [shape = 'u8[16384]{0}', space=vmem, size = 0x4000, scoped, tag = 'input window, operand 6, single buffered']
    #allocation13 [shape = 'u8[4096]{0}', space=vmem, size = 0x1000, scoped, tag = 'output window, operand 0']
    %12 = vsyncpa [#allocation5], 0
    %13 = vsyncpa [#allocation8], 0
    %14 = vsyncpa [#allocation11], 0
    %15 = vsyncpa [#allocation6], 0
    %s16 = scalar_lea.sflag [#allocation6], 1
    %17 = vsyncpa %s16, 0
    loop: start=0, step=1, limit=4
    $region2: #{tpu_custom_call.1} parent=1 // loop_pre_header
      _
    $region3: #{tpu_custom_call.1} parent=1 // loop_header
      %s19 = sphi 0, %s23
      %p20 = scmp.ge.s32.totalorder %s19, 4
      %s29 = sphi 0, %s31
      %s32 = sphi 0, %s29
      %s33 = sphi 0, %s32
      %s49 = sphi 0, %s33
      %s53 = sphi 0, %s53
      %s55 = sphi 0, %s53
      %s56 = sphi 0, %s55
      %s70 = sphi 0, %s56
      %s74 = sphi 0, %s74
      %s76 = sphi 0, %s74
      %s77 = sphi 0, %s76
      %s91 = sphi 0, %s77
      %s95 = sphi 0, %s95
      %s97 = sphi 0, %s95
      %s98 = sphi 0, %s97
      %s112 = sphi 0, %s98
      %s116 = sphi 0, %s116
      %s118 = sphi 0, %s116
      %s119 = sphi 0, %s118
      %s133 = sphi 0, %s119
      %s137 = sphi 0, %s137
      %s139 = sphi 0, %s137
      %s140 = sphi 0, %s139
      %s154 = sphi 0, %s140
      %s158 = sphi 0, %s158
      %s160 = sphi 0, %s158
      %s161 = sphi 0, %s160
      %s175 = sphi 0, %s161
      %s181 = sphi 0, %s183
      %s184 = sphi 0, %s181
      %s185 = sphi 0, %s184
      %s201 = sphi 0, %s185
    $region4: #{tpu_custom_call.1} parent=1 // loop_header_branch
      %22 = sbr.rel (%p20) target = $region8
    $region5: #{tpu_custom_call.1} parent=1 // loop_body
      %s24 = ssub.s32 %s19, 1
      %s25 = ssub.s32 %s19, 2
      %s26 = sadd.s32 %s19, 1
      %s27 = ssub.s32 %s19, %s26
      %p28 = scmp.eq.s32.totalorder %s27, 0
      %s30 = sadd.s32 %s29, 1
      %s31 = scalar_select %p28, %s29, %s30
      %p34 = pneg %p28
      %p35 = scmp.eq.s32.totalorder %s19, 1
      %p36 = por %p34, %p35
      %p37 = scmp.ne.s32.totalorder %s29, %s32
      %p38 = scmp.eq.s32.totalorder %s19, 0
      %p39 = por %p37, %p38
      %p40 = scmp.ne.s32.totalorder %s29, %s32
      %p41 = scmp.eq.s32.totalorder %s24, 1
      %p42 = por %p40, %p41
      %p43 = scmp.ne.s32.totalorder %s32, %s33
      %p44 = scmp.eq.s32.totalorder %s24, 0
      %p45 = por %p43, %p44
      %p46 = scmp.ne.s32.totalorder %s32, %s33
      %p47 = scmp.eq.s32.totalorder %s25, 1
      %p48 = por %p46, %p47
      %p50 = scmp.ne.s32.totalorder %s33, %s49
      %p51 = scmp.eq.s32.totalorder %s25, 0
      %p52 = por %p50, %p51
      %s54 = sadd.s32 %s53, 1
      %p57 = scmp.eq.s32.totalorder %s19, 1
      %p58 = scmp.ne.s32.totalorder %s53, %s55
      %p59 = scmp.eq.s32.totalorder %s19, 0
      %p60 = por %p58, %p59
      %p61 = scmp.ne.s32.totalorder %s53, %s55
      %p62 = scmp.eq.s32.totalorder %s24, 1
      %p63 = por %p61, %p62
      %p64 = scmp.ne.s32.totalorder %s55, %s56
      %p65 = scmp.eq.s32.totalorder %s24, 0
      %p66 = por %p64, %p65
      %p67 = scmp.ne.s32.totalorder %s55, %s56
      %p68 = scmp.eq.s32.totalorder %s25, 1
      %p69 = por %p67, %p68
      %p71 = scmp.ne.s32.totalorder %s56, %s70
      %p72 = scmp.eq.s32.totalorder %s25, 0
      %p73 = por %p71, %p72
      %s75 = sadd.s32 %s74, 1
      %p78 = scmp.eq.s32.totalorder %s19, 1
      %p79 = scmp.ne.s32.totalorder %s74, %s76
      %p80 = scmp.eq.s32.totalorder %s19, 0
      %p81 = por %p79, %p80
      %p82 = scmp.ne.s32.totalorder %s74, %s76
      %p83 = scmp.eq.s32.totalorder %s24, 1
      %p84 = por %p82, %p83
      %p85 = scmp.ne.s32.totalorder %s76, %s77
      %p86 = scmp.eq.s32.totalorder %s24, 0
      %p87 = por %p85, %p86
      %p88 = scmp.ne.s32.totalorder %s76, %s77
      %p89 = scmp.eq.s32.totalorder %s25, 1
      %p90 = por %p88, %p89
      %p92 = scmp.ne.s32.totalorder %s77, %s91
      %p93 = scmp.eq.s32.totalorder %s25, 0
      %p94 = por %p92, %p93
      %s96 = sadd.s32 %s95, 1
      %p99 = scmp.eq.s32.totalorder %s19, 1
      %p100 = scmp.ne.s32.totalorder %s95, %s97
      %p101 = scmp.eq.s32.totalorder %s19, 0
      %p102 = por %p100, %p101
      %p103 = scmp.ne.s32.totalorder %s95, %s97
      %p104 = scmp.eq.s32.totalorder %s24, 1
      %p105 = por %p103, %p104
      %p106 = scmp.ne.s32.totalorder %s97, %s98
      %p107 = scmp.eq.s32.totalorder %s24, 0
      %p108 = por %p106, %p107
      %p109 = scmp.ne.s32.totalorder %s97, %s98
      %p110 = scmp.eq.s32.totalorder %s25, 1
      %p111 = por %p109, %p110
      %p113 = scmp.ne.s32.totalorder %s98, %s112
      %p114 = scmp.eq.s32.totalorder %s25, 0
      %p115 = por %p113, %p114
      %s117 = sadd.s32 %s116, 1
      %p120 = scmp.eq.s32.totalorder %s19, 1
      %p121 = scmp.ne.s32.totalorder %s116, %s118
      %p122 = scmp.eq.s32.totalorder %s19, 0
      %p123 = por %p121, %p122
      %p124 = scmp.ne.s32.totalorder %s116, %s118
      %p125 = scmp.eq.s32.totalorder %s24, 1
      %p126 = por %p124, %p125
      %p127 = scmp.ne.s32.totalorder %s118, %s119
      %p128 = scmp.eq.s32.totalorder %s24, 0
      %p129 = por %p127, %p128
      %p130 = scmp.ne.s32.totalorder %s118, %s119
      %p131 = scmp.eq.s32.totalorder %s25, 1
      %p132 = por %p130, %p131
      %p134 = scmp.ne.s32.totalorder %s119, %s133
      %p135 = scmp.eq.s32.totalorder %s25, 0
      %p136 = por %p134, %p135
      %s138 = sadd.s32 %s137, 1
      %p141 = scmp.eq.s32.totalorder %s19, 1
      %p142 = scmp.ne.s32.totalorder %s137, %s139
      %p143 = scmp.eq.s32.totalorder %s19, 0
      %p144 = por %p142, %p143
      %p145 = scmp.ne.s32.totalorder %s137, %s139
      %p146 = scmp.eq.s32.totalorder %s24, 1
      %p147 = por %p145, %p146
      %p148 = scmp.ne.s32.totalorder %s139, %s140
      %p149 = scmp.eq.s32.totalorder %s24, 0
      %p150 = por %p148, %p149
      %p151 = scmp.ne.s32.totalorder %s139, %s140
      %p152 = scmp.eq.s32.totalorder %s25, 1
      %p153 = por %p151, %p152
      %p155 = scmp.ne.s32.totalorder %s140, %s154
      %p156 = scmp.eq.s32.totalorder %s25, 0
      %p157 = por %p155, %p156
      %s159 = sadd.s32 %s158, 1
      %p162 = scmp.eq.s32.totalorder %s19, 1
      %p163 = scmp.ne.s32.totalorder %s158, %s160
      %p164 = scmp.eq.s32.totalorder %s19, 0
      %p165 = por %p163, %p164
      %p166 = scmp.ne.s32.totalorder %s158, %s160
      %p167 = scmp.eq.s32.totalorder %s24, 1
      %p168 = por %p166, %p167
      %p169 = scmp.ne.s32.totalorder %s160, %s161
      %p170 = scmp.eq.s32.totalorder %s24, 0
      %p171 = por %p169, %p170
      %p172 = scmp.ne.s32.totalorder %s160, %s161
      %p173 = scmp.eq.s32.totalorder %s25, 1
      %p174 = por %p172, %p173
      %p176 = scmp.ne.s32.totalorder %s161, %s175
      %p177 = scmp.eq.s32.totalorder %s25, 0
      %p178 = por %p176, %p177
      %s179 = ssub.s32 %s19, %s26
      %p180 = scmp.eq.s32.totalorder %s179, 0
      %s182 = sadd.s32 %s181, 1
      %s183 = scalar_select %p180, %s181, %s182
      %p186 = pneg %p180
      %p187 = scmp.eq.s32.totalorder %s19, 1
      %p188 = por %p186, %p187
      %p189 = scmp.ne.s32.totalorder %s181, %s184
      %p190 = scmp.eq.s32.totalorder %s19, 0
      %p191 = por %p189, %p190
      %p192 = scmp.ne.s32.totalorder %s181, %s184
      %p193 = scmp.eq.s32.totalorder %s24, 1
      %p194 = por %p192, %p193
      %p195 = scmp.ne.s32.totalorder %s184, %s185
      %p196 = scmp.eq.s32.totalorder %s24, 0
      %p197 = por %p195, %p196
      %p198 = scmp.ne.s32.totalorder %s184, %s185
      %p199 = scmp.eq.s32.totalorder %s25, 1
      %p200 = por %p198, %p199
      %p202 = scmp.ne.s32.totalorder %s185, %s201
      %p203 = scmp.eq.s32.totalorder %s25, 0
      %p204 = por %p202, %p203
      %p205 = scmp.le.s32.totalorder 1, %s19
      %p206 = scmp.lt.s32.totalorder %s19, 3
      %p207 = pnand %p205, %p206
      %p208 = pneg %p207
      // Predicated region
      $region9: #{tpu_custom_call.1} parent=5 // pred_check
        _
      $region10: #{tpu_custom_call.1} parent=5 // pred_check_branch
        %210 = sbr.rel (%p207) target = $region12
      $region11: #{tpu_custom_call.1} parent=5 // pred_region
        %s211 = ssub.s32 %s19, 1
        // Predicated region
        $region13: #{tpu_custom_call.1} parent=11 // pred_check
          %p212 = pneg %p66
        $region14: #{tpu_custom_call.1} parent=11 // pred_check_branch
          %214 = sbr.rel (%p212) target = $region16
        $region15: #{tpu_custom_call.1} parent=11 // pred_region
          %216 = vsyncadd [#allocation5], 0
          %s217 = sshll.u32 %s1, 4
          %s218 = int_to_ptr.hbm [resolvable:$true] %s217
          %s219 = sshll.u32 [#allocation4], 4
          %s220 = int_to_ptr.vmem [resolvable:$true] %s219
          %225 = dma.hbm_to_vmem [thread:$0]  %s218, 40960, %s220, [#allocation5], 256, 256, 16
        $region16: #{tpu_custom_call.1} parent=11 // pred_fallthru
          _
        // Predicated region
        $region17: #{tpu_custom_call.1} parent=11 // pred_check
          %p226 = pneg %p87
        $region18: #{tpu_custom_call.1} parent=11 // pred_check_branch
          %228 = sbr.rel (%p226) target = $region20
        $region19: #{tpu_custom_call.1} parent=11 // pred_region
          %230 = vsyncadd [#allocation8], 0
          %s231 = sshll.u32 %s2, 4
          %s232 = int_to_ptr.hbm [resolvable:$true] %s231
          %s233 = sshll.u32 [#allocation7], 4
          %s234 = int_to_ptr.vmem [resolvable:$true] %s233
          %239 = dma.hbm_to_vmem [thread:$0]  %s232, 49152, %s234, [#allocation8], 256, 256, 16
        $region20: #{tpu_custom_call.1} parent=11 // pred_fallthru
          _
        // Predicated region
        $region21: #{tpu_custom_call.1} parent=11 // pred_check
          %p240 = pneg %p108
        $region22: #{tpu_custom_call.1} parent=11 // pred_check_branch
          %242 = sbr.rel (%p240) target = $region24
        $region23: #{tpu_custom_call.1} parent=11 // pred_region
          %244 = vsyncadd [#allocation8], 0
          %s246 = sshll.u32 %s3, 4
          %s247 = int_to_ptr.hbm [resolvable:$true] %s246
          %s248 = sshll.u32 [#allocation9], 4
          %s249 = int_to_ptr.vmem [resolvable:$true] %s248
          %251 = dma.hbm_to_vmem [thread:$0]  %s247, 64, %s249, [#allocation8]
        $region24: #{tpu_custom_call.1} parent=11 // pred_fallthru
          _
        // Predicated region
        $region25: #{tpu_custom_call.1} parent=11 // pred_check
          %p252 = pneg %p129
        $region26: #{tpu_custom_call.1} parent=11 // pred_check_branch
          %254 = sbr.rel (%p252) target = $region28
        $region27: #{tpu_custom_call.1} parent=11 // pred_region
          %256 = vsyncadd [#allocation11], 0
          %s258 = sshll.u32 %s4, 4
          %s259 = int_to_ptr.hbm [resolvable:$true] %s258
          %s260 = sshll.u32 [#allocation10], 4
          %s261 = int_to_ptr.vmem [resolvable:$true] %s260
          %263 = dma.hbm_to_vmem [thread:$0]  %s259, 64, %s261, [#allocation11]
        $region28: #{tpu_custom_call.1} parent=11 // pred_fallthru
          _
        // Predicated region
        $region29: #{tpu_custom_call.1} parent=11 // pred_check
          %p264 = pneg %p150
        $region30: #{tpu_custom_call.1} parent=11 // pred_check_branch
          %266 = sbr.rel (%p264) target = $region32
        $region31: #{tpu_custom_call.1} parent=11 // pred_region
          _
        $region32: #{tpu_custom_call.1} parent=11 // pred_fallthru
          _
        // Predicated region
        $region33: #{tpu_custom_call.1} parent=11 // pred_check
          %p267 = pneg %p171
        $region34: #{tpu_custom_call.1} parent=11 // pred_check_branch
          %269 = sbr.rel (%p267) target = $region36
        $region35: #{tpu_custom_call.1} parent=11 // pred_region
          %271 = vsyncadd [#allocation11], 0
          %s273 = sshll.u32 %s6, 4
          %s274 = int_to_ptr.hbm [resolvable:$true] %s273
          %s275 = sshll.u32 [#allocation12], 4
          %s276 = int_to_ptr.vmem [resolvable:$true] %s275
          %278 = dma.hbm_to_vmem [thread:$0]  %s274, 512, %s276, [#allocation11]
        $region36: #{tpu_custom_call.1} parent=11 // pred_fallthru
          _
      $region12: #{tpu_custom_call.1} parent=5 // pred_fallthru
        _
      %p279 = scmp.lt.s32.totalorder %s19, 2
      // Predicated region
      $region37: #{tpu_custom_call.1} parent=5 // pred_check
        %p280 = pneg %p279
      $region38: #{tpu_custom_call.1} parent=5 // pred_check_branch
        %282 = sbr.rel (%p280) target = $region40
      $region39: #{tpu_custom_call.1} parent=5 // pred_region
        // Predicated region
        $region41: #{tpu_custom_call.1} parent=39 // pred_check
          %p283 = pneg %p39
        $region42: #{tpu_custom_call.1} parent=39 // pred_check_branch
          %285 = sbr.rel (%p283) target = $region44
        $region43: #{tpu_custom_call.1} parent=39 // pred_region
          %p286 = scmp.lt.s32.totalorder %s19, 1
          %s287 = scalar_select %p286, %s19, 1
          %s288 = smul.addr %s287, 4
          %s289 = smul.addr %s288, 4
          %s290 = scalar_lea.vmem %s0, %s289
        $region44: #{tpu_custom_call.1} parent=39 // pred_fallthru
          _
      $region40: #{tpu_custom_call.1} parent=5 // pred_fallthru
        _
      %p291 = scmp.le.s32.totalorder 1, %s19
      %p292 = scmp.lt.s32.totalorder %s19, 3
      %p293 = pnand %p291, %p292
      %p294 = pneg %p293
      // Predicated region
      $region45: #{tpu_custom_call.1} parent=5 // pred_check
        _
      $region46: #{tpu_custom_call.1} parent=5 // pred_check_branch
        %296 = sbr.rel (%p293) target = $region48
      $region47: #{tpu_custom_call.1} parent=5 // pred_region
        %s297 = ssub.s32 %s19, 1
        // Predicated region
        $region49: #{tpu_custom_call.1} parent=47 // pred_check
          %p298 = pneg %p66
        $region50: #{tpu_custom_call.1} parent=47 // pred_check_branch
          %300 = sbr.rel (%p298) target = $region52
        $region51: #{tpu_custom_call.1} parent=47 // pred_region
          %302 = dma.done [#allocation5], 40960
        $region52: #{tpu_custom_call.1} parent=47 // pred_fallthru
          _
        // Predicated region
        $region53: #{tpu_custom_call.1} parent=47 // pred_check
          %p303 = pneg %p87
        $region54: #{tpu_custom_call.1} parent=47 // pred_check_branch
          %305 = sbr.rel (%p303) target = $region56
        $region55: #{tpu_custom_call.1} parent=47 // pred_region
          %307 = dma.done [#allocation8], 49152
        $region56: #{tpu_custom_call.1} parent=47 // pred_fallthru
          _
        // Predicated region
        $region57: #{tpu_custom_call.1} parent=47 // pred_check
          %p308 = pneg %p108
        $region58: #{tpu_custom_call.1} parent=47 // pred_check_branch
          %310 = sbr.rel (%p308) target = $region60
        $region59: #{tpu_custom_call.1} parent=47 // pred_region
          %312 = dma.done [#allocation8], 64
        $region60: #{tpu_custom_call.1} parent=47 // pred_fallthru
          _
        // Predicated region
        $region61: #{tpu_custom_call.1} parent=47 // pred_check
          %p313 = pneg %p129
        $region62: #{tpu_custom_call.1} parent=47 // pred_check_branch
          %315 = sbr.rel (%p313) target = $region64
        $region63: #{tpu_custom_call.1} parent=47 // pred_region
          %317 = dma.done [#allocation11], 64
        $region64: #{tpu_custom_call.1} parent=47 // pred_fallthru
          _
        // Predicated region
        $region65: #{tpu_custom_call.1} parent=47 // pred_check
          %p318 = pneg %p171
        $region66: #{tpu_custom_call.1} parent=47 // pred_check_branch
          %320 = sbr.rel (%p318) target = $region68
        $region67: #{tpu_custom_call.1} parent=47 // pred_region
          %322 = dma.done [#allocation11], 512
        $region68: #{tpu_custom_call.1} parent=47 // pred_fallthru
          _
        %p323 = scmp.lt.s32.totalorder %s24, 1
        %s324 = scalar_select %p323, %s24, 1
        %s325 = smul.addr %s324, 4
        %s326 = smul.addr %s325, 4
        %s327 = scalar_lea.vmem %s0, %s326
        %p328 = pneg %p45
        %p329 = pneg %p42
        %p330 = pneg %p66
        %p331 = pneg %p63
        %p332 = pneg %p87
        %p333 = pneg %p84
        %p334 = pneg %p108
        %p335 = pneg %p105
        %p336 = pneg %p129
        %p337 = pneg %p126
        %p338 = pneg %p150
        %p339 = pneg %p147
        %p340 = pneg %p171
        %p341 = pneg %p168
        %p342 = pneg %p197
        %p343 = pneg %p194
        %s344 = sand.u32 %s184, 1
        %s345 = scalar_lea.sflag [#allocation6], %s344
        %s346 = sand.u32 %s184, 1
        %s347 = smul.addr %s346, 4
        %s348 = scalar_lea.vmem [#allocation13], %s347
        %p349 = scmp.lt.s32.totalorder %s24, 1
        %s350 = scalar_select %p349, %s24, 1
        %s351 = smul.addr %s350, 4
        %s352 = smul.addr %s351, 4
        %s353 = scalar_lea.vmem %s0, %s352
        %v354 = vld [vmem:[#allocation9] sm:$0xf]
        %v355 = vld [vmem:[%s353] sm:$0xff]
        %v356 = vld [vmem:[#allocation4] sm:$0xff]
        %v357 = vld [vmem:[#allocation4 + $0x8] sm:$0xff]
        %v358 = vld [vmem:[#allocation4 + $0x10] sm:$0xff]
        %v359 = vld [vmem:[#allocation4 + $0x18] sm:$0xff]
        %v360 = vld [vmem:[#allocation4 + $0x20] sm:$0xff]
        %v361 = vld [vmem:[#allocation4 + $0x28] sm:$0xff]
        %v362 = vld [vmem:[#allocation4 + $0x30] sm:$0xff]
        %v363 = vld [vmem:[#allocation4 + $0x38] sm:$0xff]
        %v364 = vld [vmem:[#allocation4 + $0x40] sm:$0xff]
        %v365 = vld [vmem:[#allocation4 + $0x48] sm:$0xff]
        %v366 = vld [vmem:[#allocation4 + $0x50] sm:$0xff]
        %v367 = vld [vmem:[#allocation4 + $0x58] sm:$0xff]
        %v368 = vld [vmem:[#allocation4 + $0x60] sm:$0xff]
        %v369 = vld [vmem:[#allocation4 + $0x68] sm:$0xff]
        %v370 = vld [vmem:[#allocation4 + $0x70] sm:$0xff]
        %v371 = vld [vmem:[#allocation4 + $0x78] sm:$0xff]
        %v372 = vld [vmem:[#allocation4 + $0x80] sm:$0xff]
        %v373 = vld [vmem:[#allocation4 + $0x88] sm:$0xff]
        %v374 = vld [vmem:[#allocation4 + $0x90] sm:$0xff]
        %v375 = vld [vmem:[#allocation4 + $0x98] sm:$0xff]
        %v376 = vld [vmem:[#allocation4 + $0xa0] sm:$0xff]
        %v377 = vld [vmem:[#allocation4 + $0xa8] sm:$0xff]
        %v378 = vld [vmem:[#allocation4 + $0xb0] sm:$0xff]
        %v379 = vld [vmem:[#allocation4 + $0xb8] sm:$0xff]
        %v380 = vld [vmem:[#allocation4 + $0xc0] sm:$0xff]
        %v381 = vld [vmem:[#allocation4 + $0xc8] sm:$0xff]
        %v382 = vld [vmem:[#allocation4 + $0xd0] sm:$0xff]
        %v383 = vld [vmem:[#allocation4 + $0xd8] sm:$0xff]
        %v384 = vld [vmem:[#allocation4 + $0xe0] sm:$0xff]
        %v385 = vld [vmem:[#allocation4 + $0xe8] sm:$0xff]
        %v386 = vld [vmem:[#allocation4 + $0xf0] sm:$0xff]
        %v387 = vld [vmem:[#allocation4 + $0xf8] sm:$0xff]
        %v388 = vld [vmem:[#allocation4 + $0x100] sm:$0xff]
        %v389 = vld [vmem:[#allocation4 + $0x108] sm:$0xff]
        %v390 = vld [vmem:[#allocation4 + $0x110] sm:$0xff]
        %v391 = vld [vmem:[#allocation4 + $0x118] sm:$0xff]
        %v392 = vld [vmem:[#allocation4 + $0x120] sm:$0xff]
        %v393 = vld [vmem:[#allocation4 + $0x128] sm:$0xff]
        %v394 = vld [vmem:[#allocation4 + $0x130] sm:$0xff]
        %v395 = vld [vmem:[#allocation4 + $0x138] sm:$0xff]
        %v396 = vld [vmem:[#allocation4 + $0x140] sm:$0xff]
        %v397 = vld [vmem:[#allocation4 + $0x148] sm:$0xff]
        %v398 = vld [vmem:[#allocation4 + $0x150] sm:$0xff]
        %v399 = vld [vmem:[#allocation4 + $0x158] sm:$0xff]
        %v400 = vld [vmem:[#allocation4 + $0x160] sm:$0xff]
        %v401 = vld [vmem:[#allocation4 + $0x168] sm:$0xff]
        %v402 = vld [vmem:[#allocation4 + $0x170] sm:$0xff]
        %v403 = vld [vmem:[#allocation4 + $0x178] sm:$0xff]
        %v404 = vld [vmem:[#allocation4 + $0x180] sm:$0xff]
        %v405 = vld [vmem:[#allocation4 + $0x188] sm:$0xff]
        %v406 = vld [vmem:[#allocation4 + $0x190] sm:$0xff]
        %v407 = vld [vmem:[#allocation4 + $0x198] sm:$0xff]
        %v408 = vld [vmem:[#allocation4 + $0x1a0] sm:$0xff]
        %v409 = vld [vmem:[#allocation4 + $0x1a8] sm:$0xff]
        %v410 = vld [vmem:[#allocation4 + $0x1b0] sm:$0xff]
        %v411 = vld [vmem:[#allocation4 + $0x1b8] sm:$0xff]
        %v412 = vld [vmem:[#allocation4 + $0x1c0] sm:$0xff]
        %v413 = vld [vmem:[#allocation4 + $0x1c8] sm:$0xff]
        %v414 = vld [vmem:[#allocation4 + $0x1d0] sm:$0xff]
        %v415 = vld [vmem:[#allocation4 + $0x1d8] sm:$0xff]
        %v416 = vld [vmem:[#allocation4 + $0x1e0] sm:$0xff]
        %v417 = vld [vmem:[#allocation4 + $0x1e8] sm:$0xff]
        %v418 = vld [vmem:[#allocation4 + $0x1f0] sm:$0xff]
        %v419 = vld [vmem:[#allocation4 + $0x1f8] sm:$0xff]
        %v421 = vunpack.c.l.b16 %v355
        %v422 = vunpack.c.h.b16 %v355
        %v423 = vpack.c.b16 %v421, %v421
        %v424 = vpack.c.b16 %v422, %v422
        %v491 = vunpack.c.l.b16 %v356
        %v492 = vunpack.c.h.b16 %v356
        %v493 = vunpack.c.l.b16 %v357
        %v494 = vunpack.c.h.b16 %v357
        %v495 = vunpack.c.l.b16 %v358
        %v496 = vunpack.c.h.b16 %v358
        %v497 = vunpack.c.l.b16 %v359
        %v498 = vunpack.c.h.b16 %v359
        %v499 = vunpack.c.l.b16 %v360
        %v500 = vunpack.c.h.b16 %v360
        %v501 = vunpack.c.l.b16 %v361
        %v502 = vunpack.c.h.b16 %v361
        %v503 = vunpack.c.l.b16 %v362
        %v504 = vunpack.c.h.b16 %v362
        %v505 = vunpack.c.l.b16 %v363
        %v506 = vunpack.c.h.b16 %v363
        %v507 = vunpack.c.l.b16 %v364
        %v508 = vunpack.c.h.b16 %v364
        %v509 = vunpack.c.l.b16 %v365
        %v510 = vunpack.c.h.b16 %v365
        %v511 = vunpack.c.l.b16 %v366
        %v512 = vunpack.c.h.b16 %v366
        %v513 = vunpack.c.l.b16 %v367
        %v514 = vunpack.c.h.b16 %v367
        %v515 = vunpack.c.l.b16 %v368
        %v516 = vunpack.c.h.b16 %v368
        %v517 = vunpack.c.l.b16 %v369
        %v518 = vunpack.c.h.b16 %v369
        %v519 = vunpack.c.l.b16 %v370
        %v520 = vunpack.c.h.b16 %v370
        %v521 = vunpack.c.l.b16 %v371
        %v522 = vunpack.c.h.b16 %v371
        %v523 = vunpack.c.l.b16 %v372
        %v524 = vunpack.c.h.b16 %v372
        %v525 = vunpack.c.l.b16 %v373
        %v526 = vunpack.c.h.b16 %v373
        %v527 = vunpack.c.l.b16 %v374
        %v528 = vunpack.c.h.b16 %v374
        %v529 = vunpack.c.l.b16 %v375
        %v530 = vunpack.c.h.b16 %v375
        %v531 = vunpack.c.l.b16 %v376
        %v532 = vunpack.c.h.b16 %v376
        %v533 = vunpack.c.l.b16 %v377
        %v534 = vunpack.c.h.b16 %v377
        %v535 = vunpack.c.l.b16 %v378
        %v536 = vunpack.c.h.b16 %v378
        %v537 = vunpack.c.l.b16 %v379
        %v538 = vunpack.c.h.b16 %v379
        %v539 = vunpack.c.l.b16 %v380
        %v540 = vunpack.c.h.b16 %v380
        %v541 = vunpack.c.l.b16 %v381
        %v542 = vunpack.c.h.b16 %v381
        %v543 = vunpack.c.l.b16 %v382
        %v544 = vunpack.c.h.b16 %v382
        %v545 = vunpack.c.l.b16 %v383
        %v546 = vunpack.c.h.b16 %v383
        %v547 = vunpack.c.l.b16 %v384
        %v548 = vunpack.c.h.b16 %v384
        %v549 = vunpack.c.l.b16 %v385
        %v550 = vunpack.c.h.b16 %v385
        %v551 = vunpack.c.l.b16 %v386
        %v552 = vunpack.c.h.b16 %v386
        %v553 = vunpack.c.l.b16 %v387
        %v554 = vunpack.c.h.b16 %v387
        %v555 = vunpack.c.l.b16 %v388
        %v556 = vunpack.c.h.b16 %v388
        %v557 = vunpack.c.l.b16 %v389
        %v558 = vunpack.c.h.b16 %v389
        %v559 = vunpack.c.l.b16 %v390
        %v560 = vunpack.c.h.b16 %v390
        %v561 = vunpack.c.l.b16 %v391
        %v562 = vunpack.c.h.b16 %v391
        %v563 = vunpack.c.l.b16 %v392
        %v564 = vunpack.c.h.b16 %v392
        %v565 = vunpack.c.l.b16 %v393
        %v566 = vunpack.c.h.b16 %v393
        %v567 = vunpack.c.l.b16 %v394
        %v568 = vunpack.c.h.b16 %v394
        %v569 = vunpack.c.l.b16 %v395
        %v570 = vunpack.c.h.b16 %v395
        %v571 = vunpack.c.l.b16 %v396
        %v572 = vunpack.c.h.b16 %v396
        %v573 = vunpack.c.l.b16 %v397
        %v574 = vunpack.c.h.b16 %v397
        %v575 = vunpack.c.l.b16 %v398
        %v576 = vunpack.c.h.b16 %v398
        %v577 = vunpack.c.l.b16 %v399
        %v578 = vunpack.c.h.b16 %v399
        %v579 = vunpack.c.l.b16 %v400
        %v580 = vunpack.c.h.b16 %v400
        %v581 = vunpack.c.l.b16 %v401
        %v582 = vunpack.c.h.b16 %v401
        %v583 = vunpack.c.l.b16 %v402
        %v584 = vunpack.c.h.b16 %v402
        %v585 = vunpack.c.l.b16 %v403
        %v586 = vunpack.c.h.b16 %v403
        %v587 = vunpack.c.l.b16 %v404
        %v588 = vunpack.c.h.b16 %v404
        %v589 = vunpack.c.l.b16 %v405
        %v590 = vunpack.c.h.b16 %v405
        %v591 = vunpack.c.l.b16 %v406
        %v592 = vunpack.c.h.b16 %v406
        %v593 = vunpack.c.l.b16 %v407
        %v594 = vunpack.c.h.b16 %v407
        %v595 = vunpack.c.l.b16 %v408
        %v596 = vunpack.c.h.b16 %v408
        %v597 = vunpack.c.l.b16 %v409
        %v598 = vunpack.c.h.b16 %v409
        %v599 = vunpack.c.l.b16 %v410
        %v600 = vunpack.c.h.b16 %v410
        %v601 = vunpack.c.l.b16 %v411
        %v602 = vunpack.c.h.b16 %v411
        %v603 = vunpack.c.l.b16 %v412
        %v604 = vunpack.c.h.b16 %v412
        %v605 = vunpack.c.l.b16 %v413
        %v606 = vunpack.c.h.b16 %v413
        %v607 = vunpack.c.l.b16 %v414
        %v608 = vunpack.c.h.b16 %v414
        %v609 = vunpack.c.l.b16 %v415
        %v610 = vunpack.c.h.b16 %v415
        %v611 = vunpack.c.l.b16 %v416
        %v612 = vunpack.c.h.b16 %v416
        %v613 = vunpack.c.l.b16 %v417
        %v614 = vunpack.c.h.b16 %v417
        %v615 = vunpack.c.l.b16 %v418
        %v616 = vunpack.c.h.b16 %v418
        %v617 = vunpack.c.l.b16 %v419
        %v618 = vunpack.c.h.b16 %v419
        %v619 = vpack.c.b16 %v495, %v491
        %v620 = vpack.c.b16 %v496, %v492
        %v621 = vpack.c.b16 %v497, %v493
        %v622 = vpack.c.b16 %v498, %v494
        %v623 = vpack.c.b16 %v503, %v499
        %v624 = vpack.c.b16 %v504, %v500
        %v625 = vpack.c.b16 %v505, %v501
        %v626 = vpack.c.b16 %v506, %v502
        %v627 = vpack.c.b16 %v511, %v507
        %v628 = vpack.c.b16 %v512, %v508
        %v629 = vpack.c.b16 %v513, %v509
        %v630 = vpack.c.b16 %v514, %v510
        %v631 = vpack.c.b16 %v519, %v515
        %v632 = vpack.c.b16 %v520, %v516
        %v633 = vpack.c.b16 %v521, %v517
        %v634 = vpack.c.b16 %v522, %v518
        %v635 = vpack.c.b16 %v527, %v523
        %v636 = vpack.c.b16 %v528, %v524
        %v637 = vpack.c.b16 %v529, %v525
        %v638 = vpack.c.b16 %v530, %v526
        %v639 = vpack.c.b16 %v535, %v531
        %v640 = vpack.c.b16 %v536, %v532
        %v641 = vpack.c.b16 %v537, %v533
        %v642 = vpack.c.b16 %v538, %v534
        %v643 = vpack.c.b16 %v543, %v539
        %v644 = vpack.c.b16 %v544, %v540
        %v645 = vpack.c.b16 %v545, %v541
        %v646 = vpack.c.b16 %v546, %v542
        %v647 = vpack.c.b16 %v551, %v547
        %v648 = vpack.c.b16 %v552, %v548
        %v649 = vpack.c.b16 %v553, %v549
        %v650 = vpack.c.b16 %v554, %v550
        %v651 = vpack.c.b16 %v559, %v555
        %v652 = vpack.c.b16 %v560, %v556
        %v653 = vpack.c.b16 %v561, %v557
        %v654 = vpack.c.b16 %v562, %v558
        %v655 = vpack.c.b16 %v567, %v563
        %v656 = vpack.c.b16 %v568, %v564
        %v657 = vpack.c.b16 %v569, %v565
        %v658 = vpack.c.b16 %v570, %v566
        %v659 = vpack.c.b16 %v575, %v571
        %v660 = vpack.c.b16 %v576, %v572
        %v661 = vpack.c.b16 %v577, %v573
        %v662 = vpack.c.b16 %v578, %v574
        %v663 = vpack.c.b16 %v583, %v579
        %v664 = vpack.c.b16 %v584, %v580
        %v665 = vpack.c.b16 %v585, %v581
        %v666 = vpack.c.b16 %v586, %v582
        %v667 = vpack.c.b16 %v591, %v587
        %v668 = vpack.c.b16 %v592, %v588
        %v669 = vpack.c.b16 %v593, %v589
        %v670 = vpack.c.b16 %v594, %v590
        %v671 = vpack.c.b16 %v599, %v595
        %v672 = vpack.c.b16 %v600, %v596
        %v673 = vpack.c.b16 %v601, %v597
        %v674 = vpack.c.b16 %v602, %v598
        %v675 = vpack.c.b16 %v607, %v603
        %v676 = vpack.c.b16 %v608, %v604
        %v677 = vpack.c.b16 %v609, %v605
        %v678 = vpack.c.b16 %v610, %v606
        %v679 = vpack.c.b16 %v615, %v611
        %v680 = vpack.c.b16 %v616, %v612
        %v681 = vpack.c.b16 %v617, %v613
        %v682 = vpack.c.b16 %v618, %v614
        %747 = vmatpush.bf16.msra.mxu0 %v647
        %748 = vmatpush.bf16.msra.mxu0 %v643
        %749 = vmatpush.bf16.msra.mxu0 %v639
        %750 = vmatpush.bf16.msra.mxu0 %v635
        %751 = vmatpush.bf16.msra.mxu0 %v631
        %752 = vmatpush.bf16.msra.mxu0 %v627
        %753 = vmatpush.bf16.msra.mxu0 %v623
        %754 = vmatpush.bf16.msra.mxu0 %v619
        %755 = vmatmul.bf16.gmra.mxu0 %v423
        %v756 = vpop.f32.mrf.mxu0
        %v757 = vadd.f32 0.0, %v756
        %v758 = vpop.f32.mrf.mxu0
        %759 = vdwg.mxu0
        %760 = vmatpush.bf16.msra.mxu0 %v679
        %761 = vmatpush.bf16.msra.mxu0 %v675
        %762 = vmatpush.bf16.msra.mxu0 %v671
        %763 = vmatpush.bf16.msra.mxu0 %v667
        %764 = vmatpush.bf16.msra.mxu0 %v663
        %765 = vmatpush.bf16.msra.mxu0 %v659
        %766 = vmatpush.bf16.msra.mxu0 %v655
        %767 = vmatpush.bf16.msra.mxu0 %v651
        %768 = vmatmul.bf16.gmra.mxu0 %v424
        %v769 = vpop.f32.mrf.mxu0
        %v770 = vadd.f32 %v757, %v769
        %v771 = vpop.f32.mrf.mxu0
        %772 = vdwg.mxu0
        %773 = vmatpush.bf16.msra.mxu0 %v648
        %774 = vmatpush.bf16.msra.mxu0 %v644
        %775 = vmatpush.bf16.msra.mxu0 %v640
        %776 = vmatpush.bf16.msra.mxu0 %v636
        %777 = vmatpush.bf16.msra.mxu0 %v632
        %778 = vmatpush.bf16.msra.mxu0 %v628
        %779 = vmatpush.bf16.msra.mxu0 %v624
        %780 = vmatpush.bf16.msra.mxu0 %v620
        %781 = vmatmul.bf16.gmra.mxu0 %v423
        %v782 = vpop.f32.mrf.mxu0
        %v783 = vadd.f32 0.0, %v782
        %v784 = vpop.f32.mrf.mxu0
        %785 = vdwg.mxu0
        %786 = vmatpush.bf16.msra.mxu0 %v680
        %787 = vmatpush.bf16.msra.mxu0 %v676
        %788 = vmatpush.bf16.msra.mxu0 %v672
        %789 = vmatpush.bf16.msra.mxu0 %v668
        %790 = vmatpush.bf16.msra.mxu0 %v664
        %791 = vmatpush.bf16.msra.mxu0 %v660
        %792 = vmatpush.bf16.msra.mxu0 %v656
        %793 = vmatpush.bf16.msra.mxu0 %v652
        %794 = vmatmul.bf16.gmra.mxu0 %v424
        %v795 = vpop.f32.mrf.mxu0
        %v796 = vadd.f32 %v783, %v795
        %v797 = vpop.f32.mrf.mxu0
        %798 = vdwg.mxu0
        %799 = vmatpush.bf16.msra.mxu0 %v649
        %800 = vmatpush.bf16.msra.mxu0 %v645
        %801 = vmatpush.bf16.msra.mxu0 %v641
        %802 = vmatpush.bf16.msra.mxu0 %v637
        %803 = vmatpush.bf16.msra.mxu0 %v633
        %804 = vmatpush.bf16.msra.mxu0 %v629
        %805 = vmatpush.bf16.msra.mxu0 %v625
        %806 = vmatpush.bf16.msra.mxu0 %v621
        %807 = vmatmul.bf16.gmra.mxu0 %v423
        %v808 = vpop.f32.mrf.mxu0
        %v809 = vadd.f32 0.0, %v808
        %v810 = vpop.f32.mrf.mxu0
        %811 = vdwg.mxu0
        %812 = vmatpush.bf16.msra.mxu0 %v681
        %813 = vmatpush.bf16.msra.mxu0 %v677
        %814 = vmatpush.bf16.msra.mxu0 %v673
        %815 = vmatpush.bf16.msra.mxu0 %v669
        %816 = vmatpush.bf16.msra.mxu0 %v665
        %817 = vmatpush.bf16.msra.mxu0 %v661
        %818 = vmatpush.bf16.msra.mxu0 %v657
        %819 = vmatpush.bf16.msra.mxu0 %v653
        %820 = vmatmul.bf16.gmra.mxu0 %v424
        %v821 = vpop.f32.mrf.mxu0
        %v822 = vadd.f32 %v809, %v821
        %v823 = vpop.f32.mrf.mxu0
        %824 = vdwg.mxu0
        %825 = vmatpush.bf16.msra.mxu0 %v650
        %826 = vmatpush.bf16.msra.mxu0 %v646
        %827 = vmatpush.bf16.msra.mxu0 %v642
        %828 = vmatpush.bf16.msra.mxu0 %v638
        %829 = vmatpush.bf16.msra.mxu0 %v634
        %830 = vmatpush.bf16.msra.mxu0 %v630
        %831 = vmatpush.bf16.msra.mxu0 %v626
        %832 = vmatpush.bf16.msra.mxu0 %v622
        %833 = vmatmul.bf16.gmra.mxu0 %v423
        %v834 = vpop.f32.mrf.mxu0
        %v835 = vadd.f32 0.0, %v834
        %v836 = vpop.f32.mrf.mxu0
        %837 = vdwg.mxu0
        %838 = vmatpush.bf16.msra.mxu0 %v682
        %839 = vmatpush.bf16.msra.mxu0 %v678
        %840 = vmatpush.bf16.msra.mxu0 %v674
        %841 = vmatpush.bf16.msra.mxu0 %v670
        %842 = vmatpush.bf16.msra.mxu0 %v666
        %843 = vmatpush.bf16.msra.mxu0 %v662
        %844 = vmatpush.bf16.msra.mxu0 %v658
        %845 = vmatpush.bf16.msra.mxu0 %v654
        %846 = vmatmul.bf16.gmra.mxu0 %v424
        %v847 = vpop.f32.mrf.mxu0
        %v848 = vadd.f32 %v835, %v847
        %v849 = vpop.f32.mrf.mxu0
        %850 = vdwg.mxu0
        %v852 = vperm.slane %v354, 0
        %v853 = vperm.slane %v354, 1
        %v854 = vperm.slane %v354, 2
        %v855 = vperm.slane %v354, 3
        %v860 = vadd.f32 %v852, %v770
        %v861 = vadd.f32 %v853, %v796
        %v862 = vadd.f32 %v854, %v822
        %v863 = vadd.f32 %v855, %v848
        %v864 = vld [vmem:[%s353] sm:$0xff]
        %v865 = vld [vmem:[%s353 + $0x8] sm:$0x11]
        %s866 = scalar_lea.vmem [#allocation4], 512
        %v867 = vld [vmem:[%s866] sm:$0xff]
        %v868 = vld [vmem:[%s866 + $0x8] sm:$0xff]
        %v869 = vld [vmem:[%s866 + $0x10] sm:$0xff]
        %v870 = vld [vmem:[%s866 + $0x18] sm:$0xff]
        %v871 = vld [vmem:[%s866 + $0x20] sm:$0xff]
        %v872 = vld [vmem:[%s866 + $0x28] sm:$0xff]
        %v873 = vld [vmem:[%s866 + $0x30] sm:$0xff]
        %v874 = vld [vmem:[%s866 + $0x38] sm:$0xff]
        %v875 = vld [vmem:[%s866 + $0x40] sm:$0xff]
        %v876 = vld [vmem:[%s866 + $0x48] sm:$0xff]
        %v877 = vld [vmem:[%s866 + $0x50] sm:$0xff]
        %v878 = vld [vmem:[%s866 + $0x58] sm:$0xff]
        %v879 = vld [vmem:[%s866 + $0x60] sm:$0xff]
        %v880 = vld [vmem:[%s866 + $0x68] sm:$0xff]
        %v881 = vld [vmem:[%s866 + $0x70] sm:$0xff]
        %v882 = vld [vmem:[%s866 + $0x78] sm:$0xff]
        %v883 = vld [vmem:[%s866 + $0x80] sm:$0xff]
        %v884 = vld [vmem:[%s866 + $0x88] sm:$0xff]
        %v885 = vld [vmem:[%s866 + $0x90] sm:$0xff]
        %v886 = vld [vmem:[%s866 + $0x98] sm:$0xff]
        %v887 = vld [vmem:[%s866 + $0xa0] sm:$0xff]
        %v888 = vld [vmem:[%s866 + $0xa8] sm:$0xff]
        %v889 = vld [vmem:[%s866 + $0xb0] sm:$0xff]
        %v890 = vld [vmem:[%s866 + $0xb8] sm:$0xff]
        %v891 = vld [vmem:[%s866 + $0xc0] sm:$0xff]
        %v892 = vld [vmem:[%s866 + $0xc8] sm:$0xff]
        %v893 = vld [vmem:[%s866 + $0xd0] sm:$0xff]
        %v894 = vld [vmem:[%s866 + $0xd8] sm:$0xff]
        %v895 = vld [vmem:[%s866 + $0xe0] sm:$0xff]
        %v896 = vld [vmem:[%s866 + $0xe8] sm:$0xff]
        %v897 = vld [vmem:[%s866 + $0xf0] sm:$0xff]
        %v898 = vld [vmem:[%s866 + $0xf8] sm:$0xff]
        %v899 = vld [vmem:[%s866 + $0x100] sm:$0xff]
        %v900 = vld [vmem:[%s866 + $0x108] sm:$0xff]
        %v901 = vld [vmem:[%s866 + $0x110] sm:$0xff]
        %v902 = vld [vmem:[%s866 + $0x118] sm:$0xff]
        %v903 = vld [vmem:[%s866 + $0x120] sm:$0xff]
        %v904 = vld [vmem:[%s866 + $0x128] sm:$0xff]
        %v905 = vld [vmem:[%s866 + $0x130] sm:$0xff]
        %v906 = vld [vmem:[%s866 + $0x138] sm:$0xff]
        %v907 = vld [vmem:[%s866 + $0x140] sm:$0xff]
        %v908 = vld [vmem:[%s866 + $0x148] sm:$0xff]
        %v909 = vld [vmem:[%s866 + $0x150] sm:$0xff]
        %v910 = vld [vmem:[%s866 + $0x158] sm:$0xff]
        %v911 = vld [vmem:[%s866 + $0x160] sm:$0xff]
        %v912 = vld [vmem:[%s866 + $0x168] sm:$0xff]
        %v913 = vld [vmem:[%s866 + $0x170] sm:$0xff]
        %v914 = vld [vmem:[%s866 + $0x178] sm:$0xff]
        %v915 = vld [vmem:[%s866 + $0x180] sm:$0xff]
        %v916 = vld [vmem:[%s866 + $0x188] sm:$0xff]
        %v917 = vld [vmem:[%s866 + $0x190] sm:$0xff]
        %v918 = vld [vmem:[%s866 + $0x198] sm:$0xff]
        %v919 = vld [vmem:[%s866 + $0x1a0] sm:$0xff]
        %v920 = vld [vmem:[%s866 + $0x1a8] sm:$0xff]
        %v921 = vld [vmem:[%s866 + $0x1b0] sm:$0xff]
        %v922 = vld [vmem:[%s866 + $0x1b8] sm:$0xff]
        %v923 = vld [vmem:[%s866 + $0x1c0] sm:$0xff]
        %v924 = vld [vmem:[%s866 + $0x1c8] sm:$0xff]
        %v925 = vld [vmem:[%s866 + $0x1d0] sm:$0xff]
        %v926 = vld [vmem:[%s866 + $0x1d8] sm:$0xff]
        %v927 = vld [vmem:[%s866 + $0x1e0] sm:$0xff]
        %v928 = vld [vmem:[%s866 + $0x1e8] sm:$0xff]
        %v929 = vld [vmem:[%s866 + $0x1f0] sm:$0xff]
        %v930 = vld [vmem:[%s866 + $0x1f8] sm:$0xff]
        %v933 = vunpack.c.l.b16 %v864
        %v934 = vunpack.c.h.b16 %v864
        %v935 = vunpack.c.l.b16 %v865
        %v936 = vunpack.c.h.b16 %v865
        %v937 = vpack.c.b16 %v935, %v933
        %v938 = vpack.c.b16 %v936, %v934
        %v940 = vshrl.u32 %v937, 16
        %v942 = vshll.u32 %v937, 16
        %v944 = vrot.slane %v942, 1
        %v945 = vor.u32 %v940, %v944
        %v947 = vshrl.u32 %v938, 16
        %v949 = vshll.u32 %v938, 16
        %v951 = vrot.slane %v949, 1
        %v952 = vor.u32 %v947, %v951
        %v1019 = vunpack.c.l.b16 %v867
        %v1020 = vunpack.c.h.b16 %v867
        %v1021 = vunpack.c.l.b16 %v868
        %v1022 = vunpack.c.h.b16 %v868
        %v1023 = vunpack.c.l.b16 %v869
        %v1024 = vunpack.c.h.b16 %v869
        %v1025 = vunpack.c.l.b16 %v870
        %v1026 = vunpack.c.h.b16 %v870
        %v1027 = vunpack.c.l.b16 %v871
        %v1028 = vunpack.c.h.b16 %v871
        %v1029 = vunpack.c.l.b16 %v872
        %v1030 = vunpack.c.h.b16 %v872
        %v1031 = vunpack.c.l.b16 %v873
        %v1032 = vunpack.c.h.b16 %v873
        %v1033 = vunpack.c.l.b16 %v874
        %v1034 = vunpack.c.h.b16 %v874
        %v1035 = vunpack.c.l.b16 %v875
        %v1036 = vunpack.c.h.b16 %v875
        %v1037 = vunpack.c.l.b16 %v876
        %v1038 = vunpack.c.h.b16 %v876
        %v1039 = vunpack.c.l.b16 %v877
        %v1040 = vunpack.c.h.b16 %v877
        %v1041 = vunpack.c.l.b16 %v878
        %v1042 = vunpack.c.h.b16 %v878
        %v1043 = vunpack.c.l.b16 %v879
        %v1044 = vunpack.c.h.b16 %v879
        %v1045 = vunpack.c.l.b16 %v880
        %v1046 = vunpack.c.h.b16 %v880
        %v1047 = vunpack.c.l.b16 %v881
        %v1048 = vunpack.c.h.b16 %v881
        %v1049 = vunpack.c.l.b16 %v882
        %v1050 = vunpack.c.h.b16 %v882
        %v1051 = vunpack.c.l.b16 %v883
        %v1052 = vunpack.c.h.b16 %v883
        %v1053 = vunpack.c.l.b16 %v884
        %v1054 = vunpack.c.h.b16 %v884
        %v1055 = vunpack.c.l.b16 %v885
        %v1056 = vunpack.c.h.b16 %v885
        %v1057 = vunpack.c.l.b16 %v886
        %v1058 = vunpack.c.h.b16 %v886
        %v1059 = vunpack.c.l.b16 %v887
        %v1060 = vunpack.c.h.b16 %v887
        %v1061 = vunpack.c.l.b16 %v888
        %v1062 = vunpack.c.h.b16 %v888
        %v1063 = vunpack.c.l.b16 %v889
        %v1064 = vunpack.c.h.b16 %v889
        %v1065 = vunpack.c.l.b16 %v890
        %v1066 = vunpack.c.h.b16 %v890
        %v1067 = vunpack.c.l.b16 %v891
        %v1068 = vunpack.c.h.b16 %v891
        %v1069 = vunpack.c.l.b16 %v892
        %v1070 = vunpack.c.h.b16 %v892
        %v1071 = vunpack.c.l.b16 %v893
        %v1072 = vunpack.c.h.b16 %v893
        %v1073 = vunpack.c.l.b16 %v894
        %v1074 = vunpack.c.h.b16 %v894
        %v1075 = vunpack.c.l.b16 %v895
        %v1076 = vunpack.c.h.b16 %v895
        %v1077 = vunpack.c.l.b16 %v896
        %v1078 = vunpack.c.h.b16 %v896
        %v1079 = vunpack.c.l.b16 %v897
        %v1080 = vunpack.c.h.b16 %v897
        %v1081 = vunpack.c.l.b16 %v898
        %v1082 = vunpack.c.h.b16 %v898
        %v1083 = vunpack.c.l.b16 %v899
        %v1084 = vunpack.c.h.b16 %v899
        %v1085 = vunpack.c.l.b16 %v900
        %v1086 = vunpack.c.h.b16 %v900
        %v1087 = vunpack.c.l.b16 %v901
        %v1088 = vunpack.c.h.b16 %v901
        %v1089 = vunpack.c.l.b16 %v902
        %v1090 = vunpack.c.h.b16 %v902
        %v1091 = vunpack.c.l.b16 %v903
        %v1092 = vunpack.c.h.b16 %v903
        %v1093 = vunpack.c.l.b16 %v904
        %v1094 = vunpack.c.h.b16 %v904
        %v1095 = vunpack.c.l.b16 %v905
        %v1096 = vunpack.c.h.b16 %v905
        %v1097 = vunpack.c.l.b16 %v906
        %v1098 = vunpack.c.h.b16 %v906
        %v1099 = vunpack.c.l.b16 %v907
        %v1100 = vunpack.c.h.b16 %v907
        %v1101 = vunpack.c.l.b16 %v908
        %v1102 = vunpack.c.h.b16 %v908
        %v1103 = vunpack.c.l.b16 %v909
        %v1104 = vunpack.c.h.b16 %v909
        %v1105 = vunpack.c.l.b16 %v910
        %v1106 = vunpack.c.h.b16 %v910
        %v1107 = vunpack.c.l.b16 %v911
        %v1108 = vunpack.c.h.b16 %v911
        %v1109 = vunpack.c.l.b16 %v912
        %v1110 = vunpack.c.h.b16 %v912
        %v1111 = vunpack.c.l.b16 %v913
        %v1112 = vunpack.c.h.b16 %v913
        %v1113 = vunpack.c.l.b16 %v914
        %v1114 = vunpack.c.h.b16 %v914
        %v1115 = vunpack.c.l.b16 %v915
        %v1116 = vunpack.c.h.b16 %v915
        %v1117 = vunpack.c.l.b16 %v916
        %v1118 = vunpack.c.h.b16 %v916
        %v1119 = vunpack.c.l.b16 %v917
        %v1120 = vunpack.c.h.b16 %v917
        %v1121 = vunpack.c.l.b16 %v918
        %v1122 = vunpack.c.h.b16 %v918
        %v1123 = vunpack.c.l.b16 %v919
        %v1124 = vunpack.c.h.b16 %v919
        %v1125 = vunpack.c.l.b16 %v920
        %v1126 = vunpack.c.h.b16 %v920
        %v1127 = vunpack.c.l.b16 %v921
        %v1128 = vunpack.c.h.b16 %v921
        %v1129 = vunpack.c.l.b16 %v922
        %v1130 = vunpack.c.h.b16 %v922
        %v1131 = vunpack.c.l.b16 %v923
        %v1132 = vunpack.c.h.b16 %v923
        %v1133 = vunpack.c.l.b16 %v924
        %v1134 = vunpack.c.h.b16 %v924
        %v1135 = vunpack.c.l.b16 %v925
        %v1136 = vunpack.c.h.b16 %v925
        %v1137 = vunpack.c.l.b16 %v926
        %v1138 = vunpack.c.h.b16 %v926
        %v1139 = vunpack.c.l.b16 %v927
        %v1140 = vunpack.c.h.b16 %v927
        %v1141 = vunpack.c.l.b16 %v928
        %v1142 = vunpack.c.h.b16 %v928
        %v1143 = vunpack.c.l.b16 %v929
        %v1144 = vunpack.c.h.b16 %v929
        %v1145 = vunpack.c.l.b16 %v930
        %v1146 = vunpack.c.h.b16 %v930
        %v1147 = vpack.c.b16 %v1023, %v1019
        %v1148 = vpack.c.b16 %v1024, %v1020
        %v1149 = vpack.c.b16 %v1025, %v1021
        %v1150 = vpack.c.b16 %v1026, %v1022
        %v1151 = vpack.c.b16 %v1031, %v1027
        %v1152 = vpack.c.b16 %v1032, %v1028
        %v1153 = vpack.c.b16 %v1033, %v1029
        %v1154 = vpack.c.b16 %v1034, %v1030
        %v1155 = vpack.c.b16 %v1039, %v1035
        %v1156 = vpack.c.b16 %v1040, %v1036
        %v1157 = vpack.c.b16 %v1041, %v1037
        %v1158 = vpack.c.b16 %v1042, %v1038
        %v1159 = vpack.c.b16 %v1047, %v1043
        %v1160 = vpack.c.b16 %v1048, %v1044
        %v1161 = vpack.c.b16 %v1049, %v1045
        %v1162 = vpack.c.b16 %v1050, %v1046
        %v1163 = vpack.c.b16 %v1055, %v1051
        %v1164 = vpack.c.b16 %v1056, %v1052
        %v1165 = vpack.c.b16 %v1057, %v1053
        %v1166 = vpack.c.b16 %v1058, %v1054
        %v1167 = vpack.c.b16 %v1063, %v1059
        %v1168 = vpack.c.b16 %v1064, %v1060
        %v1169 = vpack.c.b16 %v1065, %v1061
        %v1170 = vpack.c.b16 %v1066, %v1062
        %v1171 = vpack.c.b16 %v1071, %v1067
        %v1172 = vpack.c.b16 %v1072, %v1068
        %v1173 = vpack.c.b16 %v1073, %v1069
        %v1174 = vpack.c.b16 %v1074, %v1070
        %v1175 = vpack.c.b16 %v1079, %v1075
        %v1176 = vpack.c.b16 %v1080, %v1076
        %v1177 = vpack.c.b16 %v1081, %v1077
        %v1178 = vpack.c.b16 %v1082, %v1078
        %v1179 = vpack.c.b16 %v1087, %v1083
        %v1180 = vpack.c.b16 %v1088, %v1084
        %v1181 = vpack.c.b16 %v1089, %v1085
        %v1182 = vpack.c.b16 %v1090, %v1086
        %v1183 = vpack.c.b16 %v1095, %v1091
        %v1184 = vpack.c.b16 %v1096, %v1092
        %v1185 = vpack.c.b16 %v1097, %v1093
        %v1186 = vpack.c.b16 %v1098, %v1094
        %v1187 = vpack.c.b16 %v1103, %v1099
        %v1188 = vpack.c.b16 %v1104, %v1100
        %v1189 = vpack.c.b16 %v1105, %v1101
        %v1190 = vpack.c.b16 %v1106, %v1102
        %v1191 = vpack.c.b16 %v1111, %v1107
        %v1192 = vpack.c.b16 %v1112, %v1108
        %v1193 = vpack.c.b16 %v1113, %v1109
        %v1194 = vpack.c.b16 %v1114, %v1110
        %v1195 = vpack.c.b16 %v1119, %v1115
        %v1196 = vpack.c.b16 %v1120, %v1116
        %v1197 = vpack.c.b16 %v1121, %v1117
        %v1198 = vpack.c.b16 %v1122, %v1118
        %v1199 = vpack.c.b16 %v1127, %v1123
        %v1200 = vpack.c.b16 %v1128, %v1124
        %v1201 = vpack.c.b16 %v1129, %v1125
        %v1202 = vpack.c.b16 %v1130, %v1126
        %v1203 = vpack.c.b16 %v1135, %v1131
        %v1204 = vpack.c.b16 %v1136, %v1132
        %v1205 = vpack.c.b16 %v1137, %v1133
        %v1206 = vpack.c.b16 %v1138, %v1134
        %v1207 = vpack.c.b16 %v1143, %v1139
        %v1208 = vpack.c.b16 %v1144, %v1140
        %v1209 = vpack.c.b16 %v1145, %v1141
        %v1210 = vpack.c.b16 %v1146, %v1142
        %1275 = vmatpush.bf16.msra.mxu0 %v1175
        %1276 = vmatpush.bf16.msra.mxu0 %v1171
        %1277 = vmatpush.bf16.msra.mxu0 %v1167
        %1278 = vmatpush.bf16.msra.mxu0 %v1163
        %1279 = vmatpush.bf16.msra.mxu0 %v1159
        %1280 = vmatpush.bf16.msra.mxu0 %v1155
        %1281 = vmatpush.bf16.msra.mxu0 %v1151
        %1282 = vmatpush.bf16.msra.mxu0 %v1147
        %1283 = vmatmul.bf16.gmra.mxu0 %v945
        %v1284 = vpop.f32.mrf.mxu0
        %v1285 = vadd.f32 0.0, %v1284
        %v1286 = vpop.f32.mrf.mxu0
        %1287 = vdwg.mxu0
        %1288 = vmatpush.bf16.msra.mxu0 %v1207
        %1289 = vmatpush.bf16.msra.mxu0 %v1203
        %1290 = vmatpush.bf16.msra.mxu0 %v1199
        %1291 = vmatpush.bf16.msra.mxu0 %v1195
        %1292 = vmatpush.bf16.msra.mxu0 %v1191
        %1293 = vmatpush.bf16.msra.mxu0 %v1187
        %1294 = vmatpush.bf16.msra.mxu0 %v1183
        %1295 = vmatpush.bf16.msra.mxu0 %v1179
        %1296 = vmatmul.bf16.gmra.mxu0 %v952
        %v1297 = vpop.f32.mrf.mxu0
        %v1298 = vadd.f32 %v1285, %v1297
        %v1299 = vpop.f32.mrf.mxu0
        %1300 = vdwg.mxu0
        %1301 = vmatpush.bf16.msra.mxu0 %v1176
        %1302 = vmatpush.bf16.msra.mxu0 %v1172
        %1303 = vmatpush.bf16.msra.mxu0 %v1168
        %1304 = vmatpush.bf16.msra.mxu0 %v1164
        %1305 = vmatpush.bf16.msra.mxu0 %v1160
        %1306 = vmatpush.bf16.msra.mxu0 %v1156
        %1307 = vmatpush.bf16.msra.mxu0 %v1152
        %1308 = vmatpush.bf16.msra.mxu0 %v1148
        %1309 = vmatmul.bf16.gmra.mxu0 %v945
        %v1310 = vpop.f32.mrf.mxu0
        %v1311 = vadd.f32 0.0, %v1310
        %v1312 = vpop.f32.mrf.mxu0
        %1313 = vdwg.mxu0
        %1314 = vmatpush.bf16.msra.mxu0 %v1208
        %1315 = vmatpush.bf16.msra.mxu0 %v1204
        %1316 = vmatpush.bf16.msra.mxu0 %v1200
        %1317 = vmatpush.bf16.msra.mxu0 %v1196
        %1318 = vmatpush.bf16.msra.mxu0 %v1192
        %1319 = vmatpush.bf16.msra.mxu0 %v1188
        %1320 = vmatpush.bf16.msra.mxu0 %v1184
        %1321 = vmatpush.bf16.msra.mxu0 %v1180
        %1322 = vmatmul.bf16.gmra.mxu0 %v952
        %v1323 = vpop.f32.mrf.mxu0
        %v1324 = vadd.f32 %v1311, %v1323
        %v1325 = vpop.f32.mrf.mxu0
        %1326 = vdwg.mxu0
        %1327 = vmatpush.bf16.msra.mxu0 %v1177
        %1328 = vmatpush.bf16.msra.mxu0 %v1173
        %1329 = vmatpush.bf16.msra.mxu0 %v1169
        %1330 = vmatpush.bf16.msra.mxu0 %v1165
        %1331 = vmatpush.bf16.msra.mxu0 %v1161
        %1332 = vmatpush.bf16.msra.mxu0 %v1157
        %1333 = vmatpush.bf16.msra.mxu0 %v1153
        %1334 = vmatpush.bf16.msra.mxu0 %v1149
        %1335 = vmatmul.bf16.gmra.mxu0 %v945
        %v1336 = vpop.f32.mrf.mxu0
        %v1337 = vadd.f32 0.0, %v1336
        %v1338 = vpop.f32.mrf.mxu0
        %1339 = vdwg.mxu0
        %1340 = vmatpush.bf16.msra.mxu0 %v1209
        %1341 = vmatpush.bf16.msra.mxu0 %v1205
        %1342 = vmatpush.bf16.msra.mxu0 %v1201
        %1343 = vmatpush.bf16.msra.mxu0 %v1197
        %1344 = vmatpush.bf16.msra.mxu0 %v1193
        %1345 = vmatpush.bf16.msra.mxu0 %v1189
        %1346 = vmatpush.bf16.msra.mxu0 %v1185
        %1347 = vmatpush.bf16.msra.mxu0 %v1181
        %1348 = vmatmul.bf16.gmra.mxu0 %v952
        %v1349 = vpop.f32.mrf.mxu0
        %v1350 = vadd.f32 %v1337, %v1349
        %v1351 = vpop.f32.mrf.mxu0
        %1352 = vdwg.mxu0
        %1353 = vmatpush.bf16.msra.mxu0 %v1178
        %1354 = vmatpush.bf16.msra.mxu0 %v1174
        %1355 = vmatpush.bf16.msra.mxu0 %v1170
        %1356 = vmatpush.bf16.msra.mxu0 %v1166
        %1357 = vmatpush.bf16.msra.mxu0 %v1162
        %1358 = vmatpush.bf16.msra.mxu0 %v1158
        %1359 = vmatpush.bf16.msra.mxu0 %v1154
        %1360 = vmatpush.bf16.msra.mxu0 %v1150
        %1361 = vmatmul.bf16.gmra.mxu0 %v945
        %v1362 = vpop.f32.mrf.mxu0
        %v1363 = vadd.f32 0.0, %v1362
        %v1364 = vpop.f32.mrf.mxu0
        %1365 = vdwg.mxu0
        %1366 = vmatpush.bf16.msra.mxu0 %v1210
        %1367 = vmatpush.bf16.msra.mxu0 %v1206
        %1368 = vmatpush.bf16.msra.mxu0 %v1202
        %1369 = vmatpush.bf16.msra.mxu0 %v1198
        %1370 = vmatpush.bf16.msra.mxu0 %v1194
        %1371 = vmatpush.bf16.msra.mxu0 %v1190
        %1372 = vmatpush.bf16.msra.mxu0 %v1186
        %1373 = vmatpush.bf16.msra.mxu0 %v1182
        %1374 = vmatmul.bf16.gmra.mxu0 %v952
        %v1375 = vpop.f32.mrf.mxu0
        %v1376 = vadd.f32 %v1363, %v1375
        %v1377 = vpop.f32.mrf.mxu0
        %1378 = vdwg.mxu0
        %v1379 = vadd.f32 %v860, %v1298
        %v1380 = vadd.f32 %v861, %v1324
        %v1381 = vadd.f32 %v862, %v1350
        %v1382 = vadd.f32 %v863, %v1376
        %v1383 = vld [vmem:[%s353] sm:$0xee]
        %s1384 = scalar_lea.vmem [#allocation4], 1024
        %v1385 = vld [vmem:[%s1384] sm:$0xff]
        %v1386 = vld [vmem:[%s1384 + $0x8] sm:$0xff]
        %v1387 = vld [vmem:[%s1384 + $0x10] sm:$0xff]
        %v1388 = vld [vmem:[%s1384 + $0x18] sm:$0xff]
        %v1389 = vld [vmem:[%s1384 + $0x20] sm:$0xff]
        %v1390 = vld [vmem:[%s1384 + $0x28] sm:$0xff]
        %v1391 = vld [vmem:[%s1384 + $0x30] sm:$0xff]
        %v1392 = vld [vmem:[%s1384 + $0x38] sm:$0xff]
        %v1393 = vld [vmem:[%s1384 + $0x40] sm:$0xff]
        %v1394 = vld [vmem:[%s1384 + $0x48] sm:$0xff]
        %v1395 = vld [vmem:[%s1384 + $0x50] sm:$0xff]
        %v1396 = vld [vmem:[%s1384 + $0x58] sm:$0xff]
        %v1397 = vld [vmem:[%s1384 + $0x60] sm:$0xff]
        %v1398 = vld [vmem:[%s1384 + $0x68] sm:$0xff]
        %v1399 = vld [vmem:[%s1384 + $0x70] sm:$0xff]
        %v1400 = vld [vmem:[%s1384 + $0x78] sm:$0xff]
        %v1401 = vld [vmem:[%s1384 + $0x80] sm:$0xff]
        %v1402 = vld [vmem:[%s1384 + $0x88] sm:$0xff]
        %v1403 = vld [vmem:[%s1384 + $0x90] sm:$0xff]
        %v1404 = vld [vmem:[%s1384 + $0x98] sm:$0xff]
        %v1405 = vld [vmem:[%s1384 + $0xa0] sm:$0xff]
        %v1406 = vld [vmem:[%s1384 + $0xa8] sm:$0xff]
        %v1407 = vld [vmem:[%s1384 + $0xb0] sm:$0xff]
        %v1408 = vld [vmem:[%s1384 + $0xb8] sm:$0xff]
        %v1409 = vld [vmem:[%s1384 + $0xc0] sm:$0xff]
        %v1410 = vld [vmem:[%s1384 + $0xc8] sm:$0xff]
        %v1411 = vld [vmem:[%s1384 + $0xd0] sm:$0xff]
        %v1412 = vld [vmem:[%s1384 + $0xd8] sm:$0xff]
        %v1413 = vld [vmem:[%s1384 + $0xe0] sm:$0xff]
        %v1414 = vld [vmem:[%s1384 + $0xe8] sm:$0xff]
        %v1415 = vld [vmem:[%s1384 + $0xf0] sm:$0xff]
        %v1416 = vld [vmem:[%s1384 + $0xf8] sm:$0xff]
        %v1417 = vld [vmem:[%s1384 + $0x100] sm:$0xff]
        %v1418 = vld [vmem:[%s1384 + $0x108] sm:$0xff]
        %v1419 = vld [vmem:[%s1384 + $0x110] sm:$0xff]
        %v1420 = vld [vmem:[%s1384 + $0x118] sm:$0xff]
        %v1421 = vld [vmem:[%s1384 + $0x120] sm:$0xff]
        %v1422 = vld [vmem:[%s1384 + $0x128] sm:$0xff]
        %v1423 = vld [vmem:[%s1384 + $0x130] sm:$0xff]
        %v1424 = vld [vmem:[%s1384 + $0x138] sm:$0xff]
        %v1425 = vld [vmem:[%s1384 + $0x140] sm:$0xff]
        %v1426 = vld [vmem:[%s1384 + $0x148] sm:$0xff]
        %v1427 = vld [vmem:[%s1384 + $0x150] sm:$0xff]
        %v1428 = vld [vmem:[%s1384 + $0x158] sm:$0xff]
        %v1429 = vld [vmem:[%s1384 + $0x160] sm:$0xff]
        %v1430 = vld [vmem:[%s1384 + $0x168] sm:$0xff]
        %v1431 = vld [vmem:[%s1384 + $0x170] sm:$0xff]
        %v1432 = vld [vmem:[%s1384 + $0x178] sm:$0xff]
        %v1433 = vld [vmem:[%s1384 + $0x180] sm:$0xff]
        %v1434 = vld [vmem:[%s1384 + $0x188] sm:$0xff]
        %v1435 = vld [vmem:[%s1384 + $0x190] sm:$0xff]
        %v1436 = vld [vmem:[%s1384 + $0x198] sm:$0xff]
        %v1437 = vld [vmem:[%s1384 + $0x1a0] sm:$0xff]
        %v1438 = vld [vmem:[%s1384 + $0x1a8] sm:$0xff]
        %v1439 = vld [vmem:[%s1384 + $0x1b0] sm:$0xff]
        %v1440 = vld [vmem:[%s1384 + $0x1b8] sm:$0xff]
        %v1441 = vld [vmem:[%s1384 + $0x1c0] sm:$0xff]
        %v1442 = vld [vmem:[%s1384 + $0x1c8] sm:$0xff]
        %v1443 = vld [vmem:[%s1384 + $0x1d0] sm:$0xff]
        %v1444 = vld [vmem:[%s1384 + $0x1d8] sm:$0xff]
        %v1445 = vld [vmem:[%s1384 + $0x1e0] sm:$0xff]
        %v1446 = vld [vmem:[%s1384 + $0x1e8] sm:$0xff]
        %v1447 = vld [vmem:[%s1384 + $0x1f0] sm:$0xff]
        %v1448 = vld [vmem:[%s1384 + $0x1f8] sm:$0xff]
        %v1450 = vunpack.c.l.b16 %v1383
        %v1451 = vunpack.c.h.b16 %v1383
        %v1452 = vpack.c.b16 %v935, %v1450
        %v1453 = vpack.c.b16 %v936, %v1451
        %v1454 = vrot.slane %v1452, 1
        %v1455 = vrot.slane %v1453, 1
        %v1522 = vunpack.c.l.b16 %v1385
        %v1523 = vunpack.c.h.b16 %v1385
        %v1524 = vunpack.c.l.b16 %v1386
        %v1525 = vunpack.c.h.b16 %v1386
        %v1526 = vunpack.c.l.b16 %v1387
        %v1527 = vunpack.c.h.b16 %v1387
        %v1528 = vunpack.c.l.b16 %v1388
        %v1529 = vunpack.c.h.b16 %v1388
        %v1530 = vunpack.c.l.b16 %v1389
        %v1531 = vunpack.c.h.b16 %v1389
        %v1532 = vunpack.c.l.b16 %v1390
        %v1533 = vunpack.c.h.b16 %v1390
        %v1534 = vunpack.c.l.b16 %v1391
        %v1535 = vunpack.c.h.b16 %v1391
        %v1536 = vunpack.c.l.b16 %v1392
        %v1537 = vunpack.c.h.b16 %v1392
        %v1538 = vunpack.c.l.b16 %v1393
        %v1539 = vunpack.c.h.b16 %v1393
        %v1540 = vunpack.c.l.b16 %v1394
        %v1541 = vunpack.c.h.b16 %v1394
        %v1542 = vunpack.c.l.b16 %v1395
        %v1543 = vunpack.c.h.b16 %v1395
        %v1544 = vunpack.c.l.b16 %v1396
        %v1545 = vunpack.c.h.b16 %v1396
        %v1546 = vunpack.c.l.b16 %v1397
        %v1547 = vunpack.c.h.b16 %v1397
        %v1548 = vunpack.c.l.b16 %v1398
        %v1549 = vunpack.c.h.b16 %v1398
        %v1550 = vunpack.c.l.b16 %v1399
        %v1551 = vunpack.c.h.b16 %v1399
        %v1552 = vunpack.c.l.b16 %v1400
        %v1553 = vunpack.c.h.b16 %v1400
        %v1554 = vunpack.c.l.b16 %v1401
        %v1555 = vunpack.c.h.b16 %v1401
        %v1556 = vunpack.c.l.b16 %v1402
        %v1557 = vunpack.c.h.b16 %v1402
        %v1558 = vunpack.c.l.b16 %v1403
        %v1559 = vunpack.c.h.b16 %v1403
        %v1560 = vunpack.c.l.b16 %v1404
        %v1561 = vunpack.c.h.b16 %v1404
        %v1562 = vunpack.c.l.b16 %v1405
        %v1563 = vunpack.c.h.b16 %v1405
        %v1564 = vunpack.c.l.b16 %v1406
        %v1565 = vunpack.c.h.b16 %v1406
        %v1566 = vunpack.c.l.b16 %v1407
        %v1567 = vunpack.c.h.b16 %v1407
        %v1568 = vunpack.c.l.b16 %v1408
        %v1569 = vunpack.c.h.b16 %v1408
        %v1570 = vunpack.c.l.b16 %v1409
        %v1571 = vunpack.c.h.b16 %v1409
        %v1572 = vunpack.c.l.b16 %v1410
        %v1573 = vunpack.c.h.b16 %v1410
        %v1574 = vunpack.c.l.b16 %v1411
        %v1575 = vunpack.c.h.b16 %v1411
        %v1576 = vunpack.c.l.b16 %v1412
        %v1577 = vunpack.c.h.b16 %v1412
        %v1578 = vunpack.c.l.b16 %v1413
        %v1579 = vunpack.c.h.b16 %v1413
        %v1580 = vunpack.c.l.b16 %v1414
        %v1581 = vunpack.c.h.b16 %v1414
        %v1582 = vunpack.c.l.b16 %v1415
        %v1583 = vunpack.c.h.b16 %v1415
        %v1584 = vunpack.c.l.b16 %v1416
        %v1585 = vunpack.c.h.b16 %v1416
        %v1586 = vunpack.c.l.b16 %v1417
        %v1587 = vunpack.c.h.b16 %v1417
        %v1588 = vunpack.c.l.b16 %v1418
        %v1589 = vunpack.c.h.b16 %v1418
        %v1590 = vunpack.c.l.b16 %v1419
        %v1591 = vunpack.c.h.b16 %v1419
        %v1592 = vunpack.c.l.b16 %v1420
        %v1593 = vunpack.c.h.b16 %v1420
        %v1594 = vunpack.c.l.b16 %v1421
        %v1595 = vunpack.c.h.b16 %v1421
        %v1596 = vunpack.c.l.b16 %v1422
        %v1597 = vunpack.c.h.b16 %v1422
        %v1598 = vunpack.c.l.b16 %v1423
        %v1599 = vunpack.c.h.b16 %v1423
        %v1600 = vunpack.c.l.b16 %v1424
        %v1601 = vunpack.c.h.b16 %v1424
        %v1602 = vunpack.c.l.b16 %v1425
        %v1603 = vunpack.c.h.b16 %v1425
        %v1604 = vunpack.c.l.b16 %v1426
        %v1605 = vunpack.c.h.b16 %v1426
        %v1606 = vunpack.c.l.b16 %v1427
        %v1607 = vunpack.c.h.b16 %v1427
        %v1608 = vunpack.c.l.b16 %v1428
        %v1609 = vunpack.c.h.b16 %v1428
        %v1610 = vunpack.c.l.b16 %v1429
        %v1611 = vunpack.c.h.b16 %v1429
        %v1612 = vunpack.c.l.b16 %v1430
        %v1613 = vunpack.c.h.b16 %v1430
        %v1614 = vunpack.c.l.b16 %v1431
        %v1615 = vunpack.c.h.b16 %v1431
        %v1616 = vunpack.c.l.b16 %v1432
        %v1617 = vunpack.c.h.b16 %v1432
        %v1618 = vunpack.c.l.b16 %v1433
        %v1619 = vunpack.c.h.b16 %v1433
        %v1620 = vunpack.c.l.b16 %v1434
        %v1621 = vunpack.c.h.b16 %v1434
        %v1622 = vunpack.c.l.b16 %v1435
        %v1623 = vunpack.c.h.b16 %v1435
        %v1624 = vunpack.c.l.b16 %v1436
        %v1625 = vunpack.c.h.b16 %v1436
        %v1626 = vunpack.c.l.b16 %v1437
        %v1627 = vunpack.c.h.b16 %v1437
        %v1628 = vunpack.c.l.b16 %v1438
        %v1629 = vunpack.c.h.b16 %v1438
        %v1630 = vunpack.c.l.b16 %v1439
        %v1631 = vunpack.c.h.b16 %v1439
        %v1632 = vunpack.c.l.b16 %v1440
        %v1633 = vunpack.c.h.b16 %v1440
        %v1634 = vunpack.c.l.b16 %v1441
        %v1635 = vunpack.c.h.b16 %v1441
        %v1636 = vunpack.c.l.b16 %v1442
        %v1637 = vunpack.c.h.b16 %v1442
        %v1638 = vunpack.c.l.b16 %v1443
        %v1639 = vunpack.c.h.b16 %v1443
        %v1640 = vunpack.c.l.b16 %v1444
        %v1641 = vunpack.c.h.b16 %v1444
        %v1642 = vunpack.c.l.b16 %v1445
        %v1643 = vunpack.c.h.b16 %v1445
        %v1644 = vunpack.c.l.b16 %v1446
        %v1645 = vunpack.c.h.b16 %v1446
        %v1646 = vunpack.c.l.b16 %v1447
        %v1647 = vunpack.c.h.b16 %v1447
        %v1648 = vunpack.c.l.b16 %v1448
        %v1649 = vunpack.c.h.b16 %v1448
        %v1650 = vpack.c.b16 %v1526, %v1522
        %v1651 = vpack.c.b16 %v1527, %v1523
        %v1652 = vpack.c.b16 %v1528, %v1524
        %v1653 = vpack.c.b16 %v1529, %v1525
        %v1654 = vpack.c.b16 %v1534, %v1530
        %v1655 = vpack.c.b16 %v1535, %v1531
        %v1656 = vpack.c.b16 %v1536, %v1532
        %v1657 = vpack.c.b16 %v1537, %v1533
        %v1658 = vpack.c.b16 %v1542, %v1538
        %v1659 = vpack.c.b16 %v1543, %v1539
        %v1660 = vpack.c.b16 %v1544, %v1540
        %v1661 = vpack.c.b16 %v1545, %v1541
        %v1662 = vpack.c.b16 %v1550, %v1546
        %v1663 = vpack.c.b16 %v1551, %v1547
        %v1664 = vpack.c.b16 %v1552, %v1548
        %v1665 = vpack.c.b16 %v1553, %v1549
        %v1666 = vpack.c.b16 %v1558, %v1554
        %v1667 = vpack.c.b16 %v1559, %v1555
        %v1668 = vpack.c.b16 %v1560, %v1556
        %v1669 = vpack.c.b16 %v1561, %v1557
        %v1670 = vpack.c.b16 %v1566, %v1562
        %v1671 = vpack.c.b16 %v1567, %v1563
        %v1672 = vpack.c.b16 %v1568, %v1564
        %v1673 = vpack.c.b16 %v1569, %v1565
        %v1674 = vpack.c.b16 %v1574, %v1570
        %v1675 = vpack.c.b16 %v1575, %v1571
        %v1676 = vpack.c.b16 %v1576, %v1572
        %v1677 = vpack.c.b16 %v1577, %v1573
        %v1678 = vpack.c.b16 %v1582, %v1578
        %v1679 = vpack.c.b16 %v1583, %v1579
        %v1680 = vpack.c.b16 %v1584, %v1580
        %v1681 = vpack.c.b16 %v1585, %v1581
        %v1682 = vpack.c.b16 %v1590, %v1586
        %v1683 = vpack.c.b16 %v1591, %v1587
        %v1684 = vpack.c.b16 %v1592, %v1588
        %v1685 = vpack.c.b16 %v1593, %v1589
        %v1686 = vpack.c.b16 %v1598, %v1594
        %v1687 = vpack.c.b16 %v1599, %v1595
        %v1688 = vpack.c.b16 %v1600, %v1596
        %v1689 = vpack.c.b16 %v1601, %v1597
        %v1690 = vpack.c.b16 %v1606, %v1602
        %v1691 = vpack.c.b16 %v1607, %v1603
        %v1692 = vpack.c.b16 %v1608, %v1604
        %v1693 = vpack.c.b16 %v1609, %v1605
        %v1694 = vpack.c.b16 %v1614, %v1610
        %v1695 = vpack.c.b16 %v1615, %v1611
        %v1696 = vpack.c.b16 %v1616, %v1612
        %v1697 = vpack.c.b16 %v1617, %v1613
        %v1698 = vpack.c.b16 %v1622, %v1618
        %v1699 = vpack.c.b16 %v1623, %v1619
        %v1700 = vpack.c.b16 %v1624, %v1620
        %v1701 = vpack.c.b16 %v1625, %v1621
        %v1702 = vpack.c.b16 %v1630, %v1626
        %v1703 = vpack.c.b16 %v1631, %v1627
        %v1704 = vpack.c.b16 %v1632, %v1628
        %v1705 = vpack.c.b16 %v1633, %v1629
        %v1706 = vpack.c.b16 %v1638, %v1634
        %v1707 = vpack.c.b16 %v1639, %v1635
        %v1708 = vpack.c.b16 %v1640, %v1636
        %v1709 = vpack.c.b16 %v1641, %v1637
        %v1710 = vpack.c.b16 %v1646, %v1642
        %v1711 = vpack.c.b16 %v1647, %v1643
        %v1712 = vpack.c.b16 %v1648, %v1644
        %v1713 = vpack.c.b16 %v1649, %v1645
        %1778 = vmatpush.bf16.msra.mxu0 %v1678
        %1779 = vmatpush.bf16.msra.mxu0 %v1674
        %1780 = vmatpush.bf16.msra.mxu0 %v1670
        %1781 = vmatpush.bf16.msra.mxu0 %v1666
        %1782 = vmatpush.bf16.msra.mxu0 %v1662
        %1783 = vmatpush.bf16.msra.mxu0 %v1658
        %1784 = vmatpush.bf16.msra.mxu0 %v1654
        %1785 = vmatpush.bf16.msra.mxu0 %v1650
        %1786 = vmatmul.bf16.gmra.mxu0 %v1454
        %v1787 = vpop.f32.mrf.mxu0
        %v1788 = vadd.f32 0.0, %v1787
        %v1789 = vpop.f32.mrf.mxu0
        %1790 = vdwg.mxu0
        %1791 = vmatpush.bf16.msra.mxu0 %v1710
        %1792 = vmatpush.bf16.msra.mxu0 %v1706
        %1793 = vmatpush.bf16.msra.mxu0 %v1702
        %1794 = vmatpush.bf16.msra.mxu0 %v1698
        %1795 = vmatpush.bf16.msra.mxu0 %v1694
        %1796 = vmatpush.bf16.msra.mxu0 %v1690
        %1797 = vmatpush.bf16.msra.mxu0 %v1686
        %1798 = vmatpush.bf16.msra.mxu0 %v1682
        %1799 = vmatmul.bf16.gmra.mxu0 %v1455
        %v1800 = vpop.f32.mrf.mxu0
        %v1801 = vadd.f32 %v1788, %v1800
        %v1802 = vpop.f32.mrf.mxu0
        %1803 = vdwg.mxu0
        %1804 = vmatpush.bf16.msra.mxu0 %v1679
        %1805 = vmatpush.bf16.msra.mxu0 %v1675
        %1806 = vmatpush.bf16.msra.mxu0 %v1671
        %1807 = vmatpush.bf16.msra.mxu0 %v1667
        %1808 = vmatpush.bf16.msra.mxu0 %v1663
        %1809 = vmatpush.bf16.msra.mxu0 %v1659
        %1810 = vmatpush.bf16.msra.mxu0 %v1655
        %1811 = vmatpush.bf16.msra.mxu0 %v1651
        %1812 = vmatmul.bf16.gmra.mxu0 %v1454
        %v1813 = vpop.f32.mrf.mxu0
        %v1814 = vadd.f32 0.0, %v1813
        %v1815 = vpop.f32.mrf.mxu0
        %1816 = vdwg.mxu0
        %1817 = vmatpush.bf16.msra.mxu0 %v1711
        %1818 = vmatpush.bf16.msra.mxu0 %v1707
        %1819 = vmatpush.bf16.msra.mxu0 %v1703
        %1820 = vmatpush.bf16.msra.mxu0 %v1699
        %1821 = vmatpush.bf16.msra.mxu0 %v1695
        %1822 = vmatpush.bf16.msra.mxu0 %v1691
        %1823 = vmatpush.bf16.msra.mxu0 %v1687
        %1824 = vmatpush.bf16.msra.mxu0 %v1683
        %1825 = vmatmul.bf16.gmra.mxu0 %v1455
        %v1826 = vpop.f32.mrf.mxu0
        %v1827 = vadd.f32 %v1814, %v1826
        %v1828 = vpop.f32.mrf.mxu0
        %1829 = vdwg.mxu0
        %1830 = vmatpush.bf16.msra.mxu0 %v1680
        %1831 = vmatpush.bf16.msra.mxu0 %v1676
        %1832 = vmatpush.bf16.msra.mxu0 %v1672
        %1833 = vmatpush.bf16.msra.mxu0 %v1668
        %1834 = vmatpush.bf16.msra.mxu0 %v1664
        %1835 = vmatpush.bf16.msra.mxu0 %v1660
        %1836 = vmatpush.bf16.msra.mxu0 %v1656
        %1837 = vmatpush.bf16.msra.mxu0 %v1652
        %1838 = vmatmul.bf16.gmra.mxu0 %v1454
        %v1839 = vpop.f32.mrf.mxu0
        %v1840 = vadd.f32 0.0, %v1839
        %v1841 = vpop.f32.mrf.mxu0
        %1842 = vdwg.mxu0
        %1843 = vmatpush.bf16.msra.mxu0 %v1712
        %1844 = vmatpush.bf16.msra.mxu0 %v1708
        %1845 = vmatpush.bf16.msra.mxu0 %v1704
        %1846 = vmatpush.bf16.msra.mxu0 %v1700
        %1847 = vmatpush.bf16.msra.mxu0 %v1696
        %1848 = vmatpush.bf16.msra.mxu0 %v1692
        %1849 = vmatpush.bf16.msra.mxu0 %v1688
        %1850 = vmatpush.bf16.msra.mxu0 %v1684
        %1851 = vmatmul.bf16.gmra.mxu0 %v1455
        %v1852 = vpop.f32.mrf.mxu0
        %v1853 = vadd.f32 %v1840, %v1852
        %v1854 = vpop.f32.mrf.mxu0
        %1855 = vdwg.mxu0
        %1856 = vmatpush.bf16.msra.mxu0 %v1681
        %1857 = vmatpush.bf16.msra.mxu0 %v1677
        %1858 = vmatpush.bf16.msra.mxu0 %v1673
        %1859 = vmatpush.bf16.msra.mxu0 %v1669
        %1860 = vmatpush.bf16.msra.mxu0 %v1665
        %1861 = vmatpush.bf16.msra.mxu0 %v1661
        %1862 = vmatpush.bf16.msra.mxu0 %v1657
        %1863 = vmatpush.bf16.msra.mxu0 %v1653
        %1864 = vmatmul.bf16.gmra.mxu0 %v1454
        %v1865 = vpop.f32.mrf.mxu0
        %v1866 = vadd.f32 0.0, %v1865
        %v1867 = vpop.f32.mrf.mxu0
        %1868 = vdwg.mxu0
        %1869 = vmatpush.bf16.msra.mxu0 %v1713
        %1870 = vmatpush.bf16.msra.mxu0 %v1709
        %1871 = vmatpush.bf16.msra.mxu0 %v1705
        %1872 = vmatpush.bf16.msra.mxu0 %v1701
        %1873 = vmatpush.bf16.msra.mxu0 %v1697
        %1874 = vmatpush.bf16.msra.mxu0 %v1693
        %1875 = vmatpush.bf16.msra.mxu0 %v1689
        %1876 = vmatpush.bf16.msra.mxu0 %v1685
        %1877 = vmatmul.bf16.gmra.mxu0 %v1455
        %v1878 = vpop.f32.mrf.mxu0
        %v1879 = vadd.f32 %v1866, %v1878
        %v1880 = vpop.f32.mrf.mxu0
        %1881 = vdwg.mxu0
        %v1882 = vadd.f32 %v1379, %v1801
        %v1883 = vadd.f32 %v1380, %v1827
        %v1884 = vadd.f32 %v1381, %v1853
        %v1885 = vadd.f32 %v1382, %v1879
        %v1886 = vld [vmem:[%s353 + $0x8] sm:$0x33]
        %s1887 = scalar_lea.vmem [#allocation4], 1536
        %v1888 = vld [vmem:[%s1887] sm:$0xff]
        %v1889 = vld [vmem:[%s1887 + $0x8] sm:$0xff]
        %v1890 = vld [vmem:[%s1887 + $0x10] sm:$0xff]
        %v1891 = vld [vmem:[%s1887 + $0x18] sm:$0xff]
        %v1892 = vld [vmem:[%s1887 + $0x20] sm:$0xff]
        %v1893 = vld [vmem:[%s1887 + $0x28] sm:$0xff]
        %v1894 = vld [vmem:[%s1887 + $0x30] sm:$0xff]
        %v1895 = vld [vmem:[%s1887 + $0x38] sm:$0xff]
        %v1896 = vld [vmem:[%s1887 + $0x40] sm:$0xff]
        %v1897 = vld [vmem:[%s1887 + $0x48] sm:$0xff]
        %v1898 = vld [vmem:[%s1887 + $0x50] sm:$0xff]
        %v1899 = vld [vmem:[%s1887 + $0x58] sm:$0xff]
        %v1900 = vld [vmem:[%s1887 + $0x60] sm:$0xff]
        %v1901 = vld [vmem:[%s1887 + $0x68] sm:$0xff]
        %v1902 = vld [vmem:[%s1887 + $0x70] sm:$0xff]
        %v1903 = vld [vmem:[%s1887 + $0x78] sm:$0xff]
        %v1904 = vld [vmem:[%s1887 + $0x80] sm:$0xff]
        %v1905 = vld [vmem:[%s1887 + $0x88] sm:$0xff]
        %v1906 = vld [vmem:[%s1887 + $0x90] sm:$0xff]
        %v1907 = vld [vmem:[%s1887 + $0x98] sm:$0xff]
        %v1908 = vld [vmem:[%s1887 + $0xa0] sm:$0xff]
        %v1909 = vld [vmem:[%s1887 + $0xa8] sm:$0xff]
        %v1910 = vld [vmem:[%s1887 + $0xb0] sm:$0xff]
        %v1911 = vld [vmem:[%s1887 + $0xb8] sm:$0xff]
        %v1912 = vld [vmem:[%s1887 + $0xc0] sm:$0xff]
        %v1913 = vld [vmem:[%s1887 + $0xc8] sm:$0xff]
        %v1914 = vld [vmem:[%s1887 + $0xd0] sm:$0xff]
        %v1915 = vld [vmem:[%s1887 + $0xd8] sm:$0xff]
        %v1916 = vld [vmem:[%s1887 + $0xe0] sm:$0xff]
        %v1917 = vld [vmem:[%s1887 + $0xe8] sm:$0xff]
        %v1918 = vld [vmem:[%s1887 + $0xf0] sm:$0xff]
        %v1919 = vld [vmem:[%s1887 + $0xf8] sm:$0xff]
        %v1920 = vld [vmem:[%s1887 + $0x100] sm:$0xff]
        %v1921 = vld [vmem:[%s1887 + $0x108] sm:$0xff]
        %v1922 = vld [vmem:[%s1887 + $0x110] sm:$0xff]
        %v1923 = vld [vmem:[%s1887 + $0x118] sm:$0xff]
        %v1924 = vld [vmem:[%s1887 + $0x120] sm:$0xff]
        %v1925 = vld [vmem:[%s1887 + $0x128] sm:$0xff]
        %v1926 = vld [vmem:[%s1887 + $0x130] sm:$0xff]
        %v1927 = vld [vmem:[%s1887 + $0x138] sm:$0xff]
        %v1928 = vld [vmem:[%s1887 + $0x140] sm:$0xff]
        %v1929 = vld [vmem:[%s1887 + $0x148] sm:$0xff]
        %v1930 = vld [vmem:[%s1887 + $0x150] sm:$0xff]
        %v1931 = vld [vmem:[%s1887 + $0x158] sm:$0xff]
        %v1932 = vld [vmem:[%s1887 + $0x160] sm:$0xff]
        %v1933 = vld [vmem:[%s1887 + $0x168] sm:$0xff]
        %v1934 = vld [vmem:[%s1887 + $0x170] sm:$0xff]
        %v1935 = vld [vmem:[%s1887 + $0x178] sm:$0xff]
        %v1936 = vld [vmem:[%s1887 + $0x180] sm:$0xff]
        %v1937 = vld [vmem:[%s1887 + $0x188] sm:$0xff]
        %v1938 = vld [vmem:[%s1887 + $0x190] sm:$0xff]
        %v1939 = vld [vmem:[%s1887 + $0x198] sm:$0xff]
        %v1940 = vld [vmem:[%s1887 + $0x1a0] sm:$0xff]
        %v1941 = vld [vmem:[%s1887 + $0x1a8] sm:$0xff]
        %v1942 = vld [vmem:[%s1887 + $0x1b0] sm:$0xff]
        %v1943 = vld [vmem:[%s1887 + $0x1b8] sm:$0xff]
        %v1944 = vld [vmem:[%s1887 + $0x1c0] sm:$0xff]
        %v1945 = vld [vmem:[%s1887 + $0x1c8] sm:$0xff]
        %v1946 = vld [vmem:[%s1887 + $0x1d0] sm:$0xff]
        %v1947 = vld [vmem:[%s1887 + $0x1d8] sm:$0xff]
        %v1948 = vld [vmem:[%s1887 + $0x1e0] sm:$0xff]
        %v1949 = vld [vmem:[%s1887 + $0x1e8] sm:$0xff]
        %v1950 = vld [vmem:[%s1887 + $0x1f0] sm:$0xff]
        %v1951 = vld [vmem:[%s1887 + $0x1f8] sm:$0xff]
        %v1953 = vunpack.c.l.b16 %v1886
        %v1954 = vunpack.c.h.b16 %v1886
        %v1955 = vpack.c.b16 %v1953, %v1450
        %v1956 = vpack.c.b16 %v1954, %v1451
        %v1958 = vshrl.u32 %v1955, 16
        %v1960 = vrot.slane %v1958, 1
        %v1961 = vshll.u32 %v1955, 16
        %v1963 = vrot.slane %v1961, 2
        %v1964 = vor.u32 %v1960, %v1963
        %v1966 = vshrl.u32 %v1956, 16
        %v1968 = vrot.slane %v1966, 1
        %v1969 = vshll.u32 %v1956, 16
        %v1971 = vrot.slane %v1969, 2
        %v1972 = vor.u32 %v1968, %v1971
        %v2039 = vunpack.c.l.b16 %v1888
        %v2040 = vunpack.c.h.b16 %v1888
        %v2041 = vunpack.c.l.b16 %v1889
        %v2042 = vunpack.c.h.b16 %v1889
        %v2043 = vunpack.c.l.b16 %v1890
        %v2044 = vunpack.c.h.b16 %v1890
        %v2045 = vunpack.c.l.b16 %v1891
        %v2046 = vunpack.c.h.b16 %v1891
        %v2047 = vunpack.c.l.b16 %v1892
        %v2048 = vunpack.c.h.b16 %v1892
        %v2049 = vunpack.c.l.b16 %v1893
        %v2050 = vunpack.c.h.b16 %v1893
        %v2051 = vunpack.c.l.b16 %v1894
        %v2052 = vunpack.c.h.b16 %v1894
        %v2053 = vunpack.c.l.b16 %v1895
        %v2054 = vunpack.c.h.b16 %v1895
        %v2055 = vunpack.c.l.b16 %v1896
        %v2056 = vunpack.c.h.b16 %v1896
        %v2057 = vunpack.c.l.b16 %v1897
        %v2058 = vunpack.c.h.b16 %v1897
        %v2059 = vunpack.c.l.b16 %v1898
        %v2060 = vunpack.c.h.b16 %v1898
        %v2061 = vunpack.c.l.b16 %v1899
        %v2062 = vunpack.c.h.b16 %v1899
        %v2063 = vunpack.c.l.b16 %v1900
        %v2064 = vunpack.c.h.b16 %v1900
        %v2065 = vunpack.c.l.b16 %v1901
        %v2066 = vunpack.c.h.b16 %v1901
        %v2067 = vunpack.c.l.b16 %v1902
        %v2068 = vunpack.c.h.b16 %v1902
        %v2069 = vunpack.c.l.b16 %v1903
        %v2070 = vunpack.c.h.b16 %v1903
        %v2071 = vunpack.c.l.b16 %v1904
        %v2072 = vunpack.c.h.b16 %v1904
        %v2073 = vunpack.c.l.b16 %v1905
        %v2074 = vunpack.c.h.b16 %v1905
        %v2075 = vunpack.c.l.b16 %v1906
        %v2076 = vunpack.c.h.b16 %v1906
        %v2077 = vunpack.c.l.b16 %v1907
        %v2078 = vunpack.c.h.b16 %v1907
        %v2079 = vunpack.c.l.b16 %v1908
        %v2080 = vunpack.c.h.b16 %v1908
        %v2081 = vunpack.c.l.b16 %v1909
        %v2082 = vunpack.c.h.b16 %v1909
        %v2083 = vunpack.c.l.b16 %v1910
        %v2084 = vunpack.c.h.b16 %v1910
        %v2085 = vunpack.c.l.b16 %v1911
        %v2086 = vunpack.c.h.b16 %v1911
        %v2087 = vunpack.c.l.b16 %v1912
        %v2088 = vunpack.c.h.b16 %v1912
        %v2089 = vunpack.c.l.b16 %v1913
        %v2090 = vunpack.c.h.b16 %v1913
        %v2091 = vunpack.c.l.b16 %v1914
        %v2092 = vunpack.c.h.b16 %v1914
        %v2093 = vunpack.c.l.b16 %v1915
        %v2094 = vunpack.c.h.b16 %v1915
        %v2095 = vunpack.c.l.b16 %v1916
        %v2096 = vunpack.c.h.b16 %v1916
        %v2097 = vunpack.c.l.b16 %v1917
        %v2098 = vunpack.c.h.b16 %v1917
        %v2099 = vunpack.c.l.b16 %v1918
        %v2100 = vunpack.c.h.b16 %v1918
        %v2101 = vunpack.c.l.b16 %v1919
        %v2102 = vunpack.c.h.b16 %v1919
        %v2103 = vunpack.c.l.b16 %v1920
        %v2104 = vunpack.c.h.b16 %v1920
        %v2105 = vunpack.c.l.b16 %v1921
        %v2106 = vunpack.c.h.b16 %v1921
        %v2107 = vunpack.c.l.b16 %v1922
        %v2108 = vunpack.c.h.b16 %v1922
        %v2109 = vunpack.c.l.b16 %v1923
        %v2110 = vunpack.c.h.b16 %v1923
        %v2111 = vunpack.c.l.b16 %v1924
        %v2112 = vunpack.c.h.b16 %v1924
        %v2113 = vunpack.c.l.b16 %v1925
        %v2114 = vunpack.c.h.b16 %v1925
        %v2115 = vunpack.c.l.b16 %v1926
        %v2116 = vunpack.c.h.b16 %v1926
        %v2117 = vunpack.c.l.b16 %v1927
        %v2118 = vunpack.c.h.b16 %v1927
        %v2119 = vunpack.c.l.b16 %v1928
        %v2120 = vunpack.c.h.b16 %v1928
        %v2121 = vunpack.c.l.b16 %v1929
        %v2122 = vunpack.c.h.b16 %v1929
        %v2123 = vunpack.c.l.b16 %v1930
        %v2124 = vunpack.c.h.b16 %v1930
        %v2125 = vunpack.c.l.b16 %v1931
        %v2126 = vunpack.c.h.b16 %v1931
        %v2127 = vunpack.c.l.b16 %v1932
        %v2128 = vunpack.c.h.b16 %v1932
        %v2129 = vunpack.c.l.b16 %v1933
        %v2130 = vunpack.c.h.b16 %v1933
        %v2131 = vunpack.c.l.b16 %v1934
        %v2132 = vunpack.c.h.b16 %v1934
        %v2133 = vunpack.c.l.b16 %v1935
        %v2134 = vunpack.c.h.b16 %v1935
        %v2135 = vunpack.c.l.b16 %v1936
        %v2136 = vunpack.c.h.b16 %v1936
        %v2137 = vunpack.c.l.b16 %v1937
        %v2138 = vunpack.c.h.b16 %v1937
        %v2139 = vunpack.c.l.b16 %v1938
        %v2140 = vunpack.c.h.b16 %v1938
        %v2141 = vunpack.c.l.b16 %v1939
        %v2142 = vunpack.c.h.b16 %v1939
        %v2143 = vunpack.c.l.b16 %v1940
        %v2144 = vunpack.c.h.b16 %v1940
        %v2145 = vunpack.c.l.b16 %v1941
        %v2146 = vunpack.c.h.b16 %v1941
        %v2147 = vunpack.c.l.b16 %v1942
        %v2148 = vunpack.c.h.b16 %v1942
        %v2149 = vunpack.c.l.b16 %v1943
        %v2150 = vunpack.c.h.b16 %v1943
        %v2151 = vunpack.c.l.b16 %v1944
        %v2152 = vunpack.c.h.b16 %v1944
        %v2153 = vunpack.c.l.b16 %v1945
        %v2154 = vunpack.c.h.b16 %v1945
        %v2155 = vunpack.c.l.b16 %v1946
        %v2156 = vunpack.c.h.b16 %v1946
        %v2157 = vunpack.c.l.b16 %v1947
        %v2158 = vunpack.c.h.b16 %v1947
        %v2159 = vunpack.c.l.b16 %v1948
        %v2160 = vunpack.c.h.b16 %v1948
        %v2161 = vunpack.c.l.b16 %v1949
        %v2162 = vunpack.c.h.b16 %v1949
        %v2163 = vunpack.c.l.b16 %v1950
        %v2164 = vunpack.c.h.b16 %v1950
        %v2165 = vunpack.c.l.b16 %v1951
        %v2166 = vunpack.c.h.b16 %v1951
        %v2167 = vpack.c.b16 %v2043, %v2039
        %v2168 = vpack.c.b16 %v2044, %v2040
        %v2169 = vpack.c.b16 %v2045, %v2041
        %v2170 = vpack.c.b16 %v2046, %v2042
        %v2171 = vpack.c.b16 %v2051, %v2047
        %v2172 = vpack.c.b16 %v2052, %v2048
        %v2173 = vpack.c.b16 %v2053, %v2049
        %v2174 = vpack.c.b16 %v2054, %v2050
        %v2175 = vpack.c.b16 %v2059, %v2055
        %v2176 = vpack.c.b16 %v2060, %v2056
        %v2177 = vpack.c.b16 %v2061, %v2057
        %v2178 = vpack.c.b16 %v2062, %v2058
        %v2179 = vpack.c.b16 %v2067, %v2063
        %v2180 = vpack.c.b16 %v2068, %v2064
        %v2181 = vpack.c.b16 %v2069, %v2065
        %v2182 = vpack.c.b16 %v2070, %v2066
        %v2183 = vpack.c.b16 %v2075, %v2071
        %v2184 = vpack.c.b16 %v2076, %v2072
        %v2185 = vpack.c.b16 %v2077, %v2073
        %v2186 = vpack.c.b16 %v2078, %v2074
        %v2187 = vpack.c.b16 %v2083, %v2079
        %v2188 = vpack.c.b16 %v2084, %v2080
        %v2189 = vpack.c.b16 %v2085, %v2081
        %v2190 = vpack.c.b16 %v2086, %v2082
        %v2191 = vpack.c.b16 %v2091, %v2087
        %v2192 = vpack.c.b16 %v2092, %v2088
        %v2193 = vpack.c.b16 %v2093, %v2089
        %v2194 = vpack.c.b16 %v2094, %v2090
        %v2195 = vpack.c.b16 %v2099, %v2095
        %v2196 = vpack.c.b16 %v2100, %v2096
        %v2197 = vpack.c.b16 %v2101, %v2097
        %v2198 = vpack.c.b16 %v2102, %v2098
        %v2199 = vpack.c.b16 %v2107, %v2103
        %v2200 = vpack.c.b16 %v2108, %v2104
        %v2201 = vpack.c.b16 %v2109, %v2105
        %v2202 = vpack.c.b16 %v2110, %v2106
        %v2203 = vpack.c.b16 %v2115, %v2111
        %v2204 = vpack.c.b16 %v2116, %v2112
        %v2205 = vpack.c.b16 %v2117, %v2113
        %v2206 = vpack.c.b16 %v2118, %v2114
        %v2207 = vpack.c.b16 %v2123, %v2119
        %v2208 = vpack.c.b16 %v2124, %v2120
        %v2209 = vpack.c.b16 %v2125, %v2121
        %v2210 = vpack.c.b16 %v2126, %v2122
        %v2211 = vpack.c.b16 %v2131, %v2127
        %v2212 = vpack.c.b16 %v2132, %v2128
        %v2213 = vpack.c.b16 %v2133, %v2129
        %v2214 = vpack.c.b16 %v2134, %v2130
        %v2215 = vpack.c.b16 %v2139, %v2135
        %v2216 = vpack.c.b16 %v2140, %v2136
        %v2217 = vpack.c.b16 %v2141, %v2137
        %v2218 = vpack.c.b16 %v2142, %v2138
        %v2219 = vpack.c.b16 %v2147, %v2143
        %v2220 = vpack.c.b16 %v2148, %v2144
        %v2221 = vpack.c.b16 %v2149, %v2145
        %v2222 = vpack.c.b16 %v2150, %v2146
        %v2223 = vpack.c.b16 %v2155, %v2151
        %v2224 = vpack.c.b16 %v2156, %v2152
        %v2225 = vpack.c.b16 %v2157, %v2153
        %v2226 = vpack.c.b16 %v2158, %v2154
        %v2227 = vpack.c.b16 %v2163, %v2159
        %v2228 = vpack.c.b16 %v2164, %v2160
        %v2229 = vpack.c.b16 %v2165, %v2161
        %v2230 = vpack.c.b16 %v2166, %v2162
        %2295 = vmatpush.bf16.msra.mxu0 %v2195
        %2296 = vmatpush.bf16.msra.mxu0 %v2191
        %2297 = vmatpush.bf16.msra.mxu0 %v2187
        %2298 = vmatpush.bf16.msra.mxu0 %v2183
        %2299 = vmatpush.bf16.msra.mxu0 %v2179
        %2300 = vmatpush.bf16.msra.mxu0 %v2175
        %2301 = vmatpush.bf16.msra.mxu0 %v2171
        %2302 = vmatpush.bf16.msra.mxu0 %v2167
        %2303 = vmatmul.bf16.gmra.mxu0 %v1964
        %v2304 = vpop.f32.mrf.mxu0
        %v2305 = vadd.f32 0.0, %v2304
        %v2306 = vpop.f32.mrf.mxu0
        %2307 = vdwg.mxu0
        %2308 = vmatpush.bf16.msra.mxu0 %v2227
        %2309 = vmatpush.bf16.msra.mxu0 %v2223
        %2310 = vmatpush.bf16.msra.mxu0 %v2219
        %2311 = vmatpush.bf16.msra.mxu0 %v2215
        %2312 = vmatpush.bf16.msra.mxu0 %v2211
        %2313 = vmatpush.bf16.msra.mxu0 %v2207
        %2314 = vmatpush.bf16.msra.mxu0 %v2203
        %2315 = vmatpush.bf16.msra.mxu0 %v2199
        %2316 = vmatmul.bf16.gmra.mxu0 %v1972
        %v2317 = vpop.f32.mrf.mxu0
        %v2318 = vadd.f32 %v2305, %v2317
        %v2319 = vpop.f32.mrf.mxu0
        %2320 = vdwg.mxu0
        %2321 = vmatpush.bf16.msra.mxu0 %v2196
        %2322 = vmatpush.bf16.msra.mxu0 %v2192
        %2323 = vmatpush.bf16.msra.mxu0 %v2188
        %2324 = vmatpush.bf16.msra.mxu0 %v2184
        %2325 = vmatpush.bf16.msra.mxu0 %v2180
        %2326 = vmatpush.bf16.msra.mxu0 %v2176
        %2327 = vmatpush.bf16.msra.mxu0 %v2172
        %2328 = vmatpush.bf16.msra.mxu0 %v2168
        %2329 = vmatmul.bf16.gmra.mxu0 %v1964
        %v2330 = vpop.f32.mrf.mxu0
        %v2331 = vadd.f32 0.0, %v2330
        %v2332 = vpop.f32.mrf.mxu0
        %2333 = vdwg.mxu0
        %2334 = vmatpush.bf16.msra.mxu0 %v2228
        %2335 = vmatpush.bf16.msra.mxu0 %v2224
        %2336 = vmatpush.bf16.msra.mxu0 %v2220
        %2337 = vmatpush.bf16.msra.mxu0 %v2216
        %2338 = vmatpush.bf16.msra.mxu0 %v2212
        %2339 = vmatpush.bf16.msra.mxu0 %v2208
        %2340 = vmatpush.bf16.msra.mxu0 %v2204
        %2341 = vmatpush.bf16.msra.mxu0 %v2200
        %2342 = vmatmul.bf16.gmra.mxu0 %v1972
        %v2343 = vpop.f32.mrf.mxu0
        %v2344 = vadd.f32 %v2331, %v2343
        %v2345 = vpop.f32.mrf.mxu0
        %2346 = vdwg.mxu0
        %2347 = vmatpush.bf16.msra.mxu0 %v2197
        %2348 = vmatpush.bf16.msra.mxu0 %v2193
        %2349 = vmatpush.bf16.msra.mxu0 %v2189
        %2350 = vmatpush.bf16.msra.mxu0 %v2185
        %2351 = vmatpush.bf16.msra.mxu0 %v2181
        %2352 = vmatpush.bf16.msra.mxu0 %v2177
        %2353 = vmatpush.bf16.msra.mxu0 %v2173
        %2354 = vmatpush.bf16.msra.mxu0 %v2169
        %2355 = vmatmul.bf16.gmra.mxu0 %v1964
        %v2356 = vpop.f32.mrf.mxu0
        %v2357 = vadd.f32 0.0, %v2356
        %v2358 = vpop.f32.mrf.mxu0
        %2359 = vdwg.mxu0
        %2360 = vmatpush.bf16.msra.mxu0 %v2229
        %2361 = vmatpush.bf16.msra.mxu0 %v2225
        %2362 = vmatpush.bf16.msra.mxu0 %v2221
        %2363 = vmatpush.bf16.msra.mxu0 %v2217
        %2364 = vmatpush.bf16.msra.mxu0 %v2213
        %2365 = vmatpush.bf16.msra.mxu0 %v2209
        %2366 = vmatpush.bf16.msra.mxu0 %v2205
        %2367 = vmatpush.bf16.msra.mxu0 %v2201
        %2368 = vmatmul.bf16.gmra.mxu0 %v1972
        %v2369 = vpop.f32.mrf.mxu0
        %v2370 = vadd.f32 %v2357, %v2369
        %v2371 = vpop.f32.mrf.mxu0
        %2372 = vdwg.mxu0
        %2373 = vmatpush.bf16.msra.mxu0 %v2198
        %2374 = vmatpush.bf16.msra.mxu0 %v2194
        %2375 = vmatpush.bf16.msra.mxu0 %v2190
        %2376 = vmatpush.bf16.msra.mxu0 %v2186
        %2377 = vmatpush.bf16.msra.mxu0 %v2182
        %2378 = vmatpush.bf16.msra.mxu0 %v2178
        %2379 = vmatpush.bf16.msra.mxu0 %v2174
        %2380 = vmatpush.bf16.msra.mxu0 %v2170
        %2381 = vmatmul.bf16.gmra.mxu0 %v1964
        %v2382 = vpop.f32.mrf.mxu0
        %v2383 = vadd.f32 0.0, %v2382
        %v2384 = vpop.f32.mrf.mxu0
        %2385 = vdwg.mxu0
        %2386 = vmatpush.bf16.msra.mxu0 %v2230
        %2387 = vmatpush.bf16.msra.mxu0 %v2226
        %2388 = vmatpush.bf16.msra.mxu0 %v2222
        %2389 = vmatpush.bf16.msra.mxu0 %v2218
        %2390 = vmatpush.bf16.msra.mxu0 %v2214
        %2391 = vmatpush.bf16.msra.mxu0 %v2210
        %2392 = vmatpush.bf16.msra.mxu0 %v2206
        %2393 = vmatpush.bf16.msra.mxu0 %v2202
        %2394 = vmatmul.bf16.gmra.mxu0 %v1972
        %v2395 = vpop.f32.mrf.mxu0
        %v2396 = vadd.f32 %v2383, %v2395
        %v2397 = vpop.f32.mrf.mxu0
        %2398 = vdwg.mxu0
        %v2399 = vadd.f32 %v1882, %v2318
        %v2400 = vadd.f32 %v1883, %v2344
        %v2401 = vadd.f32 %v1884, %v2370
        %v2402 = vadd.f32 %v1885, %v2396
        %v2403 = vld [vmem:[%s353] sm:$0xcc]
        %s2404 = scalar_lea.vmem [#allocation4], 2048
        %v2405 = vld [vmem:[%s2404] sm:$0xff]
        %v2406 = vld [vmem:[%s2404 + $0x8] sm:$0xff]
        %v2407 = vld [vmem:[%s2404 + $0x10] sm:$0xff]
        %v2408 = vld [vmem:[%s2404 + $0x18] sm:$0xff]
        %v2409 = vld [vmem:[%s2404 + $0x20] sm:$0xff]
        %v2410 = vld [vmem:[%s2404 + $0x28] sm:$0xff]
        %v2411 = vld [vmem:[%s2404 + $0x30] sm:$0xff]
        %v2412 = vld [vmem:[%s2404 + $0x38] sm:$0xff]
        %v2413 = vld [vmem:[%s2404 + $0x40] sm:$0xff]
        %v2414 = vld [vmem:[%s2404 + $0x48] sm:$0xff]
        %v2415 = vld [vmem:[%s2404 + $0x50] sm:$0xff]
        %v2416 = vld [vmem:[%s2404 + $0x58] sm:$0xff]
        %v2417 = vld [vmem:[%s2404 + $0x60] sm:$0xff]
        %v2418 = vld [vmem:[%s2404 + $0x68] sm:$0xff]
        %v2419 = vld [vmem:[%s2404 + $0x70] sm:$0xff]
        %v2420 = vld [vmem:[%s2404 + $0x78] sm:$0xff]
        %v2421 = vld [vmem:[%s2404 + $0x80] sm:$0xff]
        %v2422 = vld [vmem:[%s2404 + $0x88] sm:$0xff]
        %v2423 = vld [vmem:[%s2404 + $0x90] sm:$0xff]
        %v2424 = vld [vmem:[%s2404 + $0x98] sm:$0xff]
        %v2425 = vld [vmem:[%s2404 + $0xa0] sm:$0xff]
        %v2426 = vld [vmem:[%s2404 + $0xa8] sm:$0xff]
        %v2427 = vld [vmem:[%s2404 + $0xb0] sm:$0xff]
        %v2428 = vld [vmem:[%s2404 + $0xb8] sm:$0xff]
        %v2429 = vld [vmem:[%s2404 + $0xc0] sm:$0xff]
        %v2430 = vld [vmem:[%s2404 + $0xc8] sm:$0xff]
        %v2431 = vld [vmem:[%s2404 + $0xd0] sm:$0xff]
        %v2432 = vld [vmem:[%s2404 + $0xd8] sm:$0xff]
        %v2433 = vld [vmem:[%s2404 + $0xe0] sm:$0xff]
        %v2434 = vld [vmem:[%s2404 + $0xe8] sm:$0xff]
        %v2435 = vld [vmem:[%s2404 + $0xf0] sm:$0xff]
        %v2436 = vld [vmem:[%s2404 + $0xf8] sm:$0xff]
        %v2437 = vld [vmem:[%s2404 + $0x100] sm:$0xff]
        %v2438 = vld [vmem:[%s2404 + $0x108] sm:$0xff]
        %v2439 = vld [vmem:[%s2404 + $0x110] sm:$0xff]
        %v2440 = vld [vmem:[%s2404 + $0x118] sm:$0xff]
        %v2441 = vld [vmem:[%s2404 + $0x120] sm:$0xff]
        %v2442 = vld [vmem:[%s2404 + $0x128] sm:$0xff]
        %v2443 = vld [vmem:[%s2404 + $0x130] sm:$0xff]
        %v2444 = vld [vmem:[%s2404 + $0x138] sm:$0xff]
        %v2445 = vld [vmem:[%s2404 + $0x140] sm:$0xff]
        %v2446 = vld [vmem:[%s2404 + $0x148] sm:$0xff]
        %v2447 = vld [vmem:[%s2404 + $0x150] sm:$0xff]
        %v2448 = vld [vmem:[%s2404 + $0x158] sm:$0xff]
        %v2449 = vld [vmem:[%s2404 + $0x160] sm:$0xff]
        %v2450 = vld [vmem:[%s2404 + $0x168] sm:$0xff]
        %v2451 = vld [vmem:[%s2404 + $0x170] sm:$0xff]
        %v2452 = vld [vmem:[%s2404 + $0x178] sm:$0xff]
        %v2453 = vld [vmem:[%s2404 + $0x180] sm:$0xff]
        %v2454 = vld [vmem:[%s2404 + $0x188] sm:$0xff]
        %v2455 = vld [vmem:[%s2404 + $0x190] sm:$0xff]
        %v2456 = vld [vmem:[%s2404 + $0x198] sm:$0xff]
        %v2457 = vld [vmem:[%s2404 + $0x1a0] sm:$0xff]
        %v2458 = vld [vmem:[%s2404 + $0x1a8] sm:$0xff]
        %v2459 = vld [vmem:[%s2404 + $0x1b0] sm:$0xff]
        %v2460 = vld [vmem:[%s2404 + $0x1b8] sm:$0xff]
        %v2461 = vld [vmem:[%s2404 + $0x1c0] sm:$0xff]
        %v2462 = vld [vmem:[%s2404 + $0x1c8] sm:$0xff]
        %v2463 = vld [vmem:[%s2404 + $0x1d0] sm:$0xff]
        %v2464 = vld [vmem:[%s2404 + $0x1d8] sm:$0xff]
        %v2465 = vld [vmem:[%s2404 + $0x1e0] sm:$0xff]
        %v2466 = vld [vmem:[%s2404 + $0x1e8] sm:$0xff]
        %v2467 = vld [vmem:[%s2404 + $0x1f0] sm:$0xff]
        %v2468 = vld [vmem:[%s2404 + $0x1f8] sm:$0xff]
        %v2470 = vunpack.c.l.b16 %v2403
        %v2471 = vunpack.c.h.b16 %v2403
        %v2472 = vpack.c.b16 %v1953, %v2470
        %v2473 = vpack.c.b16 %v1954, %v2471
        %v2474 = vrot.slane %v2472, 2
        %v2475 = vrot.slane %v2473, 2
        %v2542 = vunpack.c.l.b16 %v2405
        %v2543 = vunpack.c.h.b16 %v2405
        %v2544 = vunpack.c.l.b16 %v2406
        %v2545 = vunpack.c.h.b16 %v2406
        %v2546 = vunpack.c.l.b16 %v2407
        %v2547 = vunpack.c.h.b16 %v2407
        %v2548 = vunpack.c.l.b16 %v2408
        %v2549 = vunpack.c.h.b16 %v2408
        %v2550 = vunpack.c.l.b16 %v2409
        %v2551 = vunpack.c.h.b16 %v2409
        %v2552 = vunpack.c.l.b16 %v2410
        %v2553 = vunpack.c.h.b16 %v2410
        %v2554 = vunpack.c.l.b16 %v2411
        %v2555 = vunpack.c.h.b16 %v2411
        %v2556 = vunpack.c.l.b16 %v2412
        %v2557 = vunpack.c.h.b16 %v2412
        %v2558 = vunpack.c.l.b16 %v2413
        %v2559 = vunpack.c.h.b16 %v2413
        %v2560 = vunpack.c.l.b16 %v2414
        %v2561 = vunpack.c.h.b16 %v2414
        %v2562 = vunpack.c.l.b16 %v2415
        %v2563 = vunpack.c.h.b16 %v2415
        %v2564 = vunpack.c.l.b16 %v2416
        %v2565 = vunpack.c.h.b16 %v2416
        %v2566 = vunpack.c.l.b16 %v2417
        %v2567 = vunpack.c.h.b16 %v2417
        %v2568 = vunpack.c.l.b16 %v2418
        %v2569 = vunpack.c.h.b16 %v2418
        %v2570 = vunpack.c.l.b16 %v2419
        %v2571 = vunpack.c.h.b16 %v2419
        %v2572 = vunpack.c.l.b16 %v2420
        %v2573 = vunpack.c.h.b16 %v2420
        %v2574 = vunpack.c.l.b16 %v2421
        %v2575 = vunpack.c.h.b16 %v2421
        %v2576 = vunpack.c.l.b16 %v2422
        %v2577 = vunpack.c.h.b16 %v2422
        %v2578 = vunpack.c.l.b16 %v2423
        %v2579 = vunpack.c.h.b16 %v2423
        %v2580 = vunpack.c.l.b16 %v2424
        %v2581 = vunpack.c.h.b16 %v2424
        %v2582 = vunpack.c.l.b16 %v2425
        %v2583 = vunpack.c.h.b16 %v2425
        %v2584 = vunpack.c.l.b16 %v2426
        %v2585 = vunpack.c.h.b16 %v2426
        %v2586 = vunpack.c.l.b16 %v2427
        %v2587 = vunpack.c.h.b16 %v2427
        %v2588 = vunpack.c.l.b16 %v2428
        %v2589 = vunpack.c.h.b16 %v2428
        %v2590 = vunpack.c.l.b16 %v2429
        %v2591 = vunpack.c.h.b16 %v2429
        %v2592 = vunpack.c.l.b16 %v2430
        %v2593 = vunpack.c.h.b16 %v2430
        %v2594 = vunpack.c.l.b16 %v2431
        %v2595 = vunpack.c.h.b16 %v2431
        %v2596 = vunpack.c.l.b16 %v2432
        %v2597 = vunpack.c.h.b16 %v2432
        %v2598 = vunpack.c.l.b16 %v2433
        %v2599 = vunpack.c.h.b16 %v2433
        %v2600 = vunpack.c.l.b16 %v2434
        %v2601 = vunpack.c.h.b16 %v2434
        %v2602 = vunpack.c.l.b16 %v2435
        %v2603 = vunpack.c.h.b16 %v2435
        %v2604 = vunpack.c.l.b16 %v2436
        %v2605 = vunpack.c.h.b16 %v2436
        %v2606 = vunpack.c.l.b16 %v2437
        %v2607 = vunpack.c.h.b16 %v2437
        %v2608 = vunpack.c.l.b16 %v2438
        %v2609 = vunpack.c.h.b16 %v2438
        %v2610 = vunpack.c.l.b16 %v2439
        %v2611 = vunpack.c.h.b16 %v2439
        %v2612 = vunpack.c.l.b16 %v2440
        %v2613 = vunpack.c.h.b16 %v2440
        %v2614 = vunpack.c.l.b16 %v2441
        %v2615 = vunpack.c.h.b16 %v2441
        %v2616 = vunpack.c.l.b16 %v2442
        %v2617 = vunpack.c.h.b16 %v2442
        %v2618 = vunpack.c.l.b16 %v2443
        %v2619 = vunpack.c.h.b16 %v2443
        %v2620 = vunpack.c.l.b16 %v2444
        %v2621 = vunpack.c.h.b16 %v2444
        %v2622 = vunpack.c.l.b16 %v2445
        %v2623 = vunpack.c.h.b16 %v2445
        %v2624 = vunpack.c.l.b16 %v2446
        %v2625 = vunpack.c.h.b16 %v2446
        %v2626 = vunpack.c.l.b16 %v2447
        %v2627 = vunpack.c.h.b16 %v2447
        %v2628 = vunpack.c.l.b16 %v2448
        %v2629 = vunpack.c.h.b16 %v2448
        %v2630 = vunpack.c.l.b16 %v2449
        %v2631 = vunpack.c.h.b16 %v2449
        %v2632 = vunpack.c.l.b16 %v2450
        %v2633 = vunpack.c.h.b16 %v2450
        %v2634 = vunpack.c.l.b16 %v2451
        %v2635 = vunpack.c.h.b16 %v2451
        %v2636 = vunpack.c.l.b16 %v2452
        %v2637 = vunpack.c.h.b16 %v2452
        %v2638 = vunpack.c.l.b16 %v2453
        %v2639 = vunpack.c.h.b16 %v2453
        %v2640 = vunpack.c.l.b16 %v2454
        %v2641 = vunpack.c.h.b16 %v2454
        %v2642 = vunpack.c.l.b16 %v2455
        %v2643 = vunpack.c.h.b16 %v2455
        %v2644 = vunpack.c.l.b16 %v2456
        %v2645 = vunpack.c.h.b16 %v2456
        %v2646 = vunpack.c.l.b16 %v2457
        %v2647 = vunpack.c.h.b16 %v2457
        %v2648 = vunpack.c.l.b16 %v2458
        %v2649 = vunpack.c.h.b16 %v2458
        %v2650 = vunpack.c.l.b16 %v2459
        %v2651 = vunpack.c.h.b16 %v2459
        %v2652 = vunpack.c.l.b16 %v2460
        %v2653 = vunpack.c.h.b16 %v2460
        %v2654 = vunpack.c.l.b16 %v2461
        %v2655 = vunpack.c.h.b16 %v2461
        %v2656 = vunpack.c.l.b16 %v2462
        %v2657 = vunpack.c.h.b16 %v2462
        %v2658 = vunpack.c.l.b16 %v2463
        %v2659 = vunpack.c.h.b16 %v2463
        %v2660 = vunpack.c.l.b16 %v2464
        %v2661 = vunpack.c.h.b16 %v2464
        %v2662 = vunpack.c.l.b16 %v2465
        %v2663 = vunpack.c.h.b16 %v2465
        %v2664 = vunpack.c.l.b16 %v2466
        %v2665 = vunpack.c.h.b16 %v2466
        %v2666 = vunpack.c.l.b16 %v2467
        %v2667 = vunpack.c.h.b16 %v2467
        %v2668 = vunpack.c.l.b16 %v2468
        %v2669 = vunpack.c.h.b16 %v2468
        %v2670 = vpack.c.b16 %v2546, %v2542
        %v2671 = vpack.c.b16 %v2547, %v2543
        %v2672 = vpack.c.b16 %v2548, %v2544
        %v2673 = vpack.c.b16 %v2549, %v2545
        %v2674 = vpack.c.b16 %v2554, %v2550
        %v2675 = vpack.c.b16 %v2555, %v2551
        %v2676 = vpack.c.b16 %v2556, %v2552
        %v2677 = vpack.c.b16 %v2557, %v2553
        %v2678 = vpack.c.b16 %v2562, %v2558
        %v2679 = vpack.c.b16 %v2563, %v2559
        %v2680 = vpack.c.b16 %v2564, %v2560
        %v2681 = vpack.c.b16 %v2565, %v2561
        %v2682 = vpack.c.b16 %v2570, %v2566
        %v2683 = vpack.c.b16 %v2571, %v2567
        %v2684 = vpack.c.b16 %v2572, %v2568
        %v2685 = vpack.c.b16 %v2573, %v2569
        %v2686 = vpack.c.b16 %v2578, %v2574
        %v2687 = vpack.c.b16 %v2579, %v2575
        %v2688 = vpack.c.b16 %v2580, %v2576
        %v2689 = vpack.c.b16 %v2581, %v2577
        %v2690 = vpack.c.b16 %v2586, %v2582
        %v2691 = vpack.c.b16 %v2587, %v2583
        %v2692 = vpack.c.b16 %v2588, %v2584
        %v2693 = vpack.c.b16 %v2589, %v2585
        %v2694 = vpack.c.b16 %v2594, %v2590
        %v2695 = vpack.c.b16 %v2595, %v2591
        %v2696 = vpack.c.b16 %v2596, %v2592
        %v2697 = vpack.c.b16 %v2597, %v2593
        %v2698 = vpack.c.b16 %v2602, %v2598
        %v2699 = vpack.c.b16 %v2603, %v2599
        %v2700 = vpack.c.b16 %v2604, %v2600
        %v2701 = vpack.c.b16 %v2605, %v2601
        %v2702 = vpack.c.b16 %v2610, %v2606
        %v2703 = vpack.c.b16 %v2611, %v2607
        %v2704 = vpack.c.b16 %v2612, %v2608
        %v2705 = vpack.c.b16 %v2613, %v2609
        %v2706 = vpack.c.b16 %v2618, %v2614
        %v2707 = vpack.c.b16 %v2619, %v2615
        %v2708 = vpack.c.b16 %v2620, %v2616
        %v2709 = vpack.c.b16 %v2621, %v2617
        %v2710 = vpack.c.b16 %v2626, %v2622
        %v2711 = vpack.c.b16 %v2627, %v2623
        %v2712 = vpack.c.b16 %v2628, %v2624
        %v2713 = vpack.c.b16 %v2629, %v2625
        %v2714 = vpack.c.b16 %v2634, %v2630
        %v2715 = vpack.c.b16 %v2635, %v2631
        %v2716 = vpack.c.b16 %v2636, %v2632
        %v2717 = vpack.c.b16 %v2637, %v2633
        %v2718 = vpack.c.b16 %v2642, %v2638
        %v2719 = vpack.c.b16 %v2643, %v2639
        %v2720 = vpack.c.b16 %v2644, %v2640
        %v2721 = vpack.c.b16 %v2645, %v2641
        %v2722 = vpack.c.b16 %v2650, %v2646
        %v2723 = vpack.c.b16 %v2651, %v2647
        %v2724 = vpack.c.b16 %v2652, %v2648
        %v2725 = vpack.c.b16 %v2653, %v2649
        %v2726 = vpack.c.b16 %v2658, %v2654
        %v2727 = vpack.c.b16 %v2659, %v2655
        %v2728 = vpack.c.b16 %v2660, %v2656
        %v2729 = vpack.c.b16 %v2661, %v2657
        %v2730 = vpack.c.b16 %v2666, %v2662
        %v2731 = vpack.c.b16 %v2667, %v2663
        %v2732 = vpack.c.b16 %v2668, %v2664
        %v2733 = vpack.c.b16 %v2669, %v2665
        %2798 = vmatpush.bf16.msra.mxu0 %v2698
        %2799 = vmatpush.bf16.msra.mxu0 %v2694
        %2800 = vmatpush.bf16.msra.mxu0 %v2690
        %2801 = vmatpush.bf16.msra.mxu0 %v2686
        %2802 = vmatpush.bf16.msra.mxu0 %v2682
        %2803 = vmatpush.bf16.msra.mxu0 %v2678
        %2804 = vmatpush.bf16.msra.mxu0 %v2674
        %2805 = vmatpush.bf16.msra.mxu0 %v2670
        %2806 = vmatmul.bf16.gmra.mxu0 %v2474
        %v2807 = vpop.f32.mrf.mxu0
        %v2808 = vadd.f32 0.0, %v2807
        %v2809 = vpop.f32.mrf.mxu0
        %2810 = vdwg.mxu0
        %2811 = vmatpush.bf16.msra.mxu0 %v2730
        %2812 = vmatpush.bf16.msra.mxu0 %v2726
        %2813 = vmatpush.bf16.msra.mxu0 %v2722
        %2814 = vmatpush.bf16.msra.mxu0 %v2718
        %2815 = vmatpush.bf16.msra.mxu0 %v2714
        %2816 = vmatpush.bf16.msra.mxu0 %v2710
        %2817 = vmatpush.bf16.msra.mxu0 %v2706
        %2818 = vmatpush.bf16.msra.mxu0 %v2702
        %2819 = vmatmul.bf16.gmra.mxu0 %v2475
        %v2820 = vpop.f32.mrf.mxu0
        %v2821 = vadd.f32 %v2808, %v2820
        %v2822 = vpop.f32.mrf.mxu0
        %2823 = vdwg.mxu0
        %2824 = vmatpush.bf16.msra.mxu0 %v2699
        %2825 = vmatpush.bf16.msra.mxu0 %v2695
        %2826 = vmatpush.bf16.msra.mxu0 %v2691
        %2827 = vmatpush.bf16.msra.mxu0 %v2687
        %2828 = vmatpush.bf16.msra.mxu0 %v2683
        %2829 = vmatpush.bf16.msra.mxu0 %v2679
        %2830 = vmatpush.bf16.msra.mxu0 %v2675
        %2831 = vmatpush.bf16.msra.mxu0 %v2671
        %2832 = vmatmul.bf16.gmra.mxu0 %v2474
        %v2833 = vpop.f32.mrf.mxu0
        %v2834 = vadd.f32 0.0, %v2833
        %v2835 = vpop.f32.mrf.mxu0
        %2836 = vdwg.mxu0
        %2837 = vmatpush.bf16.msra.mxu0 %v2731
        %2838 = vmatpush.bf16.msra.mxu0 %v2727
        %2839 = vmatpush.bf16.msra.mxu0 %v2723
        %2840 = vmatpush.bf16.msra.mxu0 %v2719
        %2841 = vmatpush.bf16.msra.mxu0 %v2715
        %2842 = vmatpush.bf16.msra.mxu0 %v2711
        %2843 = vmatpush.bf16.msra.mxu0 %v2707
        %2844 = vmatpush.bf16.msra.mxu0 %v2703
        %2845 = vmatmul.bf16.gmra.mxu0 %v2475
        %v2846 = vpop.f32.mrf.mxu0
        %v2847 = vadd.f32 %v2834, %v2846
        %v2848 = vpop.f32.mrf.mxu0
        %2849 = vdwg.mxu0
        %2850 = vmatpush.bf16.msra.mxu0 %v2700
        %2851 = vmatpush.bf16.msra.mxu0 %v2696
        %2852 = vmatpush.bf16.msra.mxu0 %v2692
        %2853 = vmatpush.bf16.msra.mxu0 %v2688
        %2854 = vmatpush.bf16.msra.mxu0 %v2684
        %2855 = vmatpush.bf16.msra.mxu0 %v2680
        %2856 = vmatpush.bf16.msra.mxu0 %v2676
        %2857 = vmatpush.bf16.msra.mxu0 %v2672
        %2858 = vmatmul.bf16.gmra.mxu0 %v2474
        %v2859 = vpop.f32.mrf.mxu0
        %v2860 = vadd.f32 0.0, %v2859
        %v2861 = vpop.f32.mrf.mxu0
        %2862 = vdwg.mxu0
        %2863 = vmatpush.bf16.msra.mxu0 %v2732
        %2864 = vmatpush.bf16.msra.mxu0 %v2728
        %2865 = vmatpush.bf16.msra.mxu0 %v2724
        %2866 = vmatpush.bf16.msra.mxu0 %v2720
        %2867 = vmatpush.bf16.msra.mxu0 %v2716
        %2868 = vmatpush.bf16.msra.mxu0 %v2712
        %2869 = vmatpush.bf16.msra.mxu0 %v2708
        %2870 = vmatpush.bf16.msra.mxu0 %v2704
        %2871 = vmatmul.bf16.gmra.mxu0 %v2475
        %v2872 = vpop.f32.mrf.mxu0
        %v2873 = vadd.f32 %v2860, %v2872
        %v2874 = vpop.f32.mrf.mxu0
        %2875 = vdwg.mxu0
        %2876 = vmatpush.bf16.msra.mxu0 %v2701
        %2877 = vmatpush.bf16.msra.mxu0 %v2697
        %2878 = vmatpush.bf16.msra.mxu0 %v2693
        %2879 = vmatpush.bf16.msra.mxu0 %v2689
        %2880 = vmatpush.bf16.msra.mxu0 %v2685
        %2881 = vmatpush.bf16.msra.mxu0 %v2681
        %2882 = vmatpush.bf16.msra.mxu0 %v2677
        %2883 = vmatpush.bf16.msra.mxu0 %v2673
        %2884 = vmatmul.bf16.gmra.mxu0 %v2474
        %v2885 = vpop.f32.mrf.mxu0
        %v2886 = vadd.f32 0.0, %v2885
        %v2887 = vpop.f32.mrf.mxu0
        %2888 = vdwg.mxu0
        %2889 = vmatpush.bf16.msra.mxu0 %v2733
        %2890 = vmatpush.bf16.msra.mxu0 %v2729
        %2891 = vmatpush.bf16.msra.mxu0 %v2725
        %2892 = vmatpush.bf16.msra.mxu0 %v2721
        %2893 = vmatpush.bf16.msra.mxu0 %v2717
        %2894 = vmatpush.bf16.msra.mxu0 %v2713
        %2895 = vmatpush.bf16.msra.mxu0 %v2709
        %2896 = vmatpush.bf16.msra.mxu0 %v2705
        %2897 = vmatmul.bf16.gmra.mxu0 %v2475
        %v2898 = vpop.f32.mrf.mxu0
        %v2899 = vadd.f32 %v2886, %v2898
        %v2900 = vpop.f32.mrf.mxu0
        %2901 = vdwg.mxu0
        %v2902 = vadd.f32 %v2399, %v2821
        %v2903 = vadd.f32 %v2400, %v2847
        %v2904 = vadd.f32 %v2401, %v2873
        %v2905 = vadd.f32 %v2402, %v2899
        %v2906 = vrot.slane %v2902, 4
        %v2907 = vadd.f32 %v2902, %v2906
        %v2908 = vrot.slane %v2907, 2
        %v2909 = vadd.f32 %v2907, %v2908
        %v2910 = vrot.slane %v2909, 1
        %v2911 = vadd.f32 %v2909, %v2910
        %v2912 = vrot.slane %v2903, 4
        %v2913 = vadd.f32 %v2903, %v2912
        %v2914 = vrot.slane %v2913, 2
        %v2915 = vadd.f32 %v2913, %v2914
        %v2916 = vrot.slane %v2915, 1
        %v2917 = vadd.f32 %v2915, %v2916
        %v2918 = vrot.slane %v2904, 4
        %v2919 = vadd.f32 %v2904, %v2918
        %v2920 = vrot.slane %v2919, 2
        %v2921 = vadd.f32 %v2919, %v2920
        %v2922 = vrot.slane %v2921, 1
        %v2923 = vadd.f32 %v2921, %v2922
        %v2924 = vrot.slane %v2905, 4
        %v2925 = vadd.f32 %v2905, %v2924
        %v2926 = vrot.slane %v2925, 2
        %v2927 = vadd.f32 %v2925, %v2926
        %v2928 = vrot.slane %v2927, 1
        %v2929 = vadd.f32 %v2927, %v2928
        %v2930 = vld [vmem:[%s5] sm:$0xff]
        %v2931 = vld [vmem:[%s5 + $0x8] sm:$0xff]
        %v2932 = vld [vmem:[%s5 + $0x10] sm:$0xff]
        %v2933 = vld [vmem:[%s5 + $0x18] sm:$0xff]
        %v2934 = vld [vmem:[%s5 + $0x20] sm:$0xff]
        %v2935 = vld [vmem:[%s5 + $0x28] sm:$0xff]
        %v2936 = vld [vmem:[%s5 + $0x30] sm:$0xff]
        %v2937 = vld [vmem:[%s5 + $0x38] sm:$0xff]
        %v2938 = vld [vmem:[%s5 + $0x40] sm:$0xff]
        %v2939 = vld [vmem:[%s5 + $0x48] sm:$0xff]
        %v2940 = vld [vmem:[%s5 + $0x50] sm:$0xff]
        %v2941 = vld [vmem:[%s5 + $0x58] sm:$0xff]
        %v2942 = vld [vmem:[%s5 + $0x60] sm:$0xff]
        %v2943 = vld [vmem:[%s5 + $0x68] sm:$0xff]
        %v2944 = vld [vmem:[%s5 + $0x70] sm:$0xff]
        %v2945 = vld [vmem:[%s5 + $0x78] sm:$0xff]
        %v2946 = vld [vmem:[%s5 + $0x80] sm:$0xff]
        %v2947 = vld [vmem:[%s5 + $0x88] sm:$0xff]
        %v2948 = vld [vmem:[%s5 + $0x90] sm:$0xff]
        %v2949 = vld [vmem:[%s5 + $0x98] sm:$0xff]
        %v2950 = vld [vmem:[%s5 + $0xa0] sm:$0xff]
        %v2951 = vld [vmem:[%s5 + $0xa8] sm:$0xff]
        %v2952 = vld [vmem:[%s5 + $0xb0] sm:$0xff]
        %v2953 = vld [vmem:[%s5 + $0xb8] sm:$0xff]
        %v2954 = vld [vmem:[%s5 + $0xc0] sm:$0xff]
        %v2955 = vld [vmem:[%s5 + $0xc8] sm:$0xff]
        %v2956 = vld [vmem:[%s5 + $0xd0] sm:$0xff]
        %v2957 = vld [vmem:[%s5 + $0xd8] sm:$0xff]
        %v2958 = vld [vmem:[%s5 + $0xe0] sm:$0xff]
        %v2959 = vld [vmem:[%s5 + $0xe8] sm:$0xff]
        %v2960 = vld [vmem:[%s5 + $0xf0] sm:$0xff]
        %v2961 = vld [vmem:[%s5 + $0xf8] sm:$0xff]
        %v2962 = vld [vmem:[%s5 + $0x100] sm:$0xff]
        %v2963 = vld [vmem:[%s5 + $0x108] sm:$0xff]
        %v2964 = vld [vmem:[%s5 + $0x110] sm:$0xff]
        %v2965 = vld [vmem:[%s5 + $0x118] sm:$0xff]
        %v2966 = vld [vmem:[%s5 + $0x120] sm:$0xff]
        %v2967 = vld [vmem:[%s5 + $0x128] sm:$0xff]
        %v2968 = vld [vmem:[%s5 + $0x130] sm:$0xff]
        %v2969 = vld [vmem:[%s5 + $0x138] sm:$0xff]
        %v2970 = vld [vmem:[%s5 + $0x140] sm:$0xff]
        %v2971 = vld [vmem:[%s5 + $0x148] sm:$0xff]
        %v2972 = vld [vmem:[%s5 + $0x150] sm:$0xff]
        %v2973 = vld [vmem:[%s5 + $0x158] sm:$0xff]
        %v2974 = vld [vmem:[%s5 + $0x160] sm:$0xff]
        %v2975 = vld [vmem:[%s5 + $0x168] sm:$0xff]
        %v2976 = vld [vmem:[%s5 + $0x170] sm:$0xff]
        %v2977 = vld [vmem:[%s5 + $0x178] sm:$0xff]
        %v2978 = vld [vmem:[%s5 + $0x180] sm:$0xff]
        %v2979 = vld [vmem:[%s5 + $0x188] sm:$0xff]
        %v2980 = vld [vmem:[%s5 + $0x190] sm:$0xff]
        %v2981 = vld [vmem:[%s5 + $0x198] sm:$0xff]
        %v2982 = vld [vmem:[%s5 + $0x1a0] sm:$0xff]
        %v2983 = vld [vmem:[%s5 + $0x1a8] sm:$0xff]
        %v2984 = vld [vmem:[%s5 + $0x1b0] sm:$0xff]
        %v2985 = vld [vmem:[%s5 + $0x1b8] sm:$0xff]
        %v2986 = vld [vmem:[%s5 + $0x1c0] sm:$0xff]
        %v2987 = vld [vmem:[%s5 + $0x1c8] sm:$0xff]
        %v2988 = vld [vmem:[%s5 + $0x1d0] sm:$0xff]
        %v2989 = vld [vmem:[%s5 + $0x1d8] sm:$0xff]
        %v2990 = vld [vmem:[%s5 + $0x1e0] sm:$0xff]
        %v2991 = vld [vmem:[%s5 + $0x1e8] sm:$0xff]
        %v2992 = vld [vmem:[%s5 + $0x1f0] sm:$0xff]
        %v2993 = vld [vmem:[%s5 + $0x1f8] sm:$0xff]
        %2994 = vmatpush.msra.mxu0 %v2945
        %2995 = vmatpush.msra.mxu0 %v2944
        %2996 = vmatpush.msra.mxu0 %v2943
        %2997 = vmatpush.msra.mxu0 %v2942
        %2998 = vmatpush.msra.mxu0 %v2941
        %2999 = vmatpush.msra.mxu0 %v2940
        %3000 = vmatpush.msra.mxu0 %v2939
        %3001 = vmatpush.msra.mxu0 %v2938
        %3002 = vmatpush.msra.mxu0 %v2937
        %3003 = vmatpush.msra.mxu0 %v2936
        %3004 = vmatpush.msra.mxu0 %v2935
        %3005 = vmatpush.msra.mxu0 %v2934
        %3006 = vmatpush.msra.mxu0 %v2933
        %3007 = vmatpush.msra.mxu0 %v2932
        %3008 = vmatpush.msra.mxu0 %v2931
        %3009 = vmatpush.msra.mxu0 %v2930
        %3010 = vmatmul.f32.gmra.mxu0 %v2911
        %v3011 = vpop.f32.mrf.mxu0
        %v3012 = vadd.f32 0.0, %v3011
        %3013 = vdwg.mxu0
        %3014 = vmatpush.msra.mxu0 %v2961
        %3015 = vmatpush.msra.mxu0 %v2960
        %3016 = vmatpush.msra.mxu0 %v2959
        %3017 = vmatpush.msra.mxu0 %v2958
        %3018 = vmatpush.msra.mxu0 %v2957
        %3019 = vmatpush.msra.mxu0 %v2956
        %3020 = vmatpush.msra.mxu0 %v2955
        %3021 = vmatpush.msra.mxu0 %v2954
        %3022 = vmatpush.msra.mxu0 %v2953
        %3023 = vmatpush.msra.mxu0 %v2952
        %3024 = vmatpush.msra.mxu0 %v2951
        %3025 = vmatpush.msra.mxu0 %v2950
        %3026 = vmatpush.msra.mxu0 %v2949
        %3027 = vmatpush.msra.mxu0 %v2948
        %3028 = vmatpush.msra.mxu0 %v2947
        %3029 = vmatpush.msra.mxu0 %v2946
        %3030 = vmatmul.f32.gmra.mxu0 %v2917
        %v3031 = vpop.f32.mrf.mxu0
        %v3032 = vadd.f32 %v3012, %v3031
        %3033 = vdwg.mxu0
        %3034 = vmatpush.msra.mxu0 %v2977
        %3035 = vmatpush.msra.mxu0 %v2976
        %3036 = vmatpush.msra.mxu0 %v2975
        %3037 = vmatpush.msra.mxu0 %v2974
        %3038 = vmatpush.msra.mxu0 %v2973
        %3039 = vmatpush.msra.mxu0 %v2972
        %3040 = vmatpush.msra.mxu0 %v2971
        %3041 = vmatpush.msra.mxu0 %v2970
        %3042 = vmatpush.msra.mxu0 %v2969
        %3043 = vmatpush.msra.mxu0 %v2968
        %3044 = vmatpush.msra.mxu0 %v2967
        %3045 = vmatpush.msra.mxu0 %v2966
        %3046 = vmatpush.msra.mxu0 %v2965
        %3047 = vmatpush.msra.mxu0 %v2964
        %3048 = vmatpush.msra.mxu0 %v2963
        %3049 = vmatpush.msra.mxu0 %v2962
        %3050 = vmatmul.f32.gmra.mxu0 %v2923
        %v3051 = vpop.f32.mrf.mxu0
        %v3052 = vadd.f32 %v3032, %v3051
        %3053 = vdwg.mxu0
        %3054 = vmatpush.msra.mxu0 %v2993
        %3055 = vmatpush.msra.mxu0 %v2992
        %3056 = vmatpush.msra.mxu0 %v2991
        %3057 = vmatpush.msra.mxu0 %v2990
        %3058 = vmatpush.msra.mxu0 %v2989
        %3059 = vmatpush.msra.mxu0 %v2988
        %3060 = vmatpush.msra.mxu0 %v2987
        %3061 = vmatpush.msra.mxu0 %v2986
        %3062 = vmatpush.msra.mxu0 %v2985
        %3063 = vmatpush.msra.mxu0 %v2984
        %3064 = vmatpush.msra.mxu0 %v2983
        %3065 = vmatpush.msra.mxu0 %v2982
        %3066 = vmatpush.msra.mxu0 %v2981
        %3067 = vmatpush.msra.mxu0 %v2980
        %3068 = vmatpush.msra.mxu0 %v2979
        %3069 = vmatpush.msra.mxu0 %v2978
        %3070 = vmatmul.f32.gmra.mxu0 %v2929
        %v3071 = vpop.f32.mrf.mxu0
        %v3072 = vadd.f32 %v3052, %v3071
        %3073 = vdwg.mxu0
        %v3074 = vld [vmem:[#allocation12] sm:$0xff]
        %v3075 = vld [vmem:[#allocation12 + $0x8] sm:$0xff]
        %v3076 = vld [vmem:[#allocation12 + $0x10] sm:$0xff]
        %v3077 = vld [vmem:[#allocation12 + $0x18] sm:$0xff]
        %vm3078 = vcmask 64512
        %v3080 = vsel %vm3078, %v3072, 0
        %3082 = vmatpush.msra.mxu0 0.0
        %3083 = vmatpush.msra.mxu0 0.0
        %3084 = vmatpush.msra.mxu0 0.0
        %3085 = vmatpush.msra.mxu0 0.0
        %3086 = vmatpush.msra.mxu0 0.0
        %3087 = vmatpush.msra.mxu0 0.0
        %3088 = vmatpush.msra.mxu0 0.0
        %3089 = vmatpush.msra.mxu0 0.0
        %3090 = vmatpush.msra.mxu0 0.0
        %3091 = vmatpush.msra.mxu0 0.0
        %3092 = vmatpush.msra.mxu0 0.0
        %3093 = vmatpush.msra.mxu0 0.0
        %3094 = vmatpush.msra.mxu0 0.0
        %3095 = vmatpush.msra.mxu0 0.0
        %3096 = vmatpush.msra.mxu0 0.0
        %3097 = vmatpush.msra.mxu0 %v3074
        %3098 = vmatmul.f32.gmra.mxu0 %v3080
        %v3099 = vpop.f32.mrf.mxu0
        %v3100 = vadd.f32 0.0, %v3099
        %3101 = vdwg.mxu0
        %3102 = vmatpush.msra.mxu0 0.0
        %3103 = vmatpush.msra.mxu0 0.0
        %3104 = vmatpush.msra.mxu0 0.0
        %3105 = vmatpush.msra.mxu0 0.0
        %3106 = vmatpush.msra.mxu0 0.0
        %3107 = vmatpush.msra.mxu0 0.0
        %3108 = vmatpush.msra.mxu0 0.0
        %3109 = vmatpush.msra.mxu0 0.0
        %3110 = vmatpush.msra.mxu0 0.0
        %3111 = vmatpush.msra.mxu0 0.0
        %3112 = vmatpush.msra.mxu0 0.0
        %3113 = vmatpush.msra.mxu0 0.0
        %3114 = vmatpush.msra.mxu0 0.0
        %3115 = vmatpush.msra.mxu0 0.0
        %3116 = vmatpush.msra.mxu0 0.0
        %3117 = vmatpush.msra.mxu0 %v3075
        %3118 = vmatmul.f32.gmra.mxu0 %v3080
        %v3119 = vpop.f32.mrf.mxu0
        %v3120 = vadd.f32 0.0, %v3119
        %3121 = vdwg.mxu0
        %3122 = vmatpush.msra.mxu0 0.0
        %3123 = vmatpush.msra.mxu0 0.0
        %3124 = vmatpush.msra.mxu0 0.0
        %3125 = vmatpush.msra.mxu0 0.0
        %3126 = vmatpush.msra.mxu0 0.0
        %3127 = vmatpush.msra.mxu0 0.0
        %3128 = vmatpush.msra.mxu0 0.0
        %3129 = vmatpush.msra.mxu0 0.0
        %3130 = vmatpush.msra.mxu0 0.0
        %3131 = vmatpush.msra.mxu0 0.0
        %3132 = vmatpush.msra.mxu0 0.0
        %3133 = vmatpush.msra.mxu0 0.0
        %3134 = vmatpush.msra.mxu0 0.0
        %3135 = vmatpush.msra.mxu0 0.0
        %3136 = vmatpush.msra.mxu0 0.0
        %3137 = vmatpush.msra.mxu0 %v3076
        %3138 = vmatmul.f32.gmra.mxu0 %v3080
        %v3139 = vpop.f32.mrf.mxu0
        %v3140 = vadd.f32 0.0, %v3139
        %3141 = vdwg.mxu0
        %3142 = vmatpush.msra.mxu0 0.0
        %3143 = vmatpush.msra.mxu0 0.0
        %3144 = vmatpush.msra.mxu0 0.0
        %3145 = vmatpush.msra.mxu0 0.0
        %3146 = vmatpush.msra.mxu0 0.0
        %3147 = vmatpush.msra.mxu0 0.0
        %3148 = vmatpush.msra.mxu0 0.0
        %3149 = vmatpush.msra.mxu0 0.0
        %3150 = vmatpush.msra.mxu0 0.0
        %3151 = vmatpush.msra.mxu0 0.0
        %3152 = vmatpush.msra.mxu0 0.0
        %3153 = vmatpush.msra.mxu0 0.0
        %3154 = vmatpush.msra.mxu0 0.0
        %3155 = vmatpush.msra.mxu0 0.0
        %3156 = vmatpush.msra.mxu0 0.0
        %3157 = vmatpush.msra.mxu0 %v3077
        %3158 = vmatmul.f32.gmra.mxu0 %v3080
        %v3159 = vpop.f32.mrf.mxu0
        %v3160 = vadd.f32 0.0, %v3159
        %3161 = vdwg.mxu0
        %v3162 = vperm.slane %v3100, 0
        %v3163 = vperm.slane %v3120, 0
        %v3164 = vperm.slane %v3140, 0
        %v3165 = vperm.slane %v3160, 0
        %v3166 = vsub.f32 %v2902, %v3162
        %v3167 = vsub.f32 %v2903, %v3163
        %v3168 = vsub.f32 %v2904, %v3164
        %v3169 = vsub.f32 %v2905, %v3165
        %v3170 = vmul.f32 %v3166, %v3166
        %v3171 = vmul.f32 %v3167, %v3167
        %v3172 = vmul.f32 %v3168, %v3168
        %v3173 = vmul.f32 %v3169, %v3169
        %v3174 = vrot.slane %v3170, 4
        %v3175 = vadd.f32 %v3170, %v3174
        %v3176 = vrot.slane %v3175, 2
        %v3177 = vadd.f32 %v3175, %v3176
        %v3178 = vrot.slane %v3177, 1
        %v3179 = vadd.f32 %v3177, %v3178
        %v3180 = vrot.slane %v3171, 4
        %v3181 = vadd.f32 %v3171, %v3180
        %v3182 = vrot.slane %v3181, 2
        %v3183 = vadd.f32 %v3181, %v3182
        %v3184 = vrot.slane %v3183, 1
        %v3185 = vadd.f32 %v3183, %v3184
        %v3186 = vrot.slane %v3172, 4
        %v3187 = vadd.f32 %v3172, %v3186
        %v3188 = vrot.slane %v3187, 2
        %v3189 = vadd.f32 %v3187, %v3188
        %v3190 = vrot.slane %v3189, 1
        %v3191 = vadd.f32 %v3189, %v3190
        %v3192 = vrot.slane %v3173, 4
        %v3193 = vadd.f32 %v3173, %v3192
        %v3194 = vrot.slane %v3193, 2
        %v3195 = vadd.f32 %v3193, %v3194
        %v3196 = vrot.slane %v3195, 1
        %v3197 = vadd.f32 %v3195, %v3196
        %3198 = vmatpush.msra.mxu0 %v2945
        %3199 = vmatpush.msra.mxu0 %v2944
        %3200 = vmatpush.msra.mxu0 %v2943
        %3201 = vmatpush.msra.mxu0 %v2942
        %3202 = vmatpush.msra.mxu0 %v2941
        %3203 = vmatpush.msra.mxu0 %v2940
        %3204 = vmatpush.msra.mxu0 %v2939
        %3205 = vmatpush.msra.mxu0 %v2938
        %3206 = vmatpush.msra.mxu0 %v2937
        %3207 = vmatpush.msra.mxu0 %v2936
        %3208 = vmatpush.msra.mxu0 %v2935
        %3209 = vmatpush.msra.mxu0 %v2934
        %3210 = vmatpush.msra.mxu0 %v2933
        %3211 = vmatpush.msra.mxu0 %v2932
        %3212 = vmatpush.msra.mxu0 %v2931
        %3213 = vmatpush.msra.mxu0 %v2930
        %3214 = vmatmul.f32.gmra.mxu0 %v3179
        %v3215 = vpop.f32.mrf.mxu0
        %v3216 = vadd.f32 0.0, %v3215
        %3217 = vdwg.mxu0
        %3218 = vmatpush.msra.mxu0 %v2961
        %3219 = vmatpush.msra.mxu0 %v2960
        %3220 = vmatpush.msra.mxu0 %v2959
        %3221 = vmatpush.msra.mxu0 %v2958
        %3222 = vmatpush.msra.mxu0 %v2957
        %3223 = vmatpush.msra.mxu0 %v2956
        %3224 = vmatpush.msra.mxu0 %v2955
        %3225 = vmatpush.msra.mxu0 %v2954
        %3226 = vmatpush.msra.mxu0 %v2953
        %3227 = vmatpush.msra.mxu0 %v2952
        %3228 = vmatpush.msra.mxu0 %v2951
        %3229 = vmatpush.msra.mxu0 %v2950
        %3230 = vmatpush.msra.mxu0 %v2949
        %3231 = vmatpush.msra.mxu0 %v2948
        %3232 = vmatpush.msra.mxu0 %v2947
        %3233 = vmatpush.msra.mxu0 %v2946
        %3234 = vmatmul.f32.gmra.mxu0 %v3185
        %v3235 = vpop.f32.mrf.mxu0
        %v3236 = vadd.f32 %v3216, %v3235
        %3237 = vdwg.mxu0
        %3238 = vmatpush.msra.mxu0 %v2977
        %3239 = vmatpush.msra.mxu0 %v2976
        %3240 = vmatpush.msra.mxu0 %v2975
        %3241 = vmatpush.msra.mxu0 %v2974
        %3242 = vmatpush.msra.mxu0 %v2973
        %3243 = vmatpush.msra.mxu0 %v2972
        %3244 = vmatpush.msra.mxu0 %v2971
        %3245 = vmatpush.msra.mxu0 %v2970
        %3246 = vmatpush.msra.mxu0 %v2969
        %3247 = vmatpush.msra.mxu0 %v2968
        %3248 = vmatpush.msra.mxu0 %v2967
        %3249 = vmatpush.msra.mxu0 %v2966
        %3250 = vmatpush.msra.mxu0 %v2965
        %3251 = vmatpush.msra.mxu0 %v2964
        %3252 = vmatpush.msra.mxu0 %v2963
        %3253 = vmatpush.msra.mxu0 %v2962
        %3254 = vmatmul.f32.gmra.mxu0 %v3191
        %v3255 = vpop.f32.mrf.mxu0
        %v3256 = vadd.f32 %v3236, %v3255
        %3257 = vdwg.mxu0
        %3258 = vmatpush.msra.mxu0 %v2993
        %3259 = vmatpush.msra.mxu0 %v2992
        %3260 = vmatpush.msra.mxu0 %v2991
        %3261 = vmatpush.msra.mxu0 %v2990
        %3262 = vmatpush.msra.mxu0 %v2989
        %3263 = vmatpush.msra.mxu0 %v2988
        %3264 = vmatpush.msra.mxu0 %v2987
        %3265 = vmatpush.msra.mxu0 %v2986
        %3266 = vmatpush.msra.mxu0 %v2985
        %3267 = vmatpush.msra.mxu0 %v2984
        %3268 = vmatpush.msra.mxu0 %v2983
        %3269 = vmatpush.msra.mxu0 %v2982
        %3270 = vmatpush.msra.mxu0 %v2981
        %3271 = vmatpush.msra.mxu0 %v2980
        %3272 = vmatpush.msra.mxu0 %v2979
        %3273 = vmatpush.msra.mxu0 %v2978
        %3274 = vmatmul.f32.gmra.mxu0 %v3197
        %v3275 = vpop.f32.mrf.mxu0
        %v3276 = vadd.f32 %v3256, %v3275
        %3277 = vdwg.mxu0
        %v3279 = vsel %vm3078, %v3276, 0
        %3281 = vmatpush.msra.mxu0 0.0
        %3282 = vmatpush.msra.mxu0 0.0
        %3283 = vmatpush.msra.mxu0 0.0
        %3284 = vmatpush.msra.mxu0 0.0
        %3285 = vmatpush.msra.mxu0 0.0
        %3286 = vmatpush.msra.mxu0 0.0
        %3287 = vmatpush.msra.mxu0 0.0
        %3288 = vmatpush.msra.mxu0 0.0
        %3289 = vmatpush.msra.mxu0 0.0
        %3290 = vmatpush.msra.mxu0 0.0
        %3291 = vmatpush.msra.mxu0 0.0
        %3292 = vmatpush.msra.mxu0 0.0
        %3293 = vmatpush.msra.mxu0 0.0
        %3294 = vmatpush.msra.mxu0 0.0
        %3295 = vmatpush.msra.mxu0 0.0
        %3296 = vmatpush.msra.mxu0 %v3074
        %3297 = vmatmul.f32.gmra.mxu0 %v3279
        %v3298 = vpop.f32.mrf.mxu0
        %v3299 = vadd.f32 1e-05, %v3298
        %3300 = vdwg.mxu0
        %3301 = vmatpush.msra.mxu0 0.0
        %3302 = vmatpush.msra.mxu0 0.0
        %3303 = vmatpush.msra.mxu0 0.0
        %3304 = vmatpush.msra.mxu0 0.0
        %3305 = vmatpush.msra.mxu0 0.0
        %3306 = vmatpush.msra.mxu0 0.0
        %3307 = vmatpush.msra.mxu0 0.0
        %3308 = vmatpush.msra.mxu0 0.0
        %3309 = vmatpush.msra.mxu0 0.0
        %3310 = vmatpush.msra.mxu0 0.0
        %3311 = vmatpush.msra.mxu0 0.0
        %3312 = vmatpush.msra.mxu0 0.0
        %3313 = vmatpush.msra.mxu0 0.0
        %3314 = vmatpush.msra.mxu0 0.0
        %3315 = vmatpush.msra.mxu0 0.0
        %3316 = vmatpush.msra.mxu0 %v3075
        %3317 = vmatmul.f32.gmra.mxu0 %v3279
        %v3318 = vpop.f32.mrf.mxu0
        %v3319 = vadd.f32 1e-05, %v3318
        %3320 = vdwg.mxu0
        %3321 = vmatpush.msra.mxu0 0.0
        %3322 = vmatpush.msra.mxu0 0.0
        %3323 = vmatpush.msra.mxu0 0.0
        %3324 = vmatpush.msra.mxu0 0.0
        %3325 = vmatpush.msra.mxu0 0.0
        %3326 = vmatpush.msra.mxu0 0.0
        %3327 = vmatpush.msra.mxu0 0.0
        %3328 = vmatpush.msra.mxu0 0.0
        %3329 = vmatpush.msra.mxu0 0.0
        %3330 = vmatpush.msra.mxu0 0.0
        %3331 = vmatpush.msra.mxu0 0.0
        %3332 = vmatpush.msra.mxu0 0.0
        %3333 = vmatpush.msra.mxu0 0.0
        %3334 = vmatpush.msra.mxu0 0.0
        %3335 = vmatpush.msra.mxu0 0.0
        %3336 = vmatpush.msra.mxu0 %v3076
        %3337 = vmatmul.f32.gmra.mxu0 %v3279
        %v3338 = vpop.f32.mrf.mxu0
        %v3339 = vadd.f32 1e-05, %v3338
        %3340 = vdwg.mxu0
        %3341 = vmatpush.msra.mxu0 0.0
        %3342 = vmatpush.msra.mxu0 0.0
        %3343 = vmatpush.msra.mxu0 0.0
        %3344 = vmatpush.msra.mxu0 0.0
        %3345 = vmatpush.msra.mxu0 0.0
        %3346 = vmatpush.msra.mxu0 0.0
        %3347 = vmatpush.msra.mxu0 0.0
        %3348 = vmatpush.msra.mxu0 0.0
        %3349 = vmatpush.msra.mxu0 0.0
        %3350 = vmatpush.msra.mxu0 0.0
        %3351 = vmatpush.msra.mxu0 0.0
        %3352 = vmatpush.msra.mxu0 0.0
        %3353 = vmatpush.msra.mxu0 0.0
        %3354 = vmatpush.msra.mxu0 0.0
        %3355 = vmatpush.msra.mxu0 0.0
        %3356 = vmatpush.msra.mxu0 %v3077
        %3357 = vmatmul.f32.gmra.mxu0 %v3279
        %v3358 = vpop.f32.mrf.mxu0
        %v3359 = vadd.f32 1e-05, %v3358
        %3360 = vdwg.mxu0
        %v3361 = vrsqrt.pop %v3299
        %v3362 = vmul.f32 %v3361, %v3299
        %v3363 = vmul.f32 %v3362, %v3361
        %v3364 = vmul.f32 0.5, %v3363
        %v3365 = vsub.f32 1.5, %v3364
        %v3366 = vmul.f32 %v3361, %v3365
        %vm3367 = vweird.f32 %v3299
        %vm3368 = vweird.f32 %v3361
        %vm3369 = vmor %vm3367, %vm3368
        %v3370 = vsel %vm3369, %v3361, %v3366
        %v3371 = vrsqrt.pop %v3319
        %v3372 = vmul.f32 %v3371, %v3319
        %v3373 = vmul.f32 %v3372, %v3371
        %v3374 = vmul.f32 0.5, %v3373
        %v3375 = vsub.f32 1.5, %v3374
        %v3376 = vmul.f32 %v3371, %v3375
        %vm3377 = vweird.f32 %v3319
        %vm3378 = vweird.f32 %v3371
        %vm3379 = vmor %vm3377, %vm3378
        %v3380 = vsel %vm3379, %v3371, %v3376
        %v3381 = vrsqrt.pop %v3339
        %v3382 = vmul.f32 %v3381, %v3339
        %v3383 = vmul.f32 %v3382, %v3381
        %v3384 = vmul.f32 0.5, %v3383
        %v3385 = vsub.f32 1.5, %v3384
        %v3386 = vmul.f32 %v3381, %v3385
        %vm3387 = vweird.f32 %v3339
        %vm3388 = vweird.f32 %v3381
        %vm3389 = vmor %vm3387, %vm3388
        %v3390 = vsel %vm3389, %v3381, %v3386
        %v3391 = vrsqrt.pop %v3359
        %v3392 = vmul.f32 %v3391, %v3359
        %v3393 = vmul.f32 %v3392, %v3391
        %v3394 = vmul.f32 0.5, %v3393
        %v3395 = vsub.f32 1.5, %v3394
        %v3396 = vmul.f32 %v3391, %v3395
        %vm3397 = vweird.f32 %v3359
        %vm3398 = vweird.f32 %v3391
        %vm3399 = vmor %vm3397, %vm3398
        %v3400 = vsel %vm3399, %v3391, %v3396
        %v3401 = vperm.slane %v3370, 0
        %v3402 = vperm.slane %v3380, 0
        %v3403 = vperm.slane %v3390, 0
        %v3404 = vperm.slane %v3400, 0
        %v3405 = vmul.f32 %v3166, %v3401
        %v3406 = vmul.f32 %v3167, %v3402
        %v3407 = vmul.f32 %v3168, %v3403
        %v3408 = vmul.f32 %v3169, %v3404
        %v3409 = vmax.f32 %v3405, 0.0
        %v3410 = vmax.f32 %v3406, 0.0
        %v3411 = vmax.f32 %v3407, 0.0
        %v3412 = vmax.f32 %v3408, 0.0
        %v3413 = vlaneseq
        %vm3414 = vcmp.ge.s32.totalorder %v3413, 0
        %vm3415 = vcmp.lt.s32.totalorder %v3413, 512
        %vm3416 = vmand %vm3414, %vm3415
        %3417 = vst.msk [vmem:[#allocation2] ss:$8 sm:$0xf] %vm3416, 0.0
        %3418 = vst.msk [vmem:[#allocation2] ss:$8 sm:$0x0] %vm3416, 0.0
        %s3419 = scalar_lea.vmem [#allocation2], 33
        %3420 = vst.msk [vmem:[%s3419] ss:$8 sm:$0xf] %vm3416, 0.0
        %3421 = vst.msk [vmem:[%s3419] ss:$8 sm:$0x0] %vm3416, 0.0
        %v3426 = vrot.slane %v3409, 7
        %v3427 = vrot.slane %v3410, 7
        %v3428 = vrot.slane %v3411, 7
        %v3429 = vrot.slane %v3412, 7
        %3434 = vst [vmem:[#allocation2] sm:$0xfe] %v3426
        %3435 = vst [vmem:[#allocation2 + $0x8] sm:$0xfe] %v3427
        %3436 = vst [vmem:[#allocation2 + $0x10] sm:$0xfe] %v3428
        %3437 = vst [vmem:[#allocation2 + $0x18] sm:$0xfe] %v3429
        %3438 = vst [vmem:[#allocation2 + $0x20] sm:$0x1] %v3426
        %3439 = vst [vmem:[#allocation2 + $0x28] sm:$0x1] %v3427
        %3440 = vst [vmem:[#allocation2 + $0x30] sm:$0x1] %v3428
        %3441 = vst [vmem:[#allocation2 + $0x38] sm:$0x1] %v3429
        %v3442 = vld [vmem:[#allocation10] sm:$0xf]
        %v3443 = vld [vmem:[#allocation2] sm:$0xff]
        %v3444 = vld [vmem:[#allocation2 + $0x8] sm:$0xff]
        %v3445 = vld [vmem:[#allocation2 + $0x10] sm:$0xff]
        %v3446 = vld [vmem:[#allocation2 + $0x18] sm:$0xff]
        %v3447 = vpack.c.bf16 %v3443, %v3443
        %v3448 = vpack.c.bf16 %v3444, %v3444
        %v3449 = vpack.c.bf16 %v3445, %v3445
        %v3450 = vpack.c.bf16 %v3446, %v3446
        %v3451 = vld [vmem:[#allocation7] sm:$0xff]
        %v3452 = vld [vmem:[#allocation7 + $0x8] sm:$0xff]
        %v3453 = vld [vmem:[#allocation7 + $0x10] sm:$0xff]
        %v3454 = vld [vmem:[#allocation7 + $0x18] sm:$0xff]
        %v3455 = vld [vmem:[#allocation7 + $0x20] sm:$0xff]
        %v3456 = vld [vmem:[#allocation7 + $0x28] sm:$0xff]
        %v3457 = vld [vmem:[#allocation7 + $0x30] sm:$0xff]
        %v3458 = vld [vmem:[#allocation7 + $0x38] sm:$0xff]
        %v3459 = vld [vmem:[#allocation7 + $0x40] sm:$0xff]
        %v3460 = vld [vmem:[#allocation7 + $0x48] sm:$0xff]
        %v3461 = vld [vmem:[#allocation7 + $0x50] sm:$0xff]
        %v3462 = vld [vmem:[#allocation7 + $0x58] sm:$0xff]
        %v3463 = vld [vmem:[#allocation7 + $0x60] sm:$0xff]
        %v3464 = vld [vmem:[#allocation7 + $0x68] sm:$0xff]
        %v3465 = vld [vmem:[#allocation7 + $0x70] sm:$0xff]
        %v3466 = vld [vmem:[#allocation7 + $0x78] sm:$0xff]
        %v3467 = vld [vmem:[#allocation7 + $0x80] sm:$0xff]
        %v3468 = vld [vmem:[#allocation7 + $0x88] sm:$0xff]
        %v3469 = vld [vmem:[#allocation7 + $0x90] sm:$0xff]
        %v3470 = vld [vmem:[#allocation7 + $0x98] sm:$0xff]
        %v3471 = vld [vmem:[#allocation7 + $0xa0] sm:$0xff]
        %v3472 = vld [vmem:[#allocation7 + $0xa8] sm:$0xff]
        %v3473 = vld [vmem:[#allocation7 + $0xb0] sm:$0xff]
        %v3474 = vld [vmem:[#allocation7 + $0xb8] sm:$0xff]
        %v3475 = vld [vmem:[#allocation7 + $0xc0] sm:$0xff]
        %v3476 = vld [vmem:[#allocation7 + $0xc8] sm:$0xff]
        %v3477 = vld [vmem:[#allocation7 + $0xd0] sm:$0xff]
        %v3478 = vld [vmem:[#allocation7 + $0xd8] sm:$0xff]
        %v3479 = vld [vmem:[#allocation7 + $0xe0] sm:$0xff]
        %v3480 = vld [vmem:[#allocation7 + $0xe8] sm:$0xff]
        %v3481 = vld [vmem:[#allocation7 + $0xf0] sm:$0xff]
        %v3482 = vld [vmem:[#allocation7 + $0xf8] sm:$0xff]
        %v3483 = vld [vmem:[#allocation7 + $0x100] sm:$0xff]
        %v3484 = vld [vmem:[#allocation7 + $0x108] sm:$0xff]
        %v3485 = vld [vmem:[#allocation7 + $0x110] sm:$0xff]
        %v3486 = vld [vmem:[#allocation7 + $0x118] sm:$0xff]
        %v3487 = vld [vmem:[#allocation7 + $0x120] sm:$0xff]
        %v3488 = vld [vmem:[#allocation7 + $0x128] sm:$0xff]
        %v3489 = vld [vmem:[#allocation7 + $0x130] sm:$0xff]
        %v3490 = vld [vmem:[#allocation7 + $0x138] sm:$0xff]
        %v3491 = vld [vmem:[#allocation7 + $0x140] sm:$0xff]
        %v3492 = vld [vmem:[#allocation7 + $0x148] sm:$0xff]
        %v3493 = vld [vmem:[#allocation7 + $0x150] sm:$0xff]
        %v3494 = vld [vmem:[#allocation7 + $0x158] sm:$0xff]
        %v3495 = vld [vmem:[#allocation7 + $0x160] sm:$0xff]
        %v3496 = vld [vmem:[#allocation7 + $0x168] sm:$0xff]
        %v3497 = vld [vmem:[#allocation7 + $0x170] sm:$0xff]
        %v3498 = vld [vmem:[#allocation7 + $0x178] sm:$0xff]
        %v3499 = vld [vmem:[#allocation7 + $0x180] sm:$0xff]
        %v3500 = vld [vmem:[#allocation7 + $0x188] sm:$0xff]
        %v3501 = vld [vmem:[#allocation7 + $0x190] sm:$0xff]
        %v3502 = vld [vmem:[#allocation7 + $0x198] sm:$0xff]
        %v3503 = vld [vmem:[#allocation7 + $0x1a0] sm:$0xff]
        %v3504 = vld [vmem:[#allocation7 + $0x1a8] sm:$0xff]
        %v3505 = vld [vmem:[#allocation7 + $0x1b0] sm:$0xff]
        %v3506 = vld [vmem:[#allocation7 + $0x1b8] sm:$0xff]
        %v3507 = vld [vmem:[#allocation7 + $0x1c0] sm:$0xff]
        %v3508 = vld [vmem:[#allocation7 + $0x1c8] sm:$0xff]
        %v3509 = vld [vmem:[#allocation7 + $0x1d0] sm:$0xff]
        %v3510 = vld [vmem:[#allocation7 + $0x1d8] sm:$0xff]
        %v3511 = vld [vmem:[#allocation7 + $0x1e0] sm:$0xff]
        %v3512 = vld [vmem:[#allocation7 + $0x1e8] sm:$0xff]
        %v3513 = vld [vmem:[#allocation7 + $0x1f0] sm:$0xff]
        %v3514 = vld [vmem:[#allocation7 + $0x1f8] sm:$0xff]
        %v3515 = vld [vmem:[#allocation7 + $0x200] sm:$0xff]
        %v3516 = vld [vmem:[#allocation7 + $0x208] sm:$0xff]
        %v3517 = vld [vmem:[#allocation7 + $0x210] sm:$0xff]
        %v3518 = vld [vmem:[#allocation7 + $0x218] sm:$0xff]
        %v3519 = vld [vmem:[#allocation7 + $0x220] sm:$0xff]
        %v3520 = vld [vmem:[#allocation7 + $0x228] sm:$0xff]
        %v3521 = vld [vmem:[#allocation7 + $0x230] sm:$0xff]
        %v3522 = vld [vmem:[#allocation7 + $0x238] sm:$0xff]
        %v3523 = vld [vmem:[#allocation7 + $0x240] sm:$0xff]
        %v3524 = vld [vmem:[#allocation7 + $0x248] sm:$0xff]
        %v3525 = vld [vmem:[#allocation7 + $0x250] sm:$0xff]
        %v3526 = vld [vmem:[#allocation7 + $0x258] sm:$0xff]
        %v3527 = vld [vmem:[#allocation7 + $0x260] sm:$0xff]
        %v3528 = vld [vmem:[#allocation7 + $0x268] sm:$0xff]
        %v3529 = vld [vmem:[#allocation7 + $0x270] sm:$0xff]
        %v3530 = vld [vmem:[#allocation7 + $0x278] sm:$0xff]
        %v3531 = vld [vmem:[#allocation7 + $0x280] sm:$0xff]
        %v3532 = vld [vmem:[#allocation7 + $0x288] sm:$0xff]
        %v3533 = vld [vmem:[#allocation7 + $0x290] sm:$0xff]
        %v3534 = vld [vmem:[#allocation7 + $0x298] sm:$0xff]
        %v3535 = vld [vmem:[#allocation7 + $0x2a0] sm:$0xff]
        %v3536 = vld [vmem:[#allocation7 + $0x2a8] sm:$0xff]
        %v3537 = vld [vmem:[#allocation7 + $0x2b0] sm:$0xff]
        %v3538 = vld [vmem:[#allocation7 + $0x2b8] sm:$0xff]
        %v3539 = vld [vmem:[#allocation7 + $0x2c0] sm:$0xff]
        %v3540 = vld [vmem:[#allocation7 + $0x2c8] sm:$0xff]
        %v3541 = vld [vmem:[#allocation7 + $0x2d0] sm:$0xff]
        %v3542 = vld [vmem:[#allocation7 + $0x2d8] sm:$0xff]
        %v3543 = vld [vmem:[#allocation7 + $0x2e0] sm:$0xff]
        %v3544 = vld [vmem:[#allocation7 + $0x2e8] sm:$0xff]
        %v3545 = vld [vmem:[#allocation7 + $0x2f0] sm:$0xff]
        %v3546 = vld [vmem:[#allocation7 + $0x2f8] sm:$0xff]
        %v3547 = vld [vmem:[#allocation7 + $0x300] sm:$0xff]
        %v3548 = vld [vmem:[#allocation7 + $0x308] sm:$0xff]
        %v3549 = vld [vmem:[#allocation7 + $0x310] sm:$0xff]
        %v3550 = vld [vmem:[#allocation7 + $0x318] sm:$0xff]
        %v3551 = vld [vmem:[#allocation7 + $0x320] sm:$0xff]
        %v3552 = vld [vmem:[#allocation7 + $0x328] sm:$0xff]
        %v3553 = vld [vmem:[#allocation7 + $0x330] sm:$0xff]
        %v3554 = vld [vmem:[#allocation7 + $0x338] sm:$0xff]
        %v3555 = vld [vmem:[#allocation7 + $0x340] sm:$0xff]
        %v3556 = vld [vmem:[#allocation7 + $0x348] sm:$0xff]
        %v3557 = vld [vmem:[#allocation7 + $0x350] sm:$0xff]
        %v3558 = vld [vmem:[#allocation7 + $0x358] sm:$0xff]
        %v3559 = vld [vmem:[#allocation7 + $0x360] sm:$0xff]
        %v3560 = vld [vmem:[#allocation7 + $0x368] sm:$0xff]
        %v3561 = vld [vmem:[#allocation7 + $0x370] sm:$0xff]
        %v3562 = vld [vmem:[#allocation7 + $0x378] sm:$0xff]
        %v3563 = vld [vmem:[#allocation7 + $0x380] sm:$0xff]
        %v3564 = vld [vmem:[#allocation7 + $0x388] sm:$0xff]
        %v3565 = vld [vmem:[#allocation7 + $0x390] sm:$0xff]
        %v3566 = vld [vmem:[#allocation7 + $0x398] sm:$0xff]
        %v3567 = vld [vmem:[#allocation7 + $0x3a0] sm:$0xff]
        %v3568 = vld [vmem:[#allocation7 + $0x3a8] sm:$0xff]
        %v3569 = vld [vmem:[#allocation7 + $0x3b0] sm:$0xff]
        %v3570 = vld [vmem:[#allocation7 + $0x3b8] sm:$0xff]
        %v3571 = vld [vmem:[#allocation7 + $0x3c0] sm:$0xff]
        %v3572 = vld [vmem:[#allocation7 + $0x3c8] sm:$0xff]
        %v3573 = vld [vmem:[#allocation7 + $0x3d0] sm:$0xff]
        %v3574 = vld [vmem:[#allocation7 + $0x3d8] sm:$0xff]
        %v3575 = vld [vmem:[#allocation7 + $0x3e0] sm:$0xff]
        %v3576 = vld [vmem:[#allocation7 + $0x3e8] sm:$0xff]
        %v3577 = vld [vmem:[#allocation7 + $0x3f0] sm:$0xff]
        %v3578 = vld [vmem:[#allocation7 + $0x3f8] sm:$0xff]
        %v3707 = vunpack.c.l.b16 %v3451
        %v3708 = vunpack.c.h.b16 %v3451
        %v3709 = vunpack.c.l.b16 %v3452
        %v3710 = vunpack.c.h.b16 %v3452
        %v3711 = vunpack.c.l.b16 %v3453
        %v3712 = vunpack.c.h.b16 %v3453
        %v3713 = vunpack.c.l.b16 %v3454
        %v3714 = vunpack.c.h.b16 %v3454
        %v3715 = vunpack.c.l.b16 %v3455
        %v3716 = vunpack.c.h.b16 %v3455
        %v3717 = vunpack.c.l.b16 %v3456
        %v3718 = vunpack.c.h.b16 %v3456
        %v3719 = vunpack.c.l.b16 %v3457
        %v3720 = vunpack.c.h.b16 %v3457
        %v3721 = vunpack.c.l.b16 %v3458
        %v3722 = vunpack.c.h.b16 %v3458
        %v3723 = vunpack.c.l.b16 %v3459
        %v3724 = vunpack.c.h.b16 %v3459
        %v3725 = vunpack.c.l.b16 %v3460
        %v3726 = vunpack.c.h.b16 %v3460
        %v3727 = vunpack.c.l.b16 %v3461
        %v3728 = vunpack.c.h.b16 %v3461
        %v3729 = vunpack.c.l.b16 %v3462
        %v3730 = vunpack.c.h.b16 %v3462
        %v3731 = vunpack.c.l.b16 %v3463
        %v3732 = vunpack.c.h.b16 %v3463
        %v3733 = vunpack.c.l.b16 %v3464
        %v3734 = vunpack.c.h.b16 %v3464
        %v3735 = vunpack.c.l.b16 %v3465
        %v3736 = vunpack.c.h.b16 %v3465
        %v3737 = vunpack.c.l.b16 %v3466
        %v3738 = vunpack.c.h.b16 %v3466
        %v3739 = vunpack.c.l.b16 %v3467
        %v3740 = vunpack.c.h.b16 %v3467
        %v3741 = vunpack.c.l.b16 %v3468
        %v3742 = vunpack.c.h.b16 %v3468
        %v3743 = vunpack.c.l.b16 %v3469
        %v3744 = vunpack.c.h.b16 %v3469
        %v3745 = vunpack.c.l.b16 %v3470
        %v3746 = vunpack.c.h.b16 %v3470
        %v3747 = vunpack.c.l.b16 %v3471
        %v3748 = vunpack.c.h.b16 %v3471
        %v3749 = vunpack.c.l.b16 %v3472
        %v3750 = vunpack.c.h.b16 %v3472
        %v3751 = vunpack.c.l.b16 %v3473
        %v3752 = vunpack.c.h.b16 %v3473
        %v3753 = vunpack.c.l.b16 %v3474
        %v3754 = vunpack.c.h.b16 %v3474
        %v3755 = vunpack.c.l.b16 %v3475
        %v3756 = vunpack.c.h.b16 %v3475
        %v3757 = vunpack.c.l.b16 %v3476
        %v3758 = vunpack.c.h.b16 %v3476
        %v3759 = vunpack.c.l.b16 %v3477
        %v3760 = vunpack.c.h.b16 %v3477
        %v3761 = vunpack.c.l.b16 %v3478
        %v3762 = vunpack.c.h.b16 %v3478
        %v3763 = vunpack.c.l.b16 %v3479
        %v3764 = vunpack.c.h.b16 %v3479
        %v3765 = vunpack.c.l.b16 %v3480
        %v3766 = vunpack.c.h.b16 %v3480
        %v3767 = vunpack.c.l.b16 %v3481
        %v3768 = vunpack.c.h.b16 %v3481
        %v3769 = vunpack.c.l.b16 %v3482
        %v3770 = vunpack.c.h.b16 %v3482
        %v3771 = vunpack.c.l.b16 %v3483
        %v3772 = vunpack.c.h.b16 %v3483
        %v3773 = vunpack.c.l.b16 %v3484
        %v3774 = vunpack.c.h.b16 %v3484
        %v3775 = vunpack.c.l.b16 %v3485
        %v3776 = vunpack.c.h.b16 %v3485
        %v3777 = vunpack.c.l.b16 %v3486
        %v3778 = vunpack.c.h.b16 %v3486
        %v3779 = vunpack.c.l.b16 %v3487
        %v3780 = vunpack.c.h.b16 %v3487
        %v3781 = vunpack.c.l.b16 %v3488
        %v3782 = vunpack.c.h.b16 %v3488
        %v3783 = vunpack.c.l.b16 %v3489
        %v3784 = vunpack.c.h.b16 %v3489
        %v3785 = vunpack.c.l.b16 %v3490
        %v3786 = vunpack.c.h.b16 %v3490
        %v3787 = vunpack.c.l.b16 %v3491
        %v3788 = vunpack.c.h.b16 %v3491
        %v3789 = vunpack.c.l.b16 %v3492
        %v3790 = vunpack.c.h.b16 %v3492
        %v3791 = vunpack.c.l.b16 %v3493
        %v3792 = vunpack.c.h.b16 %v3493
        %v3793 = vunpack.c.l.b16 %v3494
        %v3794 = vunpack.c.h.b16 %v3494
        %v3795 = vunpack.c.l.b16 %v3495
        %v3796 = vunpack.c.h.b16 %v3495
        %v3797 = vunpack.c.l.b16 %v3496
        %v3798 = vunpack.c.h.b16 %v3496
        %v3799 = vunpack.c.l.b16 %v3497
        %v3800 = vunpack.c.h.b16 %v3497
        %v3801 = vunpack.c.l.b16 %v3498
        %v3802 = vunpack.c.h.b16 %v3498
        %v3803 = vunpack.c.l.b16 %v3499
        %v3804 = vunpack.c.h.b16 %v3499
        %v3805 = vunpack.c.l.b16 %v3500
        %v3806 = vunpack.c.h.b16 %v3500
        %v3807 = vunpack.c.l.b16 %v3501
        %v3808 = vunpack.c.h.b16 %v3501
        %v3809 = vunpack.c.l.b16 %v3502
        %v3810 = vunpack.c.h.b16 %v3502
        %v3811 = vunpack.c.l.b16 %v3503
        %v3812 = vunpack.c.h.b16 %v3503
        %v3813 = vunpack.c.l.b16 %v3504
        %v3814 = vunpack.c.h.b16 %v3504
        %v3815 = vunpack.c.l.b16 %v3505
        %v3816 = vunpack.c.h.b16 %v3505
        %v3817 = vunpack.c.l.b16 %v3506
        %v3818 = vunpack.c.h.b16 %v3506
        %v3819 = vunpack.c.l.b16 %v3507
        %v3820 = vunpack.c.h.b16 %v3507
        %v3821 = vunpack.c.l.b16 %v3508
        %v3822 = vunpack.c.h.b16 %v3508
        %v3823 = vunpack.c.l.b16 %v3509
        %v3824 = vunpack.c.h.b16 %v3509
        %v3825 = vunpack.c.l.b16 %v3510
        %v3826 = vunpack.c.h.b16 %v3510
        %v3827 = vunpack.c.l.b16 %v3511
        %v3828 = vunpack.c.h.b16 %v3511
        %v3829 = vunpack.c.l.b16 %v3512
        %v3830 = vunpack.c.h.b16 %v3512
        %v3831 = vunpack.c.l.b16 %v3513
        %v3832 = vunpack.c.h.b16 %v3513
        %v3833 = vunpack.c.l.b16 %v3514
        %v3834 = vunpack.c.h.b16 %v3514
        %v3835 = vunpack.c.l.b16 %v3515
        %v3836 = vunpack.c.h.b16 %v3515
        %v3837 = vunpack.c.l.b16 %v3516
        %v3838 = vunpack.c.h.b16 %v3516
        %v3839 = vunpack.c.l.b16 %v3517
        %v3840 = vunpack.c.h.b16 %v3517
        %v3841 = vunpack.c.l.b16 %v3518
        %v3842 = vunpack.c.h.b16 %v3518
        %v3843 = vunpack.c.l.b16 %v3519
        %v3844 = vunpack.c.h.b16 %v3519
        %v3845 = vunpack.c.l.b16 %v3520
        %v3846 = vunpack.c.h.b16 %v3520
        %v3847 = vunpack.c.l.b16 %v3521
        %v3848 = vunpack.c.h.b16 %v3521
        %v3849 = vunpack.c.l.b16 %v3522
        %v3850 = vunpack.c.h.b16 %v3522
        %v3851 = vunpack.c.l.b16 %v3523
        %v3852 = vunpack.c.h.b16 %v3523
        %v3853 = vunpack.c.l.b16 %v3524
        %v3854 = vunpack.c.h.b16 %v3524
        %v3855 = vunpack.c.l.b16 %v3525
        %v3856 = vunpack.c.h.b16 %v3525
        %v3857 = vunpack.c.l.b16 %v3526
        %v3858 = vunpack.c.h.b16 %v3526
        %v3859 = vunpack.c.l.b16 %v3527
        %v3860 = vunpack.c.h.b16 %v3527
        %v3861 = vunpack.c.l.b16 %v3528
        %v3862 = vunpack.c.h.b16 %v3528
        %v3863 = vunpack.c.l.b16 %v3529
        %v3864 = vunpack.c.h.b16 %v3529
        %v3865 = vunpack.c.l.b16 %v3530
        %v3866 = vunpack.c.h.b16 %v3530
        %v3867 = vunpack.c.l.b16 %v3531
        %v3868 = vunpack.c.h.b16 %v3531
        %v3869 = vunpack.c.l.b16 %v3532
        %v3870 = vunpack.c.h.b16 %v3532
        %v3871 = vunpack.c.l.b16 %v3533
        %v3872 = vunpack.c.h.b16 %v3533
        %v3873 = vunpack.c.l.b16 %v3534
        %v3874 = vunpack.c.h.b16 %v3534
        %v3875 = vunpack.c.l.b16 %v3535
        %v3876 = vunpack.c.h.b16 %v3535
        %v3877 = vunpack.c.l.b16 %v3536
        %v3878 = vunpack.c.h.b16 %v3536
        %v3879 = vunpack.c.l.b16 %v3537
        %v3880 = vunpack.c.h.b16 %v3537
        %v3881 = vunpack.c.l.b16 %v3538
        %v3882 = vunpack.c.h.b16 %v3538
        %v3883 = vunpack.c.l.b16 %v3539
        %v3884 = vunpack.c.h.b16 %v3539
        %v3885 = vunpack.c.l.b16 %v3540
        %v3886 = vunpack.c.h.b16 %v3540
        %v3887 = vunpack.c.l.b16 %v3541
        %v3888 = vunpack.c.h.b16 %v3541
        %v3889 = vunpack.c.l.b16 %v3542
        %v3890 = vunpack.c.h.b16 %v3542
        %v3891 = vunpack.c.l.b16 %v3543
        %v3892 = vunpack.c.h.b16 %v3543
        %v3893 = vunpack.c.l.b16 %v3544
        %v3894 = vunpack.c.h.b16 %v3544
        %v3895 = vunpack.c.l.b16 %v3545
        %v3896 = vunpack.c.h.b16 %v3545
        %v3897 = vunpack.c.l.b16 %v3546
        %v3898 = vunpack.c.h.b16 %v3546
        %v3899 = vunpack.c.l.b16 %v3547
        %v3900 = vunpack.c.h.b16 %v3547
        %v3901 = vunpack.c.l.b16 %v3548
        %v3902 = vunpack.c.h.b16 %v3548
        %v3903 = vunpack.c.l.b16 %v3549
        %v3904 = vunpack.c.h.b16 %v3549
        %v3905 = vunpack.c.l.b16 %v3550
        %v3906 = vunpack.c.h.b16 %v3550
        %v3907 = vunpack.c.l.b16 %v3551
        %v3908 = vunpack.c.h.b16 %v3551
        %v3909 = vunpack.c.l.b16 %v3552
        %v3910 = vunpack.c.h.b16 %v3552
        %v3911 = vunpack.c.l.b16 %v3553
        %v3912 = vunpack.c.h.b16 %v3553
        %v3913 = vunpack.c.l.b16 %v3554
        %v3914 = vunpack.c.h.b16 %v3554
        %v3915 = vunpack.c.l.b16 %v3555
        %v3916 = vunpack.c.h.b16 %v3555
        %v3917 = vunpack.c.l.b16 %v3556
        %v3918 = vunpack.c.h.b16 %v3556
        %v3919 = vunpack.c.l.b16 %v3557
        %v3920 = vunpack.c.h.b16 %v3557
        %v3921 = vunpack.c.l.b16 %v3558
        %v3922 = vunpack.c.h.b16 %v3558
        %v3923 = vunpack.c.l.b16 %v3559
        %v3924 = vunpack.c.h.b16 %v3559
        %v3925 = vunpack.c.l.b16 %v3560
        %v3926 = vunpack.c.h.b16 %v3560
        %v3927 = vunpack.c.l.b16 %v3561
        %v3928 = vunpack.c.h.b16 %v3561
        %v3929 = vunpack.c.l.b16 %v3562
        %v3930 = vunpack.c.h.b16 %v3562
        %v3931 = vunpack.c.l.b16 %v3563
        %v3932 = vunpack.c.h.b16 %v3563
        %v3933 = vunpack.c.l.b16 %v3564
        %v3934 = vunpack.c.h.b16 %v3564
        %v3935 = vunpack.c.l.b16 %v3565
        %v3936 = vunpack.c.h.b16 %v3565
        %v3937 = vunpack.c.l.b16 %v3566
        %v3938 = vunpack.c.h.b16 %v3566
        %v3939 = vunpack.c.l.b16 %v3567
        %v3940 = vunpack.c.h.b16 %v3567
        %v3941 = vunpack.c.l.b16 %v3568
        %v3942 = vunpack.c.h.b16 %v3568
        %v3943 = vunpack.c.l.b16 %v3569
        %v3944 = vunpack.c.h.b16 %v3569
        %v3945 = vunpack.c.l.b16 %v3570
        %v3946 = vunpack.c.h.b16 %v3570
        %v3947 = vunpack.c.l.b16 %v3571
        %v3948 = vunpack.c.h.b16 %v3571
        %v3949 = vunpack.c.l.b16 %v3572
        %v3950 = vunpack.c.h.b16 %v3572
        %v3951 = vunpack.c.l.b16 %v3573
        %v3952 = vunpack.c.h.b16 %v3573
        %v3953 = vunpack.c.l.b16 %v3574
        %v3954 = vunpack.c.h.b16 %v3574
        %v3955 = vunpack.c.l.b16 %v3575
        %v3956 = vunpack.c.h.b16 %v3575
        %v3957 = vunpack.c.l.b16 %v3576
        %v3958 = vunpack.c.h.b16 %v3576
        %v3959 = vunpack.c.l.b16 %v3577
        %v3960 = vunpack.c.h.b16 %v3577
        %v3961 = vunpack.c.l.b16 %v3578
        %v3962 = vunpack.c.h.b16 %v3578
        %v3963 = vpack.c.b16 %v3711, %v3707
        %v3964 = vpack.c.b16 %v3712, %v3708
        %v3965 = vpack.c.b16 %v3713, %v3709
        %v3966 = vpack.c.b16 %v3714, %v3710
        %v3967 = vpack.c.b16 %v3719, %v3715
        %v3968 = vpack.c.b16 %v3720, %v3716
        %v3969 = vpack.c.b16 %v3721, %v3717
        %v3970 = vpack.c.b16 %v3722, %v3718
        %v3971 = vpack.c.b16 %v3727, %v3723
        %v3972 = vpack.c.b16 %v3728, %v3724
        %v3973 = vpack.c.b16 %v3729, %v3725
        %v3974 = vpack.c.b16 %v3730, %v3726
        %v3975 = vpack.c.b16 %v3735, %v3731
        %v3976 = vpack.c.b16 %v3736, %v3732
        %v3977 = vpack.c.b16 %v3737, %v3733
        %v3978 = vpack.c.b16 %v3738, %v3734
        %v3979 = vpack.c.b16 %v3743, %v3739
        %v3980 = vpack.c.b16 %v3744, %v3740
        %v3981 = vpack.c.b16 %v3745, %v3741
        %v3982 = vpack.c.b16 %v3746, %v3742
        %v3983 = vpack.c.b16 %v3751, %v3747
        %v3984 = vpack.c.b16 %v3752, %v3748
        %v3985 = vpack.c.b16 %v3753, %v3749
        %v3986 = vpack.c.b16 %v3754, %v3750
        %v3987 = vpack.c.b16 %v3759, %v3755
        %v3988 = vpack.c.b16 %v3760, %v3756
        %v3989 = vpack.c.b16 %v3761, %v3757
        %v3990 = vpack.c.b16 %v3762, %v3758
        %v3991 = vpack.c.b16 %v3767, %v3763
        %v3992 = vpack.c.b16 %v3768, %v3764
        %v3993 = vpack.c.b16 %v3769, %v3765
        %v3994 = vpack.c.b16 %v3770, %v3766
        %v3995 = vpack.c.b16 %v3775, %v3771
        %v3996 = vpack.c.b16 %v3776, %v3772
        %v3997 = vpack.c.b16 %v3777, %v3773
        %v3998 = vpack.c.b16 %v3778, %v3774
        %v3999 = vpack.c.b16 %v3783, %v3779
        %v4000 = vpack.c.b16 %v3784, %v3780
        %v4001 = vpack.c.b16 %v3785, %v3781
        %v4002 = vpack.c.b16 %v3786, %v3782
        %v4003 = vpack.c.b16 %v3791, %v3787
        %v4004 = vpack.c.b16 %v3792, %v3788
        %v4005 = vpack.c.b16 %v3793, %v3789
        %v4006 = vpack.c.b16 %v3794, %v3790
        %v4007 = vpack.c.b16 %v3799, %v3795
        %v4008 = vpack.c.b16 %v3800, %v3796
        %v4009 = vpack.c.b16 %v3801, %v3797
        %v4010 = vpack.c.b16 %v3802, %v3798
        %v4011 = vpack.c.b16 %v3807, %v3803
        %v4012 = vpack.c.b16 %v3808, %v3804
        %v4013 = vpack.c.b16 %v3809, %v3805
        %v4014 = vpack.c.b16 %v3810, %v3806
        %v4015 = vpack.c.b16 %v3815, %v3811
        %v4016 = vpack.c.b16 %v3816, %v3812
        %v4017 = vpack.c.b16 %v3817, %v3813
        %v4018 = vpack.c.b16 %v3818, %v3814
        %v4019 = vpack.c.b16 %v3823, %v3819
        %v4020 = vpack.c.b16 %v3824, %v3820
        %v4021 = vpack.c.b16 %v3825, %v3821
        %v4022 = vpack.c.b16 %v3826, %v3822
        %v4023 = vpack.c.b16 %v3831, %v3827
        %v4024 = vpack.c.b16 %v3832, %v3828
        %v4025 = vpack.c.b16 %v3833, %v3829
        %v4026 = vpack.c.b16 %v3834, %v3830
        %v4027 = vpack.c.b16 %v3839, %v3835
        %v4028 = vpack.c.b16 %v3840, %v3836
        %v4029 = vpack.c.b16 %v3841, %v3837
        %v4030 = vpack.c.b16 %v3842, %v3838
        %v4031 = vpack.c.b16 %v3847, %v3843
        %v4032 = vpack.c.b16 %v3848, %v3844
        %v4033 = vpack.c.b16 %v3849, %v3845
        %v4034 = vpack.c.b16 %v3850, %v3846
        %v4035 = vpack.c.b16 %v3855, %v3851
        %v4036 = vpack.c.b16 %v3856, %v3852
        %v4037 = vpack.c.b16 %v3857, %v3853
        %v4038 = vpack.c.b16 %v3858, %v3854
        %v4039 = vpack.c.b16 %v3863, %v3859
        %v4040 = vpack.c.b16 %v3864, %v3860
        %v4041 = vpack.c.b16 %v3865, %v3861
        %v4042 = vpack.c.b16 %v3866, %v3862
        %v4043 = vpack.c.b16 %v3871, %v3867
        %v4044 = vpack.c.b16 %v3872, %v3868
        %v4045 = vpack.c.b16 %v3873, %v3869
        %v4046 = vpack.c.b16 %v3874, %v3870
        %v4047 = vpack.c.b16 %v3879, %v3875
        %v4048 = vpack.c.b16 %v3880, %v3876
        %v4049 = vpack.c.b16 %v3881, %v3877
        %v4050 = vpack.c.b16 %v3882, %v3878
        %v4051 = vpack.c.b16 %v3887, %v3883
        %v4052 = vpack.c.b16 %v3888, %v3884
        %v4053 = vpack.c.b16 %v3889, %v3885
        %v4054 = vpack.c.b16 %v3890, %v3886
        %v4055 = vpack.c.b16 %v3895, %v3891
        %v4056 = vpack.c.b16 %v3896, %v3892
        %v4057 = vpack.c.b16 %v3897, %v3893
        %v4058 = vpack.c.b16 %v3898, %v3894
        %v4059 = vpack.c.b16 %v3903, %v3899
        %v4060 = vpack.c.b16 %v3904, %v3900
        %v4061 = vpack.c.b16 %v3905, %v3901
        %v4062 = vpack.c.b16 %v3906, %v3902
        %v4063 = vpack.c.b16 %v3911, %v3907
        %v4064 = vpack.c.b16 %v3912, %v3908
        %v4065 = vpack.c.b16 %v3913, %v3909
        %v4066 = vpack.c.b16 %v3914, %v3910
        %v4067 = vpack.c.b16 %v3919, %v3915
        %v4068 = vpack.c.b16 %v3920, %v3916
        %v4069 = vpack.c.b16 %v3921, %v3917
        %v4070 = vpack.c.b16 %v3922, %v3918
        %v4071 = vpack.c.b16 %v3927, %v3923
        %v4072 = vpack.c.b16 %v3928, %v3924
        %v4073 = vpack.c.b16 %v3929, %v3925
        %v4074 = vpack.c.b16 %v3930, %v3926
        %v4075 = vpack.c.b16 %v3935, %v3931
        %v4076 = vpack.c.b16 %v3936, %v3932
        %v4077 = vpack.c.b16 %v3937, %v3933
        %v4078 = vpack.c.b16 %v3938, %v3934
        %v4079 = vpack.c.b16 %v3943, %v3939
        %v4080 = vpack.c.b16 %v3944, %v3940
        %v4081 = vpack.c.b16 %v3945, %v3941
        %v4082 = vpack.c.b16 %v3946, %v3942
        %v4083 = vpack.c.b16 %v3951, %v3947
        %v4084 = vpack.c.b16 %v3952, %v3948
        %v4085 = vpack.c.b16 %v3953, %v3949
        %v4086 = vpack.c.b16 %v3954, %v3950
        %v4087 = vpack.c.b16 %v3959, %v3955
        %v4088 = vpack.c.b16 %v3960, %v3956
        %v4089 = vpack.c.b16 %v3961, %v3957
        %v4090 = vpack.c.b16 %v3962, %v3958
        %4219 = vmatpush.bf16.msra.mxu0 %v3991
        %4220 = vmatpush.bf16.msra.mxu0 %v3987
        %4221 = vmatpush.bf16.msra.mxu0 %v3983
        %4222 = vmatpush.bf16.msra.mxu0 %v3979
        %4223 = vmatpush.bf16.msra.mxu0 %v3975
        %4224 = vmatpush.bf16.msra.mxu0 %v3971
        %4225 = vmatpush.bf16.msra.mxu0 %v3967
        %4226 = vmatpush.bf16.msra.mxu0 %v3963
        %4227 = vmatmul.bf16.gmra.mxu0 %v3447
        %v4228 = vpop.f32.mrf.mxu0
        %v4229 = vadd.f32 0.0, %v4228
        %v4230 = vpop.f32.mrf.mxu0
        %4231 = vdwg.mxu0
        %4232 = vmatpush.bf16.msra.mxu0 %v4023
        %4233 = vmatpush.bf16.msra.mxu0 %v4019
        %4234 = vmatpush.bf16.msra.mxu0 %v4015
        %4235 = vmatpush.bf16.msra.mxu0 %v4011
        %4236 = vmatpush.bf16.msra.mxu0 %v4007
        %4237 = vmatpush.bf16.msra.mxu0 %v4003
        %4238 = vmatpush.bf16.msra.mxu0 %v3999
        %4239 = vmatpush.bf16.msra.mxu0 %v3995
        %4240 = vmatmul.bf16.gmra.mxu0 %v3448
        %v4241 = vpop.f32.mrf.mxu0
        %v4242 = vadd.f32 %v4229, %v4241
        %v4243 = vpop.f32.mrf.mxu0
        %4244 = vdwg.mxu0
        %4245 = vmatpush.bf16.msra.mxu0 %v4055
        %4246 = vmatpush.bf16.msra.mxu0 %v4051
        %4247 = vmatpush.bf16.msra.mxu0 %v4047
        %4248 = vmatpush.bf16.msra.mxu0 %v4043
        %4249 = vmatpush.bf16.msra.mxu0 %v4039
        %4250 = vmatpush.bf16.msra.mxu0 %v4035
        %4251 = vmatpush.bf16.msra.mxu0 %v4031
        %4252 = vmatpush.bf16.msra.mxu0 %v4027
        %4253 = vmatmul.bf16.gmra.mxu0 %v3449
        %v4254 = vpop.f32.mrf.mxu0
        %v4255 = vadd.f32 %v4242, %v4254
        %v4256 = vpop.f32.mrf.mxu0
        %4257 = vdwg.mxu0
        %4258 = vmatpush.bf16.msra.mxu0 %v4087
        %4259 = vmatpush.bf16.msra.mxu0 %v4083
        %4260 = vmatpush.bf16.msra.mxu0 %v4079
        %4261 = vmatpush.bf16.msra.mxu0 %v4075
        %4262 = vmatpush.bf16.msra.mxu0 %v4071
        %4263 = vmatpush.bf16.msra.mxu0 %v4067
        %4264 = vmatpush.bf16.msra.mxu0 %v4063
        %4265 = vmatpush.bf16.msra.mxu0 %v4059
        %4266 = vmatmul.bf16.gmra.mxu0 %v3450
        %v4267 = vpop.f32.mrf.mxu0
        %v4268 = vadd.f32 %v4255, %v4267
        %v4269 = vpop.f32.mrf.mxu0
        %4270 = vdwg.mxu0
        %4271 = vmatpush.bf16.msra.mxu0 %v3992
        %4272 = vmatpush.bf16.msra.mxu0 %v3988
        %4273 = vmatpush.bf16.msra.mxu0 %v3984
        %4274 = vmatpush.bf16.msra.mxu0 %v3980
        %4275 = vmatpush.bf16.msra.mxu0 %v3976
        %4276 = vmatpush.bf16.msra.mxu0 %v3972
        %4277 = vmatpush.bf16.msra.mxu0 %v3968
        %4278 = vmatpush.bf16.msra.mxu0 %v3964
        %4279 = vmatmul.bf16.gmra.mxu0 %v3447
        %v4280 = vpop.f32.mrf.mxu0
        %v4281 = vadd.f32 0.0, %v4280
        %v4282 = vpop.f32.mrf.mxu0
        %4283 = vdwg.mxu0
        %4284 = vmatpush.bf16.msra.mxu0 %v4024
        %4285 = vmatpush.bf16.msra.mxu0 %v4020
        %4286 = vmatpush.bf16.msra.mxu0 %v4016
        %4287 = vmatpush.bf16.msra.mxu0 %v4012
        %4288 = vmatpush.bf16.msra.mxu0 %v4008
        %4289 = vmatpush.bf16.msra.mxu0 %v4004
        %4290 = vmatpush.bf16.msra.mxu0 %v4000
        %4291 = vmatpush.bf16.msra.mxu0 %v3996
        %4292 = vmatmul.bf16.gmra.mxu0 %v3448
        %v4293 = vpop.f32.mrf.mxu0
        %v4294 = vadd.f32 %v4281, %v4293
        %v4295 = vpop.f32.mrf.mxu0
        %4296 = vdwg.mxu0
        %4297 = vmatpush.bf16.msra.mxu0 %v4056
        %4298 = vmatpush.bf16.msra.mxu0 %v4052
        %4299 = vmatpush.bf16.msra.mxu0 %v4048
        %4300 = vmatpush.bf16.msra.mxu0 %v4044
        %4301 = vmatpush.bf16.msra.mxu0 %v4040
        %4302 = vmatpush.bf16.msra.mxu0 %v4036
        %4303 = vmatpush.bf16.msra.mxu0 %v4032
        %4304 = vmatpush.bf16.msra.mxu0 %v4028
        %4305 = vmatmul.bf16.gmra.mxu0 %v3449
        %v4306 = vpop.f32.mrf.mxu0
        %v4307 = vadd.f32 %v4294, %v4306
        %v4308 = vpop.f32.mrf.mxu0
        %4309 = vdwg.mxu0
        %4310 = vmatpush.bf16.msra.mxu0 %v4088
        %4311 = vmatpush.bf16.msra.mxu0 %v4084
        %4312 = vmatpush.bf16.msra.mxu0 %v4080
        %4313 = vmatpush.bf16.msra.mxu0 %v4076
        %4314 = vmatpush.bf16.msra.mxu0 %v4072
        %4315 = vmatpush.bf16.msra.mxu0 %v4068
        %4316 = vmatpush.bf16.msra.mxu0 %v4064
        %4317 = vmatpush.bf16.msra.mxu0 %v4060
        %4318 = vmatmul.bf16.gmra.mxu0 %v3450
        %v4319 = vpop.f32.mrf.mxu0
        %v4320 = vadd.f32 %v4307, %v4319
        %v4321 = vpop.f32.mrf.mxu0
        %4322 = vdwg.mxu0
        %4323 = vmatpush.bf16.msra.mxu0 %v3993
        %4324 = vmatpush.bf16.msra.mxu0 %v3989
        %4325 = vmatpush.bf16.msra.mxu0 %v3985
        %4326 = vmatpush.bf16.msra.mxu0 %v3981
        %4327 = vmatpush.bf16.msra.mxu0 %v3977
        %4328 = vmatpush.bf16.msra.mxu0 %v3973
        %4329 = vmatpush.bf16.msra.mxu0 %v3969
        %4330 = vmatpush.bf16.msra.mxu0 %v3965
        %4331 = vmatmul.bf16.gmra.mxu0 %v3447
        %v4332 = vpop.f32.mrf.mxu0
        %v4333 = vadd.f32 0.0, %v4332
        %v4334 = vpop.f32.mrf.mxu0
        %4335 = vdwg.mxu0
        %4336 = vmatpush.bf16.msra.mxu0 %v4025
        %4337 = vmatpush.bf16.msra.mxu0 %v4021
        %4338 = vmatpush.bf16.msra.mxu0 %v4017
        %4339 = vmatpush.bf16.msra.mxu0 %v4013
        %4340 = vmatpush.bf16.msra.mxu0 %v4009
        %4341 = vmatpush.bf16.msra.mxu0 %v4005
        %4342 = vmatpush.bf16.msra.mxu0 %v4001
        %4343 = vmatpush.bf16.msra.mxu0 %v3997
        %4344 = vmatmul.bf16.gmra.mxu0 %v3448
        %v4345 = vpop.f32.mrf.mxu0
        %v4346 = vadd.f32 %v4333, %v4345
        %v4347 = vpop.f32.mrf.mxu0
        %4348 = vdwg.mxu0
        %4349 = vmatpush.bf16.msra.mxu0 %v4057
        %4350 = vmatpush.bf16.msra.mxu0 %v4053
        %4351 = vmatpush.bf16.msra.mxu0 %v4049
        %4352 = vmatpush.bf16.msra.mxu0 %v4045
        %4353 = vmatpush.bf16.msra.mxu0 %v4041
        %4354 = vmatpush.bf16.msra.mxu0 %v4037
        %4355 = vmatpush.bf16.msra.mxu0 %v4033
        %4356 = vmatpush.bf16.msra.mxu0 %v4029
        %4357 = vmatmul.bf16.gmra.mxu0 %v3449
        %v4358 = vpop.f32.mrf.mxu0
        %v4359 = vadd.f32 %v4346, %v4358
        %v4360 = vpop.f32.mrf.mxu0
        %4361 = vdwg.mxu0
        %4362 = vmatpush.bf16.msra.mxu0 %v4089
        %4363 = vmatpush.bf16.msra.mxu0 %v4085
        %4364 = vmatpush.bf16.msra.mxu0 %v4081
        %4365 = vmatpush.bf16.msra.mxu0 %v4077
        %4366 = vmatpush.bf16.msra.mxu0 %v4073
        %4367 = vmatpush.bf16.msra.mxu0 %v4069
        %4368 = vmatpush.bf16.msra.mxu0 %v4065
        %4369 = vmatpush.bf16.msra.mxu0 %v4061
        %4370 = vmatmul.bf16.gmra.mxu0 %v3450
        %v4371 = vpop.f32.mrf.mxu0
        %v4372 = vadd.f32 %v4359, %v4371
        %v4373 = vpop.f32.mrf.mxu0
        %4374 = vdwg.mxu0
        %4375 = vmatpush.bf16.msra.mxu0 %v3994
        %4376 = vmatpush.bf16.msra.mxu0 %v3990
        %4377 = vmatpush.bf16.msra.mxu0 %v3986
        %4378 = vmatpush.bf16.msra.mxu0 %v3982
        %4379 = vmatpush.bf16.msra.mxu0 %v3978
        %4380 = vmatpush.bf16.msra.mxu0 %v3974
        %4381 = vmatpush.bf16.msra.mxu0 %v3970
        %4382 = vmatpush.bf16.msra.mxu0 %v3966
        %4383 = vmatmul.bf16.gmra.mxu0 %v3447
        %v4384 = vpop.f32.mrf.mxu0
        %v4385 = vadd.f32 0.0, %v4384
        %v4386 = vpop.f32.mrf.mxu0
        %4387 = vdwg.mxu0
        %4388 = vmatpush.bf16.msra.mxu0 %v4026
        %4389 = vmatpush.bf16.msra.mxu0 %v4022
        %4390 = vmatpush.bf16.msra.mxu0 %v4018
        %4391 = vmatpush.bf16.msra.mxu0 %v4014
        %4392 = vmatpush.bf16.msra.mxu0 %v4010
        %4393 = vmatpush.bf16.msra.mxu0 %v4006
        %4394 = vmatpush.bf16.msra.mxu0 %v4002
        %4395 = vmatpush.bf16.msra.mxu0 %v3998
        %4396 = vmatmul.bf16.gmra.mxu0 %v3448
        %v4397 = vpop.f32.mrf.mxu0
        %v4398 = vadd.f32 %v4385, %v4397
        %v4399 = vpop.f32.mrf.mxu0
        %4400 = vdwg.mxu0
        %4401 = vmatpush.bf16.msra.mxu0 %v4058
        %4402 = vmatpush.bf16.msra.mxu0 %v4054
        %4403 = vmatpush.bf16.msra.mxu0 %v4050
        %4404 = vmatpush.bf16.msra.mxu0 %v4046
        %4405 = vmatpush.bf16.msra.mxu0 %v4042
        %4406 = vmatpush.bf16.msra.mxu0 %v4038
        %4407 = vmatpush.bf16.msra.mxu0 %v4034
        %4408 = vmatpush.bf16.msra.mxu0 %v4030
        %4409 = vmatmul.bf16.gmra.mxu0 %v3449
        %v4410 = vpop.f32.mrf.mxu0
        %v4411 = vadd.f32 %v4398, %v4410
        %v4412 = vpop.f32.mrf.mxu0
        %4413 = vdwg.mxu0
        %4414 = vmatpush.bf16.msra.mxu0 %v4090
        %4415 = vmatpush.bf16.msra.mxu0 %v4086
        %4416 = vmatpush.bf16.msra.mxu0 %v4082
        %4417 = vmatpush.bf16.msra.mxu0 %v4078
        %4418 = vmatpush.bf16.msra.mxu0 %v4074
        %4419 = vmatpush.bf16.msra.mxu0 %v4070
        %4420 = vmatpush.bf16.msra.mxu0 %v4066
        %4421 = vmatpush.bf16.msra.mxu0 %v4062
        %4422 = vmatmul.bf16.gmra.mxu0 %v3450
        %v4423 = vpop.f32.mrf.mxu0
        %v4424 = vadd.f32 %v4411, %v4423
        %v4425 = vpop.f32.mrf.mxu0
        %4426 = vdwg.mxu0
        %v4428 = vperm.slane %v3442, 0
        %v4429 = vperm.slane %v3442, 1
        %v4430 = vperm.slane %v3442, 2
        %v4431 = vperm.slane %v3442, 3
        %v4436 = vadd.f32 %v4428, %v4268
        %v4437 = vadd.f32 %v4429, %v4320
        %v4438 = vadd.f32 %v4430, %v4372
        %v4439 = vadd.f32 %v4431, %v4424
        %v4440 = vld [vmem:[#allocation2] sm:$0xfe]
        %v4441 = vld [vmem:[#allocation2 + $0x8] sm:$0xfe]
        %v4442 = vld [vmem:[#allocation2 + $0x10] sm:$0xfe]
        %v4443 = vld [vmem:[#allocation2 + $0x18] sm:$0xfe]
        %v4444 = vld [vmem:[#allocation2 + $0x20] sm:$0x1]
        %v4445 = vld [vmem:[#allocation2 + $0x28] sm:$0x1]
        %v4446 = vld [vmem:[#allocation2 + $0x30] sm:$0x1]
        %v4447 = vld [vmem:[#allocation2 + $0x38] sm:$0x1]
        %v4448 = vpack.c.bf16 %v4444, %v4440
        %v4449 = vpack.c.bf16 %v4445, %v4441
        %v4450 = vpack.c.bf16 %v4446, %v4442
        %v4451 = vpack.c.bf16 %v4447, %v4443
        %s4452 = scalar_lea.vmem [#allocation7], 1024
        %v4453 = vld [vmem:[%s4452] sm:$0xff]
        %v4454 = vld [vmem:[%s4452 + $0x8] sm:$0xff]
        %v4455 = vld [vmem:[%s4452 + $0x10] sm:$0xff]
        %v4456 = vld [vmem:[%s4452 + $0x18] sm:$0xff]
        %v4457 = vld [vmem:[%s4452 + $0x20] sm:$0xff]
        %v4458 = vld [vmem:[%s4452 + $0x28] sm:$0xff]
        %v4459 = vld [vmem:[%s4452 + $0x30] sm:$0xff]
        %v4460 = vld [vmem:[%s4452 + $0x38] sm:$0xff]
        %v4461 = vld [vmem:[%s4452 + $0x40] sm:$0xff]
        %v4462 = vld [vmem:[%s4452 + $0x48] sm:$0xff]
        %v4463 = vld [vmem:[%s4452 + $0x50] sm:$0xff]
        %v4464 = vld [vmem:[%s4452 + $0x58] sm:$0xff]
        %v4465 = vld [vmem:[%s4452 + $0x60] sm:$0xff]
        %v4466 = vld [vmem:[%s4452 + $0x68] sm:$0xff]
        %v4467 = vld [vmem:[%s4452 + $0x70] sm:$0xff]
        %v4468 = vld [vmem:[%s4452 + $0x78] sm:$0xff]
        %v4469 = vld [vmem:[%s4452 + $0x80] sm:$0xff]
        %v4470 = vld [vmem:[%s4452 + $0x88] sm:$0xff]
        %v4471 = vld [vmem:[%s4452 + $0x90] sm:$0xff]
        %v4472 = vld [vmem:[%s4452 + $0x98] sm:$0xff]
        %v4473 = vld [vmem:[%s4452 + $0xa0] sm:$0xff]
        %v4474 = vld [vmem:[%s4452 + $0xa8] sm:$0xff]
        %v4475 = vld [vmem:[%s4452 + $0xb0] sm:$0xff]
        %v4476 = vld [vmem:[%s4452 + $0xb8] sm:$0xff]
        %v4477 = vld [vmem:[%s4452 + $0xc0] sm:$0xff]
        %v4478 = vld [vmem:[%s4452 + $0xc8] sm:$0xff]
        %v4479 = vld [vmem:[%s4452 + $0xd0] sm:$0xff]
        %v4480 = vld [vmem:[%s4452 + $0xd8] sm:$0xff]
        %v4481 = vld [vmem:[%s4452 + $0xe0] sm:$0xff]
        %v4482 = vld [vmem:[%s4452 + $0xe8] sm:$0xff]
        %v4483 = vld [vmem:[%s4452 + $0xf0] sm:$0xff]
        %v4484 = vld [vmem:[%s4452 + $0xf8] sm:$0xff]
        %v4485 = vld [vmem:[%s4452 + $0x100] sm:$0xff]
        %v4486 = vld [vmem:[%s4452 + $0x108] sm:$0xff]
        %v4487 = vld [vmem:[%s4452 + $0x110] sm:$0xff]
        %v4488 = vld [vmem:[%s4452 + $0x118] sm:$0xff]
        %v4489 = vld [vmem:[%s4452 + $0x120] sm:$0xff]
        %v4490 = vld [vmem:[%s4452 + $0x128] sm:$0xff]
        %v4491 = vld [vmem:[%s4452 + $0x130] sm:$0xff]
        %v4492 = vld [vmem:[%s4452 + $0x138] sm:$0xff]
        %v4493 = vld [vmem:[%s4452 + $0x140] sm:$0xff]
        %v4494 = vld [vmem:[%s4452 + $0x148] sm:$0xff]
        %v4495 = vld [vmem:[%s4452 + $0x150] sm:$0xff]
        %v4496 = vld [vmem:[%s4452 + $0x158] sm:$0xff]
        %v4497 = vld [vmem:[%s4452 + $0x160] sm:$0xff]
        %v4498 = vld [vmem:[%s4452 + $0x168] sm:$0xff]
        %v4499 = vld [vmem:[%s4452 + $0x170] sm:$0xff]
        %v4500 = vld [vmem:[%s4452 + $0x178] sm:$0xff]
        %v4501 = vld [vmem:[%s4452 + $0x180] sm:$0xff]
        %v4502 = vld [vmem:[%s4452 + $0x188] sm:$0xff]
        %v4503 = vld [vmem:[%s4452 + $0x190] sm:$0xff]
        %v4504 = vld [vmem:[%s4452 + $0x198] sm:$0xff]
        %v4505 = vld [vmem:[%s4452 + $0x1a0] sm:$0xff]
        %v4506 = vld [vmem:[%s4452 + $0x1a8] sm:$0xff]
        %v4507 = vld [vmem:[%s4452 + $0x1b0] sm:$0xff]
        %v4508 = vld [vmem:[%s4452 + $0x1b8] sm:$0xff]
        %v4509 = vld [vmem:[%s4452 + $0x1c0] sm:$0xff]
        %v4510 = vld [vmem:[%s4452 + $0x1c8] sm:$0xff]
        %v4511 = vld [vmem:[%s4452 + $0x1d0] sm:$0xff]
        %v4512 = vld [vmem:[%s4452 + $0x1d8] sm:$0xff]
        %v4513 = vld [vmem:[%s4452 + $0x1e0] sm:$0xff]
        %v4514 = vld [vmem:[%s4452 + $0x1e8] sm:$0xff]
        %v4515 = vld [vmem:[%s4452 + $0x1f0] sm:$0xff]
        %v4516 = vld [vmem:[%s4452 + $0x1f8] sm:$0xff]
        %v4517 = vld [vmem:[%s4452 + $0x200] sm:$0xff]
        %v4518 = vld [vmem:[%s4452 + $0x208] sm:$0xff]
        %v4519 = vld [vmem:[%s4452 + $0x210] sm:$0xff]
        %v4520 = vld [vmem:[%s4452 + $0x218] sm:$0xff]
        %v4521 = vld [vmem:[%s4452 + $0x220] sm:$0xff]
        %v4522 = vld [vmem:[%s4452 + $0x228] sm:$0xff]
        %v4523 = vld [vmem:[%s4452 + $0x230] sm:$0xff]
        %v4524 = vld [vmem:[%s4452 + $0x238] sm:$0xff]
        %v4525 = vld [vmem:[%s4452 + $0x240] sm:$0xff]
        %v4526 = vld [vmem:[%s4452 + $0x248] sm:$0xff]
        %v4527 = vld [vmem:[%s4452 + $0x250] sm:$0xff]
        %v4528 = vld [vmem:[%s4452 + $0x258] sm:$0xff]
        %v4529 = vld [vmem:[%s4452 + $0x260] sm:$0xff]
        %v4530 = vld [vmem:[%s4452 + $0x268] sm:$0xff]
        %v4531 = vld [vmem:[%s4452 + $0x270] sm:$0xff]
        %v4532 = vld [vmem:[%s4452 + $0x278] sm:$0xff]
        %v4533 = vld [vmem:[%s4452 + $0x280] sm:$0xff]
        %v4534 = vld [vmem:[%s4452 + $0x288] sm:$0xff]
        %v4535 = vld [vmem:[%s4452 + $0x290] sm:$0xff]
        %v4536 = vld [vmem:[%s4452 + $0x298] sm:$0xff]
        %v4537 = vld [vmem:[%s4452 + $0x2a0] sm:$0xff]
        %v4538 = vld [vmem:[%s4452 + $0x2a8] sm:$0xff]
        %v4539 = vld [vmem:[%s4452 + $0x2b0] sm:$0xff]
        %v4540 = vld [vmem:[%s4452 + $0x2b8] sm:$0xff]
        %v4541 = vld [vmem:[%s4452 + $0x2c0] sm:$0xff]
        %v4542 = vld [vmem:[%s4452 + $0x2c8] sm:$0xff]
        %v4543 = vld [vmem:[%s4452 + $0x2d0] sm:$0xff]
        %v4544 = vld [vmem:[%s4452 + $0x2d8] sm:$0xff]
        %v4545 = vld [vmem:[%s4452 + $0x2e0] sm:$0xff]
        %v4546 = vld [vmem:[%s4452 + $0x2e8] sm:$0xff]
        %v4547 = vld [vmem:[%s4452 + $0x2f0] sm:$0xff]
        %v4548 = vld [vmem:[%s4452 + $0x2f8] sm:$0xff]
        %v4549 = vld [vmem:[%s4452 + $0x300] sm:$0xff]
        %v4550 = vld [vmem:[%s4452 + $0x308] sm:$0xff]
        %v4551 = vld [vmem:[%s4452 + $0x310] sm:$0xff]
        %v4552 = vld [vmem:[%s4452 + $0x318] sm:$0xff]
        %v4553 = vld [vmem:[%s4452 + $0x320] sm:$0xff]
        %v4554 = vld [vmem:[%s4452 + $0x328] sm:$0xff]
        %v4555 = vld [vmem:[%s4452 + $0x330] sm:$0xff]
        %v4556 = vld [vmem:[%s4452 + $0x338] sm:$0xff]
        %v4557 = vld [vmem:[%s4452 + $0x340] sm:$0xff]
        %v4558 = vld [vmem:[%s4452 + $0x348] sm:$0xff]
        %v4559 = vld [vmem:[%s4452 + $0x350] sm:$0xff]
        %v4560 = vld [vmem:[%s4452 + $0x358] sm:$0xff]
        %v4561 = vld [vmem:[%s4452 + $0x360] sm:$0xff]
        %v4562 = vld [vmem:[%s4452 + $0x368] sm:$0xff]
        %v4563 = vld [vmem:[%s4452 + $0x370] sm:$0xff]
        %v4564 = vld [vmem:[%s4452 + $0x378] sm:$0xff]
        %v4565 = vld [vmem:[%s4452 + $0x380] sm:$0xff]
        %v4566 = vld [vmem:[%s4452 + $0x388] sm:$0xff]
        %v4567 = vld [vmem:[%s4452 + $0x390] sm:$0xff]
        %v4568 = vld [vmem:[%s4452 + $0x398] sm:$0xff]
        %v4569 = vld [vmem:[%s4452 + $0x3a0] sm:$0xff]
        %v4570 = vld [vmem:[%s4452 + $0x3a8] sm:$0xff]
        %v4571 = vld [vmem:[%s4452 + $0x3b0] sm:$0xff]
        %v4572 = vld [vmem:[%s4452 + $0x3b8] sm:$0xff]
        %v4573 = vld [vmem:[%s4452 + $0x3c0] sm:$0xff]
        %v4574 = vld [vmem:[%s4452 + $0x3c8] sm:$0xff]
        %v4575 = vld [vmem:[%s4452 + $0x3d0] sm:$0xff]
        %v4576 = vld [vmem:[%s4452 + $0x3d8] sm:$0xff]
        %v4577 = vld [vmem:[%s4452 + $0x3e0] sm:$0xff]
        %v4578 = vld [vmem:[%s4452 + $0x3e8] sm:$0xff]
        %v4579 = vld [vmem:[%s4452 + $0x3f0] sm:$0xff]
        %v4580 = vld [vmem:[%s4452 + $0x3f8] sm:$0xff]
        %v4582 = vshrl.u32 %v4448, 16
        %v4584 = vshll.u32 %v4448, 16
        %v4586 = vrot.slane %v4584, 1
        %v4587 = vor.u32 %v4582, %v4586
        %v4589 = vshrl.u32 %v4449, 16
        %v4591 = vshll.u32 %v4449, 16
        %v4593 = vrot.slane %v4591, 1
        %v4594 = vor.u32 %v4589, %v4593
        %v4596 = vshrl.u32 %v4450, 16
        %v4598 = vshll.u32 %v4450, 16
        %v4600 = vrot.slane %v4598, 1
        %v4601 = vor.u32 %v4596, %v4600
        %v4603 = vshrl.u32 %v4451, 16
        %v4605 = vshll.u32 %v4451, 16
        %v4607 = vrot.slane %v4605, 1
        %v4608 = vor.u32 %v4603, %v4607
        %v4741 = vunpack.c.l.b16 %v4453
        %v4742 = vunpack.c.h.b16 %v4453
        %v4743 = vunpack.c.l.b16 %v4454
        %v4744 = vunpack.c.h.b16 %v4454
        %v4745 = vunpack.c.l.b16 %v4455
        %v4746 = vunpack.c.h.b16 %v4455
        %v4747 = vunpack.c.l.b16 %v4456
        %v4748 = vunpack.c.h.b16 %v4456
        %v4749 = vunpack.c.l.b16 %v4457
        %v4750 = vunpack.c.h.b16 %v4457
        %v4751 = vunpack.c.l.b16 %v4458
        %v4752 = vunpack.c.h.b16 %v4458
        %v4753 = vunpack.c.l.b16 %v4459
        %v4754 = vunpack.c.h.b16 %v4459
        %v4755 = vunpack.c.l.b16 %v4460
        %v4756 = vunpack.c.h.b16 %v4460
        %v4757 = vunpack.c.l.b16 %v4461
        %v4758 = vunpack.c.h.b16 %v4461
        %v4759 = vunpack.c.l.b16 %v4462
        %v4760 = vunpack.c.h.b16 %v4462
        %v4761 = vunpack.c.l.b16 %v4463
        %v4762 = vunpack.c.h.b16 %v4463
        %v4763 = vunpack.c.l.b16 %v4464
        %v4764 = vunpack.c.h.b16 %v4464
        %v4765 = vunpack.c.l.b16 %v4465
        %v4766 = vunpack.c.h.b16 %v4465
        %v4767 = vunpack.c.l.b16 %v4466
        %v4768 = vunpack.c.h.b16 %v4466
        %v4769 = vunpack.c.l.b16 %v4467
        %v4770 = vunpack.c.h.b16 %v4467
        %v4771 = vunpack.c.l.b16 %v4468
        %v4772 = vunpack.c.h.b16 %v4468
        %v4773 = vunpack.c.l.b16 %v4469
        %v4774 = vunpack.c.h.b16 %v4469
        %v4775 = vunpack.c.l.b16 %v4470
        %v4776 = vunpack.c.h.b16 %v4470
        %v4777 = vunpack.c.l.b16 %v4471
        %v4778 = vunpack.c.h.b16 %v4471
        %v4779 = vunpack.c.l.b16 %v4472
        %v4780 = vunpack.c.h.b16 %v4472
        %v4781 = vunpack.c.l.b16 %v4473
        %v4782 = vunpack.c.h.b16 %v4473
        %v4783 = vunpack.c.l.b16 %v4474
        %v4784 = vunpack.c.h.b16 %v4474
        %v4785 = vunpack.c.l.b16 %v4475
        %v4786 = vunpack.c.h.b16 %v4475
        %v4787 = vunpack.c.l.b16 %v4476
        %v4788 = vunpack.c.h.b16 %v4476
        %v4789 = vunpack.c.l.b16 %v4477
        %v4790 = vunpack.c.h.b16 %v4477
        %v4791 = vunpack.c.l.b16 %v4478
        %v4792 = vunpack.c.h.b16 %v4478
        %v4793 = vunpack.c.l.b16 %v4479
        %v4794 = vunpack.c.h.b16 %v4479
        %v4795 = vunpack.c.l.b16 %v4480
        %v4796 = vunpack.c.h.b16 %v4480
        %v4797 = vunpack.c.l.b16 %v4481
        %v4798 = vunpack.c.h.b16 %v4481
        %v4799 = vunpack.c.l.b16 %v4482
        %v4800 = vunpack.c.h.b16 %v4482
        %v4801 = vunpack.c.l.b16 %v4483
        %v4802 = vunpack.c.h.b16 %v4483
        %v4803 = vunpack.c.l.b16 %v4484
        %v4804 = vunpack.c.h.b16 %v4484
        %v4805 = vunpack.c.l.b16 %v4485
        %v4806 = vunpack.c.h.b16 %v4485
        %v4807 = vunpack.c.l.b16 %v4486
        %v4808 = vunpack.c.h.b16 %v4486
        %v4809 = vunpack.c.l.b16 %v4487
        %v4810 = vunpack.c.h.b16 %v4487
        %v4811 = vunpack.c.l.b16 %v4488
        %v4812 = vunpack.c.h.b16 %v4488
        %v4813 = vunpack.c.l.b16 %v4489
        %v4814 = vunpack.c.h.b16 %v4489
        %v4815 = vunpack.c.l.b16 %v4490
        %v4816 = vunpack.c.h.b16 %v4490
        %v4817 = vunpack.c.l.b16 %v4491
        %v4818 = vunpack.c.h.b16 %v4491
        %v4819 = vunpack.c.l.b16 %v4492
        %v4820 = vunpack.c.h.b16 %v4492
        %v4821 = vunpack.c.l.b16 %v4493
        %v4822 = vunpack.c.h.b16 %v4493
        %v4823 = vunpack.c.l.b16 %v4494
        %v4824 = vunpack.c.h.b16 %v4494
        %v4825 = vunpack.c.l.b16 %v4495
        %v4826 = vunpack.c.h.b16 %v4495
        %v4827 = vunpack.c.l.b16 %v4496
        %v4828 = vunpack.c.h.b16 %v4496
        %v4829 = vunpack.c.l.b16 %v4497
        %v4830 = vunpack.c.h.b16 %v4497
        %v4831 = vunpack.c.l.b16 %v4498
        %v4832 = vunpack.c.h.b16 %v4498
        %v4833 = vunpack.c.l.b16 %v4499
        %v4834 = vunpack.c.h.b16 %v4499
        %v4835 = vunpack.c.l.b16 %v4500
        %v4836 = vunpack.c.h.b16 %v4500
        %v4837 = vunpack.c.l.b16 %v4501
        %v4838 = vunpack.c.h.b16 %v4501
        %v4839 = vunpack.c.l.b16 %v4502
        %v4840 = vunpack.c.h.b16 %v4502
        %v4841 = vunpack.c.l.b16 %v4503
        %v4842 = vunpack.c.h.b16 %v4503
        %v4843 = vunpack.c.l.b16 %v4504
        %v4844 = vunpack.c.h.b16 %v4504
        %v4845 = vunpack.c.l.b16 %v4505
        %v4846 = vunpack.c.h.b16 %v4505
        %v4847 = vunpack.c.l.b16 %v4506
        %v4848 = vunpack.c.h.b16 %v4506
        %v4849 = vunpack.c.l.b16 %v4507
        %v4850 = vunpack.c.h.b16 %v4507
        %v4851 = vunpack.c.l.b16 %v4508
        %v4852 = vunpack.c.h.b16 %v4508
        %v4853 = vunpack.c.l.b16 %v4509
        %v4854 = vunpack.c.h.b16 %v4509
        %v4855 = vunpack.c.l.b16 %v4510
        %v4856 = vunpack.c.h.b16 %v4510
        %v4857 = vunpack.c.l.b16 %v4511
        %v4858 = vunpack.c.h.b16 %v4511
        %v4859 = vunpack.c.l.b16 %v4512
        %v4860 = vunpack.c.h.b16 %v4512
        %v4861 = vunpack.c.l.b16 %v4513
        %v4862 = vunpack.c.h.b16 %v4513
        %v4863 = vunpack.c.l.b16 %v4514
        %v4864 = vunpack.c.h.b16 %v4514
        %v4865 = vunpack.c.l.b16 %v4515
        %v4866 = vunpack.c.h.b16 %v4515
        %v4867 = vunpack.c.l.b16 %v4516
        %v4868 = vunpack.c.h.b16 %v4516
        %v4869 = vunpack.c.l.b16 %v4517
        %v4870 = vunpack.c.h.b16 %v4517
        %v4871 = vunpack.c.l.b16 %v4518
        %v4872 = vunpack.c.h.b16 %v4518
        %v4873 = vunpack.c.l.b16 %v4519
        %v4874 = vunpack.c.h.b16 %v4519
        %v4875 = vunpack.c.l.b16 %v4520
        %v4876 = vunpack.c.h.b16 %v4520
        %v4877 = vunpack.c.l.b16 %v4521
        %v4878 = vunpack.c.h.b16 %v4521
        %v4879 = vunpack.c.l.b16 %v4522
        %v4880 = vunpack.c.h.b16 %v4522
        %v4881 = vunpack.c.l.b16 %v4523
        %v4882 = vunpack.c.h.b16 %v4523
        %v4883 = vunpack.c.l.b16 %v4524
        %v4884 = vunpack.c.h.b16 %v4524
        %v4885 = vunpack.c.l.b16 %v4525
        %v4886 = vunpack.c.h.b16 %v4525
        %v4887 = vunpack.c.l.b16 %v4526
        %v4888 = vunpack.c.h.b16 %v4526
        %v4889 = vunpack.c.l.b16 %v4527
        %v4890 = vunpack.c.h.b16 %v4527
        %v4891 = vunpack.c.l.b16 %v4528
        %v4892 = vunpack.c.h.b16 %v4528
        %v4893 = vunpack.c.l.b16 %v4529
        %v4894 = vunpack.c.h.b16 %v4529
        %v4895 = vunpack.c.l.b16 %v4530
        %v4896 = vunpack.c.h.b16 %v4530
        %v4897 = vunpack.c.l.b16 %v4531
        %v4898 = vunpack.c.h.b16 %v4531
        %v4899 = vunpack.c.l.b16 %v4532
        %v4900 = vunpack.c.h.b16 %v4532
        %v4901 = vunpack.c.l.b16 %v4533
        %v4902 = vunpack.c.h.b16 %v4533
        %v4903 = vunpack.c.l.b16 %v4534
        %v4904 = vunpack.c.h.b16 %v4534
        %v4905 = vunpack.c.l.b16 %v4535
        %v4906 = vunpack.c.h.b16 %v4535
        %v4907 = vunpack.c.l.b16 %v4536
        %v4908 = vunpack.c.h.b16 %v4536
        %v4909 = vunpack.c.l.b16 %v4537
        %v4910 = vunpack.c.h.b16 %v4537
        %v4911 = vunpack.c.l.b16 %v4538
        %v4912 = vunpack.c.h.b16 %v4538
        %v4913 = vunpack.c.l.b16 %v4539
        %v4914 = vunpack.c.h.b16 %v4539
        %v4915 = vunpack.c.l.b16 %v4540
        %v4916 = vunpack.c.h.b16 %v4540
        %v4917 = vunpack.c.l.b16 %v4541
        %v4918 = vunpack.c.h.b16 %v4541
        %v4919 = vunpack.c.l.b16 %v4542
        %v4920 = vunpack.c.h.b16 %v4542
        %v4921 = vunpack.c.l.b16 %v4543
        %v4922 = vunpack.c.h.b16 %v4543
        %v4923 = vunpack.c.l.b16 %v4544
        %v4924 = vunpack.c.h.b16 %v4544
        %v4925 = vunpack.c.l.b16 %v4545
        %v4926 = vunpack.c.h.b16 %v4545
        %v4927 = vunpack.c.l.b16 %v4546
        %v4928 = vunpack.c.h.b16 %v4546
        %v4929 = vunpack.c.l.b16 %v4547
        %v4930 = vunpack.c.h.b16 %v4547
        %v4931 = vunpack.c.l.b16 %v4548
        %v4932 = vunpack.c.h.b16 %v4548
        %v4933 = vunpack.c.l.b16 %v4549
        %v4934 = vunpack.c.h.b16 %v4549
        %v4935 = vunpack.c.l.b16 %v4550
        %v4936 = vunpack.c.h.b16 %v4550
        %v4937 = vunpack.c.l.b16 %v4551
        %v4938 = vunpack.c.h.b16 %v4551
        %v4939 = vunpack.c.l.b16 %v4552
        %v4940 = vunpack.c.h.b16 %v4552
        %v4941 = vunpack.c.l.b16 %v4553
        %v4942 = vunpack.c.h.b16 %v4553
        %v4943 = vunpack.c.l.b16 %v4554
        %v4944 = vunpack.c.h.b16 %v4554
        %v4945 = vunpack.c.l.b16 %v4555
        %v4946 = vunpack.c.h.b16 %v4555
        %v4947 = vunpack.c.l.b16 %v4556
        %v4948 = vunpack.c.h.b16 %v4556
        %v4949 = vunpack.c.l.b16 %v4557
        %v4950 = vunpack.c.h.b16 %v4557
        %v4951 = vunpack.c.l.b16 %v4558
        %v4952 = vunpack.c.h.b16 %v4558
        %v4953 = vunpack.c.l.b16 %v4559
        %v4954 = vunpack.c.h.b16 %v4559
        %v4955 = vunpack.c.l.b16 %v4560
        %v4956 = vunpack.c.h.b16 %v4560
        %v4957 = vunpack.c.l.b16 %v4561
        %v4958 = vunpack.c.h.b16 %v4561
        %v4959 = vunpack.c.l.b16 %v4562
        %v4960 = vunpack.c.h.b16 %v4562
        %v4961 = vunpack.c.l.b16 %v4563
        %v4962 = vunpack.c.h.b16 %v4563
        %v4963 = vunpack.c.l.b16 %v4564
        %v4964 = vunpack.c.h.b16 %v4564
        %v4965 = vunpack.c.l.b16 %v4565
        %v4966 = vunpack.c.h.b16 %v4565
        %v4967 = vunpack.c.l.b16 %v4566
        %v4968 = vunpack.c.h.b16 %v4566
        %v4969 = vunpack.c.l.b16 %v4567
        %v4970 = vunpack.c.h.b16 %v4567
        %v4971 = vunpack.c.l.b16 %v4568
        %v4972 = vunpack.c.h.b16 %v4568
        %v4973 = vunpack.c.l.b16 %v4569
        %v4974 = vunpack.c.h.b16 %v4569
        %v4975 = vunpack.c.l.b16 %v4570
        %v4976 = vunpack.c.h.b16 %v4570
        %v4977 = vunpack.c.l.b16 %v4571
        %v4978 = vunpack.c.h.b16 %v4571
        %v4979 = vunpack.c.l.b16 %v4572
        %v4980 = vunpack.c.h.b16 %v4572
        %v4981 = vunpack.c.l.b16 %v4573
        %v4982 = vunpack.c.h.b16 %v4573
        %v4983 = vunpack.c.l.b16 %v4574
        %v4984 = vunpack.c.h.b16 %v4574
        %v4985 = vunpack.c.l.b16 %v4575
        %v4986 = vunpack.c.h.b16 %v4575
        %v4987 = vunpack.c.l.b16 %v4576
        %v4988 = vunpack.c.h.b16 %v4576
        %v4989 = vunpack.c.l.b16 %v4577
        %v4990 = vunpack.c.h.b16 %v4577
        %v4991 = vunpack.c.l.b16 %v4578
        %v4992 = vunpack.c.h.b16 %v4578
        %v4993 = vunpack.c.l.b16 %v4579
        %v4994 = vunpack.c.h.b16 %v4579
        %v4995 = vunpack.c.l.b16 %v4580
        %v4996 = vunpack.c.h.b16 %v4580
        %v4997 = vpack.c.b16 %v4745, %v4741
        %v4998 = vpack.c.b16 %v4746, %v4742
        %v4999 = vpack.c.b16 %v4747, %v4743
        %v5000 = vpack.c.b16 %v4748, %v4744
        %v5001 = vpack.c.b16 %v4753, %v4749
        %v5002 = vpack.c.b16 %v4754, %v4750
        %v5003 = vpack.c.b16 %v4755, %v4751
        %v5004 = vpack.c.b16 %v4756, %v4752
        %v5005 = vpack.c.b16 %v4761, %v4757
        %v5006 = vpack.c.b16 %v4762, %v4758
        %v5007 = vpack.c.b16 %v4763, %v4759
        %v5008 = vpack.c.b16 %v4764, %v4760
        %v5009 = vpack.c.b16 %v4769, %v4765
        %v5010 = vpack.c.b16 %v4770, %v4766
        %v5011 = vpack.c.b16 %v4771, %v4767
        %v5012 = vpack.c.b16 %v4772, %v4768
        %v5013 = vpack.c.b16 %v4777, %v4773
        %v5014 = vpack.c.b16 %v4778, %v4774
        %v5015 = vpack.c.b16 %v4779, %v4775
        %v5016 = vpack.c.b16 %v4780, %v4776
        %v5017 = vpack.c.b16 %v4785, %v4781
        %v5018 = vpack.c.b16 %v4786, %v4782
        %v5019 = vpack.c.b16 %v4787, %v4783
        %v5020 = vpack.c.b16 %v4788, %v4784
        %v5021 = vpack.c.b16 %v4793, %v4789
        %v5022 = vpack.c.b16 %v4794, %v4790
        %v5023 = vpack.c.b16 %v4795, %v4791
        %v5024 = vpack.c.b16 %v4796, %v4792
        %v5025 = vpack.c.b16 %v4801, %v4797
        %v5026 = vpack.c.b16 %v4802, %v4798
        %v5027 = vpack.c.b16 %v4803, %v4799
        %v5028 = vpack.c.b16 %v4804, %v4800
        %v5029 = vpack.c.b16 %v4809, %v4805
        %v5030 = vpack.c.b16 %v4810, %v4806
        %v5031 = vpack.c.b16 %v4811, %v4807
        %v5032 = vpack.c.b16 %v4812, %v4808
        %v5033 = vpack.c.b16 %v4817, %v4813
        %v5034 = vpack.c.b16 %v4818, %v4814
        %v5035 = vpack.c.b16 %v4819, %v4815
        %v5036 = vpack.c.b16 %v4820, %v4816
        %v5037 = vpack.c.b16 %v4825, %v4821
        %v5038 = vpack.c.b16 %v4826, %v4822
        %v5039 = vpack.c.b16 %v4827, %v4823
        %v5040 = vpack.c.b16 %v4828, %v4824
        %v5041 = vpack.c.b16 %v4833, %v4829
        %v5042 = vpack.c.b16 %v4834, %v4830
        %v5043 = vpack.c.b16 %v4835, %v4831
        %v5044 = vpack.c.b16 %v4836, %v4832
        %v5045 = vpack.c.b16 %v4841, %v4837
        %v5046 = vpack.c.b16 %v4842, %v4838
        %v5047 = vpack.c.b16 %v4843, %v4839
        %v5048 = vpack.c.b16 %v4844, %v4840
        %v5049 = vpack.c.b16 %v4849, %v4845
        %v5050 = vpack.c.b16 %v4850, %v4846
        %v5051 = vpack.c.b16 %v4851, %v4847
        %v5052 = vpack.c.b16 %v4852, %v4848
        %v5053 = vpack.c.b16 %v4857, %v4853
        %v5054 = vpack.c.b16 %v4858, %v4854
        %v5055 = vpack.c.b16 %v4859, %v4855
        %v5056 = vpack.c.b16 %v4860, %v4856
        %v5057 = vpack.c.b16 %v4865, %v4861
        %v5058 = vpack.c.b16 %v4866, %v4862
        %v5059 = vpack.c.b16 %v4867, %v4863
        %v5060 = vpack.c.b16 %v4868, %v4864
        %v5061 = vpack.c.b16 %v4873, %v4869
        %v5062 = vpack.c.b16 %v4874, %v4870
        %v5063 = vpack.c.b16 %v4875, %v4871
        %v5064 = vpack.c.b16 %v4876, %v4872
        %v5065 = vpack.c.b16 %v4881, %v4877
        %v5066 = vpack.c.b16 %v4882, %v4878
        %v5067 = vpack.c.b16 %v4883, %v4879
        %v5068 = vpack.c.b16 %v4884, %v4880
        %v5069 = vpack.c.b16 %v4889, %v4885
        %v5070 = vpack.c.b16 %v4890, %v4886
        %v5071 = vpack.c.b16 %v4891, %v4887
        %v5072 = vpack.c.b16 %v4892, %v4888
        %v5073 = vpack.c.b16 %v4897, %v4893
        %v5074 = vpack.c.b16 %v4898, %v4894
        %v5075 = vpack.c.b16 %v4899, %v4895
        %v5076 = vpack.c.b16 %v4900, %v4896
        %v5077 = vpack.c.b16 %v4905, %v4901
        %v5078 = vpack.c.b16 %v4906, %v4902
        %v5079 = vpack.c.b16 %v4907, %v4903
        %v5080 = vpack.c.b16 %v4908, %v4904
        %v5081 = vpack.c.b16 %v4913, %v4909
        %v5082 = vpack.c.b16 %v4914, %v4910
        %v5083 = vpack.c.b16 %v4915, %v4911
        %v5084 = vpack.c.b16 %v4916, %v4912
        %v5085 = vpack.c.b16 %v4921, %v4917
        %v5086 = vpack.c.b16 %v4922, %v4918
        %v5087 = vpack.c.b16 %v4923, %v4919
        %v5088 = vpack.c.b16 %v4924, %v4920
        %v5089 = vpack.c.b16 %v4929, %v4925
        %v5090 = vpack.c.b16 %v4930, %v4926
        %v5091 = vpack.c.b16 %v4931, %v4927
        %v5092 = vpack.c.b16 %v4932, %v4928
        %v5093 = vpack.c.b16 %v4937, %v4933
        %v5094 = vpack.c.b16 %v4938, %v4934
        %v5095 = vpack.c.b16 %v4939, %v4935
        %v5096 = vpack.c.b16 %v4940, %v4936
        %v5097 = vpack.c.b16 %v4945, %v4941
        %v5098 = vpack.c.b16 %v4946, %v4942
        %v5099 = vpack.c.b16 %v4947, %v4943
        %v5100 = vpack.c.b16 %v4948, %v4944
        %v5101 = vpack.c.b16 %v4953, %v4949
        %v5102 = vpack.c.b16 %v4954, %v4950
        %v5103 = vpack.c.b16 %v4955, %v4951
        %v5104 = vpack.c.b16 %v4956, %v4952
        %v5105 = vpack.c.b16 %v4961, %v4957
        %v5106 = vpack.c.b16 %v4962, %v4958
        %v5107 = vpack.c.b16 %v4963, %v4959
        %v5108 = vpack.c.b16 %v4964, %v4960
        %v5109 = vpack.c.b16 %v4969, %v4965
        %v5110 = vpack.c.b16 %v4970, %v4966
        %v5111 = vpack.c.b16 %v4971, %v4967
        %v5112 = vpack.c.b16 %v4972, %v4968
        %v5113 = vpack.c.b16 %v4977, %v4973
        %v5114 = vpack.c.b16 %v4978, %v4974
        %v5115 = vpack.c.b16 %v4979, %v4975
        %v5116 = vpack.c.b16 %v4980, %v4976
        %v5117 = vpack.c.b16 %v4985, %v4981
        %v5118 = vpack.c.b16 %v4986, %v4982
        %v5119 = vpack.c.b16 %v4987, %v4983
        %v5120 = vpack.c.b16 %v4988, %v4984
        %v5121 = vpack.c.b16 %v4993, %v4989
        %v5122 = vpack.c.b16 %v4994, %v4990
        %v5123 = vpack.c.b16 %v4995, %v4991
        %v5124 = vpack.c.b16 %v4996, %v4992
        %5253 = vmatpush.bf16.msra.mxu0 %v5025
        %5254 = vmatpush.bf16.msra.mxu0 %v5021
        %5255 = vmatpush.bf16.msra.mxu0 %v5017
        %5256 = vmatpush.bf16.msra.mxu0 %v5013
        %5257 = vmatpush.bf16.msra.mxu0 %v5009
        %5258 = vmatpush.bf16.msra.mxu0 %v5005
        %5259 = vmatpush.bf16.msra.mxu0 %v5001
        %5260 = vmatpush.bf16.msra.mxu0 %v4997
        %5261 = vmatmul.bf16.gmra.mxu0 %v4587
        %v5262 = vpop.f32.mrf.mxu0
        %v5263 = vadd.f32 0.0, %v5262
        %v5264 = vpop.f32.mrf.mxu0
        %5265 = vdwg.mxu0
        %5266 = vmatpush.bf16.msra.mxu0 %v5057
        %5267 = vmatpush.bf16.msra.mxu0 %v5053
        %5268 = vmatpush.bf16.msra.mxu0 %v5049
        %5269 = vmatpush.bf16.msra.mxu0 %v5045
        %5270 = vmatpush.bf16.msra.mxu0 %v5041
        %5271 = vmatpush.bf16.msra.mxu0 %v5037
        %5272 = vmatpush.bf16.msra.mxu0 %v5033
        %5273 = vmatpush.bf16.msra.mxu0 %v5029
        %5274 = vmatmul.bf16.gmra.mxu0 %v4594
        %v5275 = vpop.f32.mrf.mxu0
        %v5276 = vadd.f32 %v5263, %v5275
        %v5277 = vpop.f32.mrf.mxu0
        %5278 = vdwg.mxu0
        %5279 = vmatpush.bf16.msra.mxu0 %v5089
        %5280 = vmatpush.bf16.msra.mxu0 %v5085
        %5281 = vmatpush.bf16.msra.mxu0 %v5081
        %5282 = vmatpush.bf16.msra.mxu0 %v5077
        %5283 = vmatpush.bf16.msra.mxu0 %v5073
        %5284 = vmatpush.bf16.msra.mxu0 %v5069
        %5285 = vmatpush.bf16.msra.mxu0 %v5065
        %5286 = vmatpush.bf16.msra.mxu0 %v5061
        %5287 = vmatmul.bf16.gmra.mxu0 %v4601
        %v5288 = vpop.f32.mrf.mxu0
        %v5289 = vadd.f32 %v5276, %v5288
        %v5290 = vpop.f32.mrf.mxu0
        %5291 = vdwg.mxu0
        %5292 = vmatpush.bf16.msra.mxu0 %v5121
        %5293 = vmatpush.bf16.msra.mxu0 %v5117
        %5294 = vmatpush.bf16.msra.mxu0 %v5113
        %5295 = vmatpush.bf16.msra.mxu0 %v5109
        %5296 = vmatpush.bf16.msra.mxu0 %v5105
        %5297 = vmatpush.bf16.msra.mxu0 %v5101
        %5298 = vmatpush.bf16.msra.mxu0 %v5097
        %5299 = vmatpush.bf16.msra.mxu0 %v5093
        %5300 = vmatmul.bf16.gmra.mxu0 %v4608
        %v5301 = vpop.f32.mrf.mxu0
        %v5302 = vadd.f32 %v5289, %v5301
        %v5303 = vpop.f32.mrf.mxu0
        %5304 = vdwg.mxu0
        %5305 = vmatpush.bf16.msra.mxu0 %v5026
        %5306 = vmatpush.bf16.msra.mxu0 %v5022
        %5307 = vmatpush.bf16.msra.mxu0 %v5018
        %5308 = vmatpush.bf16.msra.mxu0 %v5014
        %5309 = vmatpush.bf16.msra.mxu0 %v5010
        %5310 = vmatpush.bf16.msra.mxu0 %v5006
        %5311 = vmatpush.bf16.msra.mxu0 %v5002
        %5312 = vmatpush.bf16.msra.mxu0 %v4998
        %5313 = vmatmul.bf16.gmra.mxu0 %v4587
        %v5314 = vpop.f32.mrf.mxu0
        %v5315 = vadd.f32 0.0, %v5314
        %v5316 = vpop.f32.mrf.mxu0
        %5317 = vdwg.mxu0
        %5318 = vmatpush.bf16.msra.mxu0 %v5058
        %5319 = vmatpush.bf16.msra.mxu0 %v5054
        %5320 = vmatpush.bf16.msra.mxu0 %v5050
        %5321 = vmatpush.bf16.msra.mxu0 %v5046
        %5322 = vmatpush.bf16.msra.mxu0 %v5042
        %5323 = vmatpush.bf16.msra.mxu0 %v5038
        %5324 = vmatpush.bf16.msra.mxu0 %v5034
        %5325 = vmatpush.bf16.msra.mxu0 %v5030
        %5326 = vmatmul.bf16.gmra.mxu0 %v4594
        %v5327 = vpop.f32.mrf.mxu0
        %v5328 = vadd.f32 %v5315, %v5327
        %v5329 = vpop.f32.mrf.mxu0
        %5330 = vdwg.mxu0
        %5331 = vmatpush.bf16.msra.mxu0 %v5090
        %5332 = vmatpush.bf16.msra.mxu0 %v5086
        %5333 = vmatpush.bf16.msra.mxu0 %v5082
        %5334 = vmatpush.bf16.msra.mxu0 %v5078
        %5335 = vmatpush.bf16.msra.mxu0 %v5074
        %5336 = vmatpush.bf16.msra.mxu0 %v5070
        %5337 = vmatpush.bf16.msra.mxu0 %v5066
        %5338 = vmatpush.bf16.msra.mxu0 %v5062
        %5339 = vmatmul.bf16.gmra.mxu0 %v4601
        %v5340 = vpop.f32.mrf.mxu0
        %v5341 = vadd.f32 %v5328, %v5340
        %v5342 = vpop.f32.mrf.mxu0
        %5343 = vdwg.mxu0
        %5344 = vmatpush.bf16.msra.mxu0 %v5122
        %5345 = vmatpush.bf16.msra.mxu0 %v5118
        %5346 = vmatpush.bf16.msra.mxu0 %v5114
        %5347 = vmatpush.bf16.msra.mxu0 %v5110
        %5348 = vmatpush.bf16.msra.mxu0 %v5106
        %5349 = vmatpush.bf16.msra.mxu0 %v5102
        %5350 = vmatpush.bf16.msra.mxu0 %v5098
        %5351 = vmatpush.bf16.msra.mxu0 %v5094
        %5352 = vmatmul.bf16.gmra.mxu0 %v4608
        %v5353 = vpop.f32.mrf.mxu0
        %v5354 = vadd.f32 %v5341, %v5353
        %v5355 = vpop.f32.mrf.mxu0
        %5356 = vdwg.mxu0
        %5357 = vmatpush.bf16.msra.mxu0 %v5027
        %5358 = vmatpush.bf16.msra.mxu0 %v5023
        %5359 = vmatpush.bf16.msra.mxu0 %v5019
        %5360 = vmatpush.bf16.msra.mxu0 %v5015
        %5361 = vmatpush.bf16.msra.mxu0 %v5011
        %5362 = vmatpush.bf16.msra.mxu0 %v5007
        %5363 = vmatpush.bf16.msra.mxu0 %v5003
        %5364 = vmatpush.bf16.msra.mxu0 %v4999
        %5365 = vmatmul.bf16.gmra.mxu0 %v4587
        %v5366 = vpop.f32.mrf.mxu0
        %v5367 = vadd.f32 0.0, %v5366
        %v5368 = vpop.f32.mrf.mxu0
        %5369 = vdwg.mxu0
        %5370 = vmatpush.bf16.msra.mxu0 %v5059
        %5371 = vmatpush.bf16.msra.mxu0 %v5055
        %5372 = vmatpush.bf16.msra.mxu0 %v5051
        %5373 = vmatpush.bf16.msra.mxu0 %v5047
        %5374 = vmatpush.bf16.msra.mxu0 %v5043
        %5375 = vmatpush.bf16.msra.mxu0 %v5039
        %5376 = vmatpush.bf16.msra.mxu0 %v5035
        %5377 = vmatpush.bf16.msra.mxu0 %v5031
        %5378 = vmatmul.bf16.gmra.mxu0 %v4594
        %v5379 = vpop.f32.mrf.mxu0
        %v5380 = vadd.f32 %v5367, %v5379
        %v5381 = vpop.f32.mrf.mxu0
        %5382 = vdwg.mxu0
        %5383 = vmatpush.bf16.msra.mxu0 %v5091
        %5384 = vmatpush.bf16.msra.mxu0 %v5087
        %5385 = vmatpush.bf16.msra.mxu0 %v5083
        %5386 = vmatpush.bf16.msra.mxu0 %v5079
        %5387 = vmatpush.bf16.msra.mxu0 %v5075
        %5388 = vmatpush.bf16.msra.mxu0 %v5071
        %5389 = vmatpush.bf16.msra.mxu0 %v5067
        %5390 = vmatpush.bf16.msra.mxu0 %v5063
        %5391 = vmatmul.bf16.gmra.mxu0 %v4601
        %v5392 = vpop.f32.mrf.mxu0
        %v5393 = vadd.f32 %v5380, %v5392
        %v5394 = vpop.f32.mrf.mxu0
        %5395 = vdwg.mxu0
        %5396 = vmatpush.bf16.msra.mxu0 %v5123
        %5397 = vmatpush.bf16.msra.mxu0 %v5119
        %5398 = vmatpush.bf16.msra.mxu0 %v5115
        %5399 = vmatpush.bf16.msra.mxu0 %v5111
        %5400 = vmatpush.bf16.msra.mxu0 %v5107
        %5401 = vmatpush.bf16.msra.mxu0 %v5103
        %5402 = vmatpush.bf16.msra.mxu0 %v5099
        %5403 = vmatpush.bf16.msra.mxu0 %v5095
        %5404 = vmatmul.bf16.gmra.mxu0 %v4608
        %v5405 = vpop.f32.mrf.mxu0
        %v5406 = vadd.f32 %v5393, %v5405
        %v5407 = vpop.f32.mrf.mxu0
        %5408 = vdwg.mxu0
        %5409 = vmatpush.bf16.msra.mxu0 %v5028
        %5410 = vmatpush.bf16.msra.mxu0 %v5024
        %5411 = vmatpush.bf16.msra.mxu0 %v5020
        %5412 = vmatpush.bf16.msra.mxu0 %v5016
        %5413 = vmatpush.bf16.msra.mxu0 %v5012
        %5414 = vmatpush.bf16.msra.mxu0 %v5008
        %5415 = vmatpush.bf16.msra.mxu0 %v5004
        %5416 = vmatpush.bf16.msra.mxu0 %v5000
        %5417 = vmatmul.bf16.gmra.mxu0 %v4587
        %v5418 = vpop.f32.mrf.mxu0
        %v5419 = vadd.f32 0.0, %v5418
        %v5420 = vpop.f32.mrf.mxu0
        %5421 = vdwg.mxu0
        %5422 = vmatpush.bf16.msra.mxu0 %v5060
        %5423 = vmatpush.bf16.msra.mxu0 %v5056
        %5424 = vmatpush.bf16.msra.mxu0 %v5052
        %5425 = vmatpush.bf16.msra.mxu0 %v5048
        %5426 = vmatpush.bf16.msra.mxu0 %v5044
        %5427 = vmatpush.bf16.msra.mxu0 %v5040
        %5428 = vmatpush.bf16.msra.mxu0 %v5036
        %5429 = vmatpush.bf16.msra.mxu0 %v5032
        %5430 = vmatmul.bf16.gmra.mxu0 %v4594
        %v5431 = vpop.f32.mrf.mxu0
        %v5432 = vadd.f32 %v5419, %v5431
        %v5433 = vpop.f32.mrf.mxu0
        %5434 = vdwg.mxu0
        %5435 = vmatpush.bf16.msra.mxu0 %v5092
        %5436 = vmatpush.bf16.msra.mxu0 %v5088
        %5437 = vmatpush.bf16.msra.mxu0 %v5084
        %5438 = vmatpush.bf16.msra.mxu0 %v5080
        %5439 = vmatpush.bf16.msra.mxu0 %v5076
        %5440 = vmatpush.bf16.msra.mxu0 %v5072
        %5441 = vmatpush.bf16.msra.mxu0 %v5068
        %5442 = vmatpush.bf16.msra.mxu0 %v5064
        %5443 = vmatmul.bf16.gmra.mxu0 %v4601
        %v5444 = vpop.f32.mrf.mxu0
        %v5445 = vadd.f32 %v5432, %v5444
        %v5446 = vpop.f32.mrf.mxu0
        %5447 = vdwg.mxu0
        %5448 = vmatpush.bf16.msra.mxu0 %v5124
        %5449 = vmatpush.bf16.msra.mxu0 %v5120
        %5450 = vmatpush.bf16.msra.mxu0 %v5116
        %5451 = vmatpush.bf16.msra.mxu0 %v5112
        %5452 = vmatpush.bf16.msra.mxu0 %v5108
        %5453 = vmatpush.bf16.msra.mxu0 %v5104
        %5454 = vmatpush.bf16.msra.mxu0 %v5100
        %5455 = vmatpush.bf16.msra.mxu0 %v5096
        %5456 = vmatmul.bf16.gmra.mxu0 %v4608
        %v5457 = vpop.f32.mrf.mxu0
        %v5458 = vadd.f32 %v5445, %v5457
        %v5459 = vpop.f32.mrf.mxu0
        %5460 = vdwg.mxu0
        %v5461 = vadd.f32 %v4436, %v5302
        %v5462 = vadd.f32 %v4437, %v5354
        %v5463 = vadd.f32 %v4438, %v5406
        %v5464 = vadd.f32 %v4439, %v5458
        %v5465 = vld [vmem:[#allocation2] sm:$0xfc]
        %v5466 = vld [vmem:[#allocation2 + $0x8] sm:$0xfc]
        %v5467 = vld [vmem:[#allocation2 + $0x10] sm:$0xfc]
        %v5468 = vld [vmem:[#allocation2 + $0x18] sm:$0xfc]
        %v5469 = vld [vmem:[#allocation2 + $0x20] sm:$0x3]
        %v5470 = vld [vmem:[#allocation2 + $0x28] sm:$0x3]
        %v5471 = vld [vmem:[#allocation2 + $0x30] sm:$0x3]
        %v5472 = vld [vmem:[#allocation2 + $0x38] sm:$0x3]
        %v5473 = vpack.c.bf16 %v5469, %v5465
        %v5474 = vpack.c.bf16 %v5470, %v5466
        %v5475 = vpack.c.bf16 %v5471, %v5467
        %v5476 = vpack.c.bf16 %v5472, %v5468
        %s5477 = scalar_lea.vmem [#allocation7], 2048
        %v5478 = vld [vmem:[%s5477] sm:$0xff]
        %v5479 = vld [vmem:[%s5477 + $0x8] sm:$0xff]
        %v5480 = vld [vmem:[%s5477 + $0x10] sm:$0xff]
        %v5481 = vld [vmem:[%s5477 + $0x18] sm:$0xff]
        %v5482 = vld [vmem:[%s5477 + $0x20] sm:$0xff]
        %v5483 = vld [vmem:[%s5477 + $0x28] sm:$0xff]
        %v5484 = vld [vmem:[%s5477 + $0x30] sm:$0xff]
        %v5485 = vld [vmem:[%s5477 + $0x38] sm:$0xff]
        %v5486 = vld [vmem:[%s5477 + $0x40] sm:$0xff]
        %v5487 = vld [vmem:[%s5477 + $0x48] sm:$0xff]
        %v5488 = vld [vmem:[%s5477 + $0x50] sm:$0xff]
        %v5489 = vld [vmem:[%s5477 + $0x58] sm:$0xff]
        %v5490 = vld [vmem:[%s5477 + $0x60] sm:$0xff]
        %v5491 = vld [vmem:[%s5477 + $0x68] sm:$0xff]
        %v5492 = vld [vmem:[%s5477 + $0x70] sm:$0xff]
        %v5493 = vld [vmem:[%s5477 + $0x78] sm:$0xff]
        %v5494 = vld [vmem:[%s5477 + $0x80] sm:$0xff]
        %v5495 = vld [vmem:[%s5477 + $0x88] sm:$0xff]
        %v5496 = vld [vmem:[%s5477 + $0x90] sm:$0xff]
        %v5497 = vld [vmem:[%s5477 + $0x98] sm:$0xff]
        %v5498 = vld [vmem:[%s5477 + $0xa0] sm:$0xff]
        %v5499 = vld [vmem:[%s5477 + $0xa8] sm:$0xff]
        %v5500 = vld [vmem:[%s5477 + $0xb0] sm:$0xff]
        %v5501 = vld [vmem:[%s5477 + $0xb8] sm:$0xff]
        %v5502 = vld [vmem:[%s5477 + $0xc0] sm:$0xff]
        %v5503 = vld [vmem:[%s5477 + $0xc8] sm:$0xff]
        %v5504 = vld [vmem:[%s5477 + $0xd0] sm:$0xff]
        %v5505 = vld [vmem:[%s5477 + $0xd8] sm:$0xff]
        %v5506 = vld [vmem:[%s5477 + $0xe0] sm:$0xff]
        %v5507 = vld [vmem:[%s5477 + $0xe8] sm:$0xff]
        %v5508 = vld [vmem:[%s5477 + $0xf0] sm:$0xff]
        %v5509 = vld [vmem:[%s5477 + $0xf8] sm:$0xff]
        %v5510 = vld [vmem:[%s5477 + $0x100] sm:$0xff]
        %v5511 = vld [vmem:[%s5477 + $0x108] sm:$0xff]
        %v5512 = vld [vmem:[%s5477 + $0x110] sm:$0xff]
        %v5513 = vld [vmem:[%s5477 + $0x118] sm:$0xff]
        %v5514 = vld [vmem:[%s5477 + $0x120] sm:$0xff]
        %v5515 = vld [vmem:[%s5477 + $0x128] sm:$0xff]
        %v5516 = vld [vmem:[%s5477 + $0x130] sm:$0xff]
        %v5517 = vld [vmem:[%s5477 + $0x138] sm:$0xff]
        %v5518 = vld [vmem:[%s5477 + $0x140] sm:$0xff]
        %v5519 = vld [vmem:[%s5477 + $0x148] sm:$0xff]
        %v5520 = vld [vmem:[%s5477 + $0x150] sm:$0xff]
        %v5521 = vld [vmem:[%s5477 + $0x158] sm:$0xff]
        %v5522 = vld [vmem:[%s5477 + $0x160] sm:$0xff]
        %v5523 = vld [vmem:[%s5477 + $0x168] sm:$0xff]
        %v5524 = vld [vmem:[%s5477 + $0x170] sm:$0xff]
        %v5525 = vld [vmem:[%s5477 + $0x178] sm:$0xff]
        %v5526 = vld [vmem:[%s5477 + $0x180] sm:$0xff]
        %v5527 = vld [vmem:[%s5477 + $0x188] sm:$0xff]
        %v5528 = vld [vmem:[%s5477 + $0x190] sm:$0xff]
        %v5529 = vld [vmem:[%s5477 + $0x198] sm:$0xff]
        %v5530 = vld [vmem:[%s5477 + $0x1a0] sm:$0xff]
        %v5531 = vld [vmem:[%s5477 + $0x1a8] sm:$0xff]
        %v5532 = vld [vmem:[%s5477 + $0x1b0] sm:$0xff]
        %v5533 = vld [vmem:[%s5477 + $0x1b8] sm:$0xff]
        %v5534 = vld [vmem:[%s5477 + $0x1c0] sm:$0xff]
        %v5535 = vld [vmem:[%s5477 + $0x1c8] sm:$0xff]
        %v5536 = vld [vmem:[%s5477 + $0x1d0] sm:$0xff]
        %v5537 = vld [vmem:[%s5477 + $0x1d8] sm:$0xff]
        %v5538 = vld [vmem:[%s5477 + $0x1e0] sm:$0xff]
        %v5539 = vld [vmem:[%s5477 + $0x1e8] sm:$0xff]
        %v5540 = vld [vmem:[%s5477 + $0x1f0] sm:$0xff]
        %v5541 = vld [vmem:[%s5477 + $0x1f8] sm:$0xff]
        %v5542 = vld [vmem:[%s5477 + $0x200] sm:$0xff]
        %v5543 = vld [vmem:[%s5477 + $0x208] sm:$0xff]
        %v5544 = vld [vmem:[%s5477 + $0x210] sm:$0xff]
        %v5545 = vld [vmem:[%s5477 + $0x218] sm:$0xff]
        %v5546 = vld [vmem:[%s5477 + $0x220] sm:$0xff]
        %v5547 = vld [vmem:[%s5477 + $0x228] sm:$0xff]
        %v5548 = vld [vmem:[%s5477 + $0x230] sm:$0xff]
        %v5549 = vld [vmem:[%s5477 + $0x238] sm:$0xff]
        %v5550 = vld [vmem:[%s5477 + $0x240] sm:$0xff]
        %v5551 = vld [vmem:[%s5477 + $0x248] sm:$0xff]
        %v5552 = vld [vmem:[%s5477 + $0x250] sm:$0xff]
        %v5553 = vld [vmem:[%s5477 + $0x258] sm:$0xff]
        %v5554 = vld [vmem:[%s5477 + $0x260] sm:$0xff]
        %v5555 = vld [vmem:[%s5477 + $0x268] sm:$0xff]
        %v5556 = vld [vmem:[%s5477 + $0x270] sm:$0xff]
        %v5557 = vld [vmem:[%s5477 + $0x278] sm:$0xff]
        %v5558 = vld [vmem:[%s5477 + $0x280] sm:$0xff]
        %v5559 = vld [vmem:[%s5477 + $0x288] sm:$0xff]
        %v5560 = vld [vmem:[%s5477 + $0x290] sm:$0xff]
        %v5561 = vld [vmem:[%s5477 + $0x298] sm:$0xff]
        %v5562 = vld [vmem:[%s5477 + $0x2a0] sm:$0xff]
        %v5563 = vld [vmem:[%s5477 + $0x2a8] sm:$0xff]
        %v5564 = vld [vmem:[%s5477 + $0x2b0] sm:$0xff]
        %v5565 = vld [vmem:[%s5477 + $0x2b8] sm:$0xff]
        %v5566 = vld [vmem:[%s5477 + $0x2c0] sm:$0xff]
        %v5567 = vld [vmem:[%s5477 + $0x2c8] sm:$0xff]
        %v5568 = vld [vmem:[%s5477 + $0x2d0] sm:$0xff]
        %v5569 = vld [vmem:[%s5477 + $0x2d8] sm:$0xff]
        %v5570 = vld [vmem:[%s5477 + $0x2e0] sm:$0xff]
        %v5571 = vld [vmem:[%s5477 + $0x2e8] sm:$0xff]
        %v5572 = vld [vmem:[%s5477 + $0x2f0] sm:$0xff]
        %v5573 = vld [vmem:[%s5477 + $0x2f8] sm:$0xff]
        %v5574 = vld [vmem:[%s5477 + $0x300] sm:$0xff]
        %v5575 = vld [vmem:[%s5477 + $0x308] sm:$0xff]
        %v5576 = vld [vmem:[%s5477 + $0x310] sm:$0xff]
        %v5577 = vld [vmem:[%s5477 + $0x318] sm:$0xff]
        %v5578 = vld [vmem:[%s5477 + $0x320] sm:$0xff]
        %v5579 = vld [vmem:[%s5477 + $0x328] sm:$0xff]
        %v5580 = vld [vmem:[%s5477 + $0x330] sm:$0xff]
        %v5581 = vld [vmem:[%s5477 + $0x338] sm:$0xff]
        %v5582 = vld [vmem:[%s5477 + $0x340] sm:$0xff]
        %v5583 = vld [vmem:[%s5477 + $0x348] sm:$0xff]
        %v5584 = vld [vmem:[%s5477 + $0x350] sm:$0xff]
        %v5585 = vld [vmem:[%s5477 + $0x358] sm:$0xff]
        %v5586 = vld [vmem:[%s5477 + $0x360] sm:$0xff]
        %v5587 = vld [vmem:[%s5477 + $0x368] sm:$0xff]
        %v5588 = vld [vmem:[%s5477 + $0x370] sm:$0xff]
        %v5589 = vld [vmem:[%s5477 + $0x378] sm:$0xff]
        %v5590 = vld [vmem:[%s5477 + $0x380] sm:$0xff]
        %v5591 = vld [vmem:[%s5477 + $0x388] sm:$0xff]
        %v5592 = vld [vmem:[%s5477 + $0x390] sm:$0xff]
        %v5593 = vld [vmem:[%s5477 + $0x398] sm:$0xff]
        %v5594 = vld [vmem:[%s5477 + $0x3a0] sm:$0xff]
        %v5595 = vld [vmem:[%s5477 + $0x3a8] sm:$0xff]
        %v5596 = vld [vmem:[%s5477 + $0x3b0] sm:$0xff]
        %v5597 = vld [vmem:[%s5477 + $0x3b8] sm:$0xff]
        %v5598 = vld [vmem:[%s5477 + $0x3c0] sm:$0xff]
        %v5599 = vld [vmem:[%s5477 + $0x3c8] sm:$0xff]
        %v5600 = vld [vmem:[%s5477 + $0x3d0] sm:$0xff]
        %v5601 = vld [vmem:[%s5477 + $0x3d8] sm:$0xff]
        %v5602 = vld [vmem:[%s5477 + $0x3e0] sm:$0xff]
        %v5603 = vld [vmem:[%s5477 + $0x3e8] sm:$0xff]
        %v5604 = vld [vmem:[%s5477 + $0x3f0] sm:$0xff]
        %v5605 = vld [vmem:[%s5477 + $0x3f8] sm:$0xff]
        %v5610 = vrot.slane %v5473, 1
        %v5611 = vrot.slane %v5474, 1
        %v5612 = vrot.slane %v5475, 1
        %v5613 = vrot.slane %v5476, 1
        %v5746 = vunpack.c.l.b16 %v5478
        %v5747 = vunpack.c.h.b16 %v5478
        %v5748 = vunpack.c.l.b16 %v5479
        %v5749 = vunpack.c.h.b16 %v5479
        %v5750 = vunpack.c.l.b16 %v5480
        %v5751 = vunpack.c.h.b16 %v5480
        %v5752 = vunpack.c.l.b16 %v5481
        %v5753 = vunpack.c.h.b16 %v5481
        %v5754 = vunpack.c.l.b16 %v5482
        %v5755 = vunpack.c.h.b16 %v5482
        %v5756 = vunpack.c.l.b16 %v5483
        %v5757 = vunpack.c.h.b16 %v5483
        %v5758 = vunpack.c.l.b16 %v5484
        %v5759 = vunpack.c.h.b16 %v5484
        %v5760 = vunpack.c.l.b16 %v5485
        %v5761 = vunpack.c.h.b16 %v5485
        %v5762 = vunpack.c.l.b16 %v5486
        %v5763 = vunpack.c.h.b16 %v5486
        %v5764 = vunpack.c.l.b16 %v5487
        %v5765 = vunpack.c.h.b16 %v5487
        %v5766 = vunpack.c.l.b16 %v5488
        %v5767 = vunpack.c.h.b16 %v5488
        %v5768 = vunpack.c.l.b16 %v5489
        %v5769 = vunpack.c.h.b16 %v5489
        %v5770 = vunpack.c.l.b16 %v5490
        %v5771 = vunpack.c.h.b16 %v5490
        %v5772 = vunpack.c.l.b16 %v5491
        %v5773 = vunpack.c.h.b16 %v5491
        %v5774 = vunpack.c.l.b16 %v5492
        %v5775 = vunpack.c.h.b16 %v5492
        %v5776 = vunpack.c.l.b16 %v5493
        %v5777 = vunpack.c.h.b16 %v5493
        %v5778 = vunpack.c.l.b16 %v5494
        %v5779 = vunpack.c.h.b16 %v5494
        %v5780 = vunpack.c.l.b16 %v5495
        %v5781 = vunpack.c.h.b16 %v5495
        %v5782 = vunpack.c.l.b16 %v5496
        %v5783 = vunpack.c.h.b16 %v5496
        %v5784 = vunpack.c.l.b16 %v5497
        %v5785 = vunpack.c.h.b16 %v5497
        %v5786 = vunpack.c.l.b16 %v5498
        %v5787 = vunpack.c.h.b16 %v5498
        %v5788 = vunpack.c.l.b16 %v5499
        %v5789 = vunpack.c.h.b16 %v5499
        %v5790 = vunpack.c.l.b16 %v5500
        %v5791 = vunpack.c.h.b16 %v5500
        %v5792 = vunpack.c.l.b16 %v5501
        %v5793 = vunpack.c.h.b16 %v5501
        %v5794 = vunpack.c.l.b16 %v5502
        %v5795 = vunpack.c.h.b16 %v5502
        %v5796 = vunpack.c.l.b16 %v5503
        %v5797 = vunpack.c.h.b16 %v5503
        %v5798 = vunpack.c.l.b16 %v5504
        %v5799 = vunpack.c.h.b16 %v5504
        %v5800 = vunpack.c.l.b16 %v5505
        %v5801 = vunpack.c.h.b16 %v5505
        %v5802 = vunpack.c.l.b16 %v5506
        %v5803 = vunpack.c.h.b16 %v5506
        %v5804 = vunpack.c.l.b16 %v5507
        %v5805 = vunpack.c.h.b16 %v5507
        %v5806 = vunpack.c.l.b16 %v5508
        %v5807 = vunpack.c.h.b16 %v5508
        %v5808 = vunpack.c.l.b16 %v5509
        %v5809 = vunpack.c.h.b16 %v5509
        %v5810 = vunpack.c.l.b16 %v5510
        %v5811 = vunpack.c.h.b16 %v5510
        %v5812 = vunpack.c.l.b16 %v5511
        %v5813 = vunpack.c.h.b16 %v5511
        %v5814 = vunpack.c.l.b16 %v5512
        %v5815 = vunpack.c.h.b16 %v5512
        %v5816 = vunpack.c.l.b16 %v5513
        %v5817 = vunpack.c.h.b16 %v5513
        %v5818 = vunpack.c.l.b16 %v5514
        %v5819 = vunpack.c.h.b16 %v5514
        %v5820 = vunpack.c.l.b16 %v5515
        %v5821 = vunpack.c.h.b16 %v5515
        %v5822 = vunpack.c.l.b16 %v5516
        %v5823 = vunpack.c.h.b16 %v5516
        %v5824 = vunpack.c.l.b16 %v5517
        %v5825 = vunpack.c.h.b16 %v5517
        %v5826 = vunpack.c.l.b16 %v5518
        %v5827 = vunpack.c.h.b16 %v5518
        %v5828 = vunpack.c.l.b16 %v5519
        %v5829 = vunpack.c.h.b16 %v5519
        %v5830 = vunpack.c.l.b16 %v5520
        %v5831 = vunpack.c.h.b16 %v5520
        %v5832 = vunpack.c.l.b16 %v5521
        %v5833 = vunpack.c.h.b16 %v5521
        %v5834 = vunpack.c.l.b16 %v5522
        %v5835 = vunpack.c.h.b16 %v5522
        %v5836 = vunpack.c.l.b16 %v5523
        %v5837 = vunpack.c.h.b16 %v5523
        %v5838 = vunpack.c.l.b16 %v5524
        %v5839 = vunpack.c.h.b16 %v5524
        %v5840 = vunpack.c.l.b16 %v5525
        %v5841 = vunpack.c.h.b16 %v5525
        %v5842 = vunpack.c.l.b16 %v5526
        %v5843 = vunpack.c.h.b16 %v5526
        %v5844 = vunpack.c.l.b16 %v5527
        %v5845 = vunpack.c.h.b16 %v5527
        %v5846 = vunpack.c.l.b16 %v5528
        %v5847 = vunpack.c.h.b16 %v5528
        %v5848 = vunpack.c.l.b16 %v5529
        %v5849 = vunpack.c.h.b16 %v5529
        %v5850 = vunpack.c.l.b16 %v5530
        %v5851 = vunpack.c.h.b16 %v5530
        %v5852 = vunpack.c.l.b16 %v5531
        %v5853 = vunpack.c.h.b16 %v5531
        %v5854 = vunpack.c.l.b16 %v5532
        %v5855 = vunpack.c.h.b16 %v5532
        %v5856 = vunpack.c.l.b16 %v5533
        %v5857 = vunpack.c.h.b16 %v5533
        %v5858 = vunpack.c.l.b16 %v5534
        %v5859 = vunpack.c.h.b16 %v5534
        %v5860 = vunpack.c.l.b16 %v5535
        %v5861 = vunpack.c.h.b16 %v5535
        %v5862 = vunpack.c.l.b16 %v5536
        %v5863 = vunpack.c.h.b16 %v5536
        %v5864 = vunpack.c.l.b16 %v5537
        %v5865 = vunpack.c.h.b16 %v5537
        %v5866 = vunpack.c.l.b16 %v5538
        %v5867 = vunpack.c.h.b16 %v5538
        %v5868 = vunpack.c.l.b16 %v5539
        %v5869 = vunpack.c.h.b16 %v5539
        %v5870 = vunpack.c.l.b16 %v5540
        %v5871 = vunpack.c.h.b16 %v5540
        %v5872 = vunpack.c.l.b16 %v5541
        %v5873 = vunpack.c.h.b16 %v5541
        %v5874 = vunpack.c.l.b16 %v5542
        %v5875 = vunpack.c.h.b16 %v5542
        %v5876 = vunpack.c.l.b16 %v5543
        %v5877 = vunpack.c.h.b16 %v5543
        %v5878 = vunpack.c.l.b16 %v5544
        %v5879 = vunpack.c.h.b16 %v5544
        %v5880 = vunpack.c.l.b16 %v5545
        %v5881 = vunpack.c.h.b16 %v5545
        %v5882 = vunpack.c.l.b16 %v5546
        %v5883 = vunpack.c.h.b16 %v5546
        %v5884 = vunpack.c.l.b16 %v5547
        %v5885 = vunpack.c.h.b16 %v5547
        %v5886 = vunpack.c.l.b16 %v5548
        %v5887 = vunpack.c.h.b16 %v5548
        %v5888 = vunpack.c.l.b16 %v5549
        %v5889 = vunpack.c.h.b16 %v5549
        %v5890 = vunpack.c.l.b16 %v5550
        %v5891 = vunpack.c.h.b16 %v5550
        %v5892 = vunpack.c.l.b16 %v5551
        %v5893 = vunpack.c.h.b16 %v5551
        %v5894 = vunpack.c.l.b16 %v5552
        %v5895 = vunpack.c.h.b16 %v5552
        %v5896 = vunpack.c.l.b16 %v5553
        %v5897 = vunpack.c.h.b16 %v5553
        %v5898 = vunpack.c.l.b16 %v5554
        %v5899 = vunpack.c.h.b16 %v5554
        %v5900 = vunpack.c.l.b16 %v5555
        %v5901 = vunpack.c.h.b16 %v5555
        %v5902 = vunpack.c.l.b16 %v5556
        %v5903 = vunpack.c.h.b16 %v5556
        %v5904 = vunpack.c.l.b16 %v5557
        %v5905 = vunpack.c.h.b16 %v5557
        %v5906 = vunpack.c.l.b16 %v5558
        %v5907 = vunpack.c.h.b16 %v5558
        %v5908 = vunpack.c.l.b16 %v5559
        %v5909 = vunpack.c.h.b16 %v5559
        %v5910 = vunpack.c.l.b16 %v5560
        %v5911 = vunpack.c.h.b16 %v5560
        %v5912 = vunpack.c.l.b16 %v5561
        %v5913 = vunpack.c.h.b16 %v5561
        %v5914 = vunpack.c.l.b16 %v5562
        %v5915 = vunpack.c.h.b16 %v5562
        %v5916 = vunpack.c.l.b16 %v5563
        %v5917 = vunpack.c.h.b16 %v5563
        %v5918 = vunpack.c.l.b16 %v5564
        %v5919 = vunpack.c.h.b16 %v5564
        %v5920 = vunpack.c.l.b16 %v5565
        %v5921 = vunpack.c.h.b16 %v5565
        %v5922 = vunpack.c.l.b16 %v5566
        %v5923 = vunpack.c.h.b16 %v5566
        %v5924 = vunpack.c.l.b16 %v5567
        %v5925 = vunpack.c.h.b16 %v5567
        %v5926 = vunpack.c.l.b16 %v5568
        %v5927 = vunpack.c.h.b16 %v5568
        %v5928 = vunpack.c.l.b16 %v5569
        %v5929 = vunpack.c.h.b16 %v5569
        %v5930 = vunpack.c.l.b16 %v5570
        %v5931 = vunpack.c.h.b16 %v5570
        %v5932 = vunpack.c.l.b16 %v5571
        %v5933 = vunpack.c.h.b16 %v5571
        %v5934 = vunpack.c.l.b16 %v5572
        %v5935 = vunpack.c.h.b16 %v5572
        %v5936 = vunpack.c.l.b16 %v5573
        %v5937 = vunpack.c.h.b16 %v5573
        %v5938 = vunpack.c.l.b16 %v5574
        %v5939 = vunpack.c.h.b16 %v5574
        %v5940 = vunpack.c.l.b16 %v5575
        %v5941 = vunpack.c.h.b16 %v5575
        %v5942 = vunpack.c.l.b16 %v5576
        %v5943 = vunpack.c.h.b16 %v5576
        %v5944 = vunpack.c.l.b16 %v5577
        %v5945 = vunpack.c.h.b16 %v5577
        %v5946 = vunpack.c.l.b16 %v5578
        %v5947 = vunpack.c.h.b16 %v5578
        %v5948 = vunpack.c.l.b16 %v5579
        %v5949 = vunpack.c.h.b16 %v5579
        %v5950 = vunpack.c.l.b16 %v5580
        %v5951 = vunpack.c.h.b16 %v5580
        %v5952 = vunpack.c.l.b16 %v5581
        %v5953 = vunpack.c.h.b16 %v5581
        %v5954 = vunpack.c.l.b16 %v5582
        %v5955 = vunpack.c.h.b16 %v5582
        %v5956 = vunpack.c.l.b16 %v5583
        %v5957 = vunpack.c.h.b16 %v5583
        %v5958 = vunpack.c.l.b16 %v5584
        %v5959 = vunpack.c.h.b16 %v5584
        %v5960 = vunpack.c.l.b16 %v5585
        %v5961 = vunpack.c.h.b16 %v5585
        %v5962 = vunpack.c.l.b16 %v5586
        %v5963 = vunpack.c.h.b16 %v5586
        %v5964 = vunpack.c.l.b16 %v5587
        %v5965 = vunpack.c.h.b16 %v5587
        %v5966 = vunpack.c.l.b16 %v5588
        %v5967 = vunpack.c.h.b16 %v5588
        %v5968 = vunpack.c.l.b16 %v5589
        %v5969 = vunpack.c.h.b16 %v5589
        %v5970 = vunpack.c.l.b16 %v5590
        %v5971 = vunpack.c.h.b16 %v5590
        %v5972 = vunpack.c.l.b16 %v5591
        %v5973 = vunpack.c.h.b16 %v5591
        %v5974 = vunpack.c.l.b16 %v5592
        %v5975 = vunpack.c.h.b16 %v5592
        %v5976 = vunpack.c.l.b16 %v5593
        %v5977 = vunpack.c.h.b16 %v5593
        %v5978 = vunpack.c.l.b16 %v5594
        %v5979 = vunpack.c.h.b16 %v5594
        %v5980 = vunpack.c.l.b16 %v5595
        %v5981 = vunpack.c.h.b16 %v5595
        %v5982 = vunpack.c.l.b16 %v5596
        %v5983 = vunpack.c.h.b16 %v5596
        %v5984 = vunpack.c.l.b16 %v5597
        %v5985 = vunpack.c.h.b16 %v5597
        %v5986 = vunpack.c.l.b16 %v5598
        %v5987 = vunpack.c.h.b16 %v5598
        %v5988 = vunpack.c.l.b16 %v5599
        %v5989 = vunpack.c.h.b16 %v5599
        %v5990 = vunpack.c.l.b16 %v5600
        %v5991 = vunpack.c.h.b16 %v5600
        %v5992 = vunpack.c.l.b16 %v5601
        %v5993 = vunpack.c.h.b16 %v5601
        %v5994 = vunpack.c.l.b16 %v5602
        %v5995 = vunpack.c.h.b16 %v5602
        %v5996 = vunpack.c.l.b16 %v5603
        %v5997 = vunpack.c.h.b16 %v5603
        %v5998 = vunpack.c.l.b16 %v5604
        %v5999 = vunpack.c.h.b16 %v5604
        %v6000 = vunpack.c.l.b16 %v5605
        %v6001 = vunpack.c.h.b16 %v5605
        %v6002 = vpack.c.b16 %v5750, %v5746
        %v6003 = vpack.c.b16 %v5751, %v5747
        %v6004 = vpack.c.b16 %v5752, %v5748
        %v6005 = vpack.c.b16 %v5753, %v5749
        %v6006 = vpack.c.b16 %v5758, %v5754
        %v6007 = vpack.c.b16 %v5759, %v5755
        %v6008 = vpack.c.b16 %v5760, %v5756
        %v6009 = vpack.c.b16 %v5761, %v5757
        %v6010 = vpack.c.b16 %v5766, %v5762
        %v6011 = vpack.c.b16 %v5767, %v5763
        %v6012 = vpack.c.b16 %v5768, %v5764
        %v6013 = vpack.c.b16 %v5769, %v5765
        %v6014 = vpack.c.b16 %v5774, %v5770
        %v6015 = vpack.c.b16 %v5775, %v5771
        %v6016 = vpack.c.b16 %v5776, %v5772
        %v6017 = vpack.c.b16 %v5777, %v5773
        %v6018 = vpack.c.b16 %v5782, %v5778
        %v6019 = vpack.c.b16 %v5783, %v5779
        %v6020 = vpack.c.b16 %v5784, %v5780
        %v6021 = vpack.c.b16 %v5785, %v5781
        %v6022 = vpack.c.b16 %v5790, %v5786
        %v6023 = vpack.c.b16 %v5791, %v5787
        %v6024 = vpack.c.b16 %v5792, %v5788
        %v6025 = vpack.c.b16 %v5793, %v5789
        %v6026 = vpack.c.b16 %v5798, %v5794
        %v6027 = vpack.c.b16 %v5799, %v5795
        %v6028 = vpack.c.b16 %v5800, %v5796
        %v6029 = vpack.c.b16 %v5801, %v5797
        %v6030 = vpack.c.b16 %v5806, %v5802
        %v6031 = vpack.c.b16 %v5807, %v5803
        %v6032 = vpack.c.b16 %v5808, %v5804
        %v6033 = vpack.c.b16 %v5809, %v5805
        %v6034 = vpack.c.b16 %v5814, %v5810
        %v6035 = vpack.c.b16 %v5815, %v5811
        %v6036 = vpack.c.b16 %v5816, %v5812
        %v6037 = vpack.c.b16 %v5817, %v5813
        %v6038 = vpack.c.b16 %v5822, %v5818
        %v6039 = vpack.c.b16 %v5823, %v5819
        %v6040 = vpack.c.b16 %v5824, %v5820
        %v6041 = vpack.c.b16 %v5825, %v5821
        %v6042 = vpack.c.b16 %v5830, %v5826
        %v6043 = vpack.c.b16 %v5831, %v5827
        %v6044 = vpack.c.b16 %v5832, %v5828
        %v6045 = vpack.c.b16 %v5833, %v5829
        %v6046 = vpack.c.b16 %v5838, %v5834
        %v6047 = vpack.c.b16 %v5839, %v5835
        %v6048 = vpack.c.b16 %v5840, %v5836
        %v6049 = vpack.c.b16 %v5841, %v5837
        %v6050 = vpack.c.b16 %v5846, %v5842
        %v6051 = vpack.c.b16 %v5847, %v5843
        %v6052 = vpack.c.b16 %v5848, %v5844
        %v6053 = vpack.c.b16 %v5849, %v5845
        %v6054 = vpack.c.b16 %v5854, %v5850
        %v6055 = vpack.c.b16 %v5855, %v5851
        %v6056 = vpack.c.b16 %v5856, %v5852
        %v6057 = vpack.c.b16 %v5857, %v5853
        %v6058 = vpack.c.b16 %v5862, %v5858
        %v6059 = vpack.c.b16 %v5863, %v5859
        %v6060 = vpack.c.b16 %v5864, %v5860
        %v6061 = vpack.c.b16 %v5865, %v5861
        %v6062 = vpack.c.b16 %v5870, %v5866
        %v6063 = vpack.c.b16 %v5871, %v5867
        %v6064 = vpack.c.b16 %v5872, %v5868
        %v6065 = vpack.c.b16 %v5873, %v5869
        %v6066 = vpack.c.b16 %v5878, %v5874
        %v6067 = vpack.c.b16 %v5879, %v5875
        %v6068 = vpack.c.b16 %v5880, %v5876
        %v6069 = vpack.c.b16 %v5881, %v5877
        %v6070 = vpack.c.b16 %v5886, %v5882
        %v6071 = vpack.c.b16 %v5887, %v5883
        %v6072 = vpack.c.b16 %v5888, %v5884
        %v6073 = vpack.c.b16 %v5889, %v5885
        %v6074 = vpack.c.b16 %v5894, %v5890
        %v6075 = vpack.c.b16 %v5895, %v5891
        %v6076 = vpack.c.b16 %v5896, %v5892
        %v6077 = vpack.c.b16 %v5897, %v5893
        %v6078 = vpack.c.b16 %v5902, %v5898
        %v6079 = vpack.c.b16 %v5903, %v5899
        %v6080 = vpack.c.b16 %v5904, %v5900
        %v6081 = vpack.c.b16 %v5905, %v5901
        %v6082 = vpack.c.b16 %v5910, %v5906
        %v6083 = vpack.c.b16 %v5911, %v5907
        %v6084 = vpack.c.b16 %v5912, %v5908
        %v6085 = vpack.c.b16 %v5913, %v5909
        %v6086 = vpack.c.b16 %v5918, %v5914
        %v6087 = vpack.c.b16 %v5919, %v5915
        %v6088 = vpack.c.b16 %v5920, %v5916
        %v6089 = vpack.c.b16 %v5921, %v5917
        %v6090 = vpack.c.b16 %v5926, %v5922
        %v6091 = vpack.c.b16 %v5927, %v5923
        %v6092 = vpack.c.b16 %v5928, %v5924
        %v6093 = vpack.c.b16 %v5929, %v5925
        %v6094 = vpack.c.b16 %v5934, %v5930
        %v6095 = vpack.c.b16 %v5935, %v5931
        %v6096 = vpack.c.b16 %v5936, %v5932
        %v6097 = vpack.c.b16 %v5937, %v5933
        %v6098 = vpack.c.b16 %v5942, %v5938
        %v6099 = vpack.c.b16 %v5943, %v5939
        %v6100 = vpack.c.b16 %v5944, %v5940
        %v6101 = vpack.c.b16 %v5945, %v5941
        %v6102 = vpack.c.b16 %v5950, %v5946
        %v6103 = vpack.c.b16 %v5951, %v5947
        %v6104 = vpack.c.b16 %v5952, %v5948
        %v6105 = vpack.c.b16 %v5953, %v5949
        %v6106 = vpack.c.b16 %v5958, %v5954
        %v6107 = vpack.c.b16 %v5959, %v5955
        %v6108 = vpack.c.b16 %v5960, %v5956
        %v6109 = vpack.c.b16 %v5961, %v5957
        %v6110 = vpack.c.b16 %v5966, %v5962
        %v6111 = vpack.c.b16 %v5967, %v5963
        %v6112 = vpack.c.b16 %v5968, %v5964
        %v6113 = vpack.c.b16 %v5969, %v5965
        %v6114 = vpack.c.b16 %v5974, %v5970
        %v6115 = vpack.c.b16 %v5975, %v5971
        %v6116 = vpack.c.b16 %v5976, %v5972
        %v6117 = vpack.c.b16 %v5977, %v5973
        %v6118 = vpack.c.b16 %v5982, %v5978
        %v6119 = vpack.c.b16 %v5983, %v5979
        %v6120 = vpack.c.b16 %v5984, %v5980
        %v6121 = vpack.c.b16 %v5985, %v5981
        %v6122 = vpack.c.b16 %v5990, %v5986
        %v6123 = vpack.c.b16 %v5991, %v5987
        %v6124 = vpack.c.b16 %v5992, %v5988
        %v6125 = vpack.c.b16 %v5993, %v5989
        %v6126 = vpack.c.b16 %v5998, %v5994
        %v6127 = vpack.c.b16 %v5999, %v5995
        %v6128 = vpack.c.b16 %v6000, %v5996
        %v6129 = vpack.c.b16 %v6001, %v5997
        %6258 = vmatpush.bf16.msra.mxu0 %v6030
        %6259 = vmatpush.bf16.msra.mxu0 %v6026
        %6260 = vmatpush.bf16.msra.mxu0 %v6022
        %6261 = vmatpush.bf16.msra.mxu0 %v6018
        %6262 = vmatpush.bf16.msra.mxu0 %v6014
        %6263 = vmatpush.bf16.msra.mxu0 %v6010
        %6264 = vmatpush.bf16.msra.mxu0 %v6006
        %6265 = vmatpush.bf16.msra.mxu0 %v6002
        %6266 = vmatmul.bf16.gmra.mxu0 %v5610
        %v6267 = vpop.f32.mrf.mxu0
        %v6268 = vadd.f32 0.0, %v6267
        %v6269 = vpop.f32.mrf.mxu0
        %6270 = vdwg.mxu0
        %6271 = vmatpush.bf16.msra.mxu0 %v6062
        %6272 = vmatpush.bf16.msra.mxu0 %v6058
        %6273 = vmatpush.bf16.msra.mxu0 %v6054
        %6274 = vmatpush.bf16.msra.mxu0 %v6050
        %6275 = vmatpush.bf16.msra.mxu0 %v6046
        %6276 = vmatpush.bf16.msra.mxu0 %v6042
        %6277 = vmatpush.bf16.msra.mxu0 %v6038
        %6278 = vmatpush.bf16.msra.mxu0 %v6034
        %6279 = vmatmul.bf16.gmra.mxu0 %v5611
        %v6280 = vpop.f32.mrf.mxu0
        %v6281 = vadd.f32 %v6268, %v6280
        %v6282 = vpop.f32.mrf.mxu0
        %6283 = vdwg.mxu0
        %6284 = vmatpush.bf16.msra.mxu0 %v6094
        %6285 = vmatpush.bf16.msra.mxu0 %v6090
        %6286 = vmatpush.bf16.msra.mxu0 %v6086
        %6287 = vmatpush.bf16.msra.mxu0 %v6082
        %6288 = vmatpush.bf16.msra.mxu0 %v6078
        %6289 = vmatpush.bf16.msra.mxu0 %v6074
        %6290 = vmatpush.bf16.msra.mxu0 %v6070
        %6291 = vmatpush.bf16.msra.mxu0 %v6066
        %6292 = vmatmul.bf16.gmra.mxu0 %v5612
        %v6293 = vpop.f32.mrf.mxu0
        %v6294 = vadd.f32 %v6281, %v6293
        %v6295 = vpop.f32.mrf.mxu0
        %6296 = vdwg.mxu0
        %6297 = vmatpush.bf16.msra.mxu0 %v6126
        %6298 = vmatpush.bf16.msra.mxu0 %v6122
        %6299 = vmatpush.bf16.msra.mxu0 %v6118
        %6300 = vmatpush.bf16.msra.mxu0 %v6114
        %6301 = vmatpush.bf16.msra.mxu0 %v6110
        %6302 = vmatpush.bf16.msra.mxu0 %v6106
        %6303 = vmatpush.bf16.msra.mxu0 %v6102
        %6304 = vmatpush.bf16.msra.mxu0 %v6098
        %6305 = vmatmul.bf16.gmra.mxu0 %v5613
        %v6306 = vpop.f32.mrf.mxu0
        %v6307 = vadd.f32 %v6294, %v6306
        %v6308 = vpop.f32.mrf.mxu0
        %6309 = vdwg.mxu0
        %6310 = vmatpush.bf16.msra.mxu0 %v6031
        %6311 = vmatpush.bf16.msra.mxu0 %v6027
        %6312 = vmatpush.bf16.msra.mxu0 %v6023
        %6313 = vmatpush.bf16.msra.mxu0 %v6019
        %6314 = vmatpush.bf16.msra.mxu0 %v6015
        %6315 = vmatpush.bf16.msra.mxu0 %v6011
        %6316 = vmatpush.bf16.msra.mxu0 %v6007
        %6317 = vmatpush.bf16.msra.mxu0 %v6003
        %6318 = vmatmul.bf16.gmra.mxu0 %v5610
        %v6319 = vpop.f32.mrf.mxu0
        %v6320 = vadd.f32 0.0, %v6319
        %v6321 = vpop.f32.mrf.mxu0
        %6322 = vdwg.mxu0
        %6323 = vmatpush.bf16.msra.mxu0 %v6063
        %6324 = vmatpush.bf16.msra.mxu0 %v6059
        %6325 = vmatpush.bf16.msra.mxu0 %v6055
        %6326 = vmatpush.bf16.msra.mxu0 %v6051
        %6327 = vmatpush.bf16.msra.mxu0 %v6047
        %6328 = vmatpush.bf16.msra.mxu0 %v6043
        %6329 = vmatpush.bf16.msra.mxu0 %v6039
        %6330 = vmatpush.bf16.msra.mxu0 %v6035
        %6331 = vmatmul.bf16.gmra.mxu0 %v5611
        %v6332 = vpop.f32.mrf.mxu0
        %v6333 = vadd.f32 %v6320, %v6332
        %v6334 = vpop.f32.mrf.mxu0
        %6335 = vdwg.mxu0
        %6336 = vmatpush.bf16.msra.mxu0 %v6095
        %6337 = vmatpush.bf16.msra.mxu0 %v6091
        %6338 = vmatpush.bf16.msra.mxu0 %v6087
        %6339 = vmatpush.bf16.msra.mxu0 %v6083
        %6340 = vmatpush.bf16.msra.mxu0 %v6079
        %6341 = vmatpush.bf16.msra.mxu0 %v6075
        %6342 = vmatpush.bf16.msra.mxu0 %v6071
        %6343 = vmatpush.bf16.msra.mxu0 %v6067
        %6344 = vmatmul.bf16.gmra.mxu0 %v5612
        %v6345 = vpop.f32.mrf.mxu0
        %v6346 = vadd.f32 %v6333, %v6345
        %v6347 = vpop.f32.mrf.mxu0
        %6348 = vdwg.mxu0
        %6349 = vmatpush.bf16.msra.mxu0 %v6127
        %6350 = vmatpush.bf16.msra.mxu0 %v6123
        %6351 = vmatpush.bf16.msra.mxu0 %v6119
        %6352 = vmatpush.bf16.msra.mxu0 %v6115
        %6353 = vmatpush.bf16.msra.mxu0 %v6111
        %6354 = vmatpush.bf16.msra.mxu0 %v6107
        %6355 = vmatpush.bf16.msra.mxu0 %v6103
        %6356 = vmatpush.bf16.msra.mxu0 %v6099
        %6357 = vmatmul.bf16.gmra.mxu0 %v5613
        %v6358 = vpop.f32.mrf.mxu0
        %v6359 = vadd.f32 %v6346, %v6358
        %v6360 = vpop.f32.mrf.mxu0
        %6361 = vdwg.mxu0
        %6362 = vmatpush.bf16.msra.mxu0 %v6032
        %6363 = vmatpush.bf16.msra.mxu0 %v6028
        %6364 = vmatpush.bf16.msra.mxu0 %v6024
        %6365 = vmatpush.bf16.msra.mxu0 %v6020
        %6366 = vmatpush.bf16.msra.mxu0 %v6016
        %6367 = vmatpush.bf16.msra.mxu0 %v6012
        %6368 = vmatpush.bf16.msra.mxu0 %v6008
        %6369 = vmatpush.bf16.msra.mxu0 %v6004
        %6370 = vmatmul.bf16.gmra.mxu0 %v5610
        %v6371 = vpop.f32.mrf.mxu0
        %v6372 = vadd.f32 0.0, %v6371
        %v6373 = vpop.f32.mrf.mxu0
        %6374 = vdwg.mxu0
        %6375 = vmatpush.bf16.msra.mxu0 %v6064
        %6376 = vmatpush.bf16.msra.mxu0 %v6060
        %6377 = vmatpush.bf16.msra.mxu0 %v6056
        %6378 = vmatpush.bf16.msra.mxu0 %v6052
        %6379 = vmatpush.bf16.msra.mxu0 %v6048
        %6380 = vmatpush.bf16.msra.mxu0 %v6044
        %6381 = vmatpush.bf16.msra.mxu0 %v6040
        %6382 = vmatpush.bf16.msra.mxu0 %v6036
        %6383 = vmatmul.bf16.gmra.mxu0 %v5611
        %v6384 = vpop.f32.mrf.mxu0
        %v6385 = vadd.f32 %v6372, %v6384
        %v6386 = vpop.f32.mrf.mxu0
        %6387 = vdwg.mxu0
        %6388 = vmatpush.bf16.msra.mxu0 %v6096
        %6389 = vmatpush.bf16.msra.mxu0 %v6092
        %6390 = vmatpush.bf16.msra.mxu0 %v6088
        %6391 = vmatpush.bf16.msra.mxu0 %v6084
        %6392 = vmatpush.bf16.msra.mxu0 %v6080
        %6393 = vmatpush.bf16.msra.mxu0 %v6076
        %6394 = vmatpush.bf16.msra.mxu0 %v6072
        %6395 = vmatpush.bf16.msra.mxu0 %v6068
        %6396 = vmatmul.bf16.gmra.mxu0 %v5612
        %v6397 = vpop.f32.mrf.mxu0
        %v6398 = vadd.f32 %v6385, %v6397
        %v6399 = vpop.f32.mrf.mxu0
        %6400 = vdwg.mxu0
        %6401 = vmatpush.bf16.msra.mxu0 %v6128
        %6402 = vmatpush.bf16.msra.mxu0 %v6124
        %6403 = vmatpush.bf16.msra.mxu0 %v6120
        %6404 = vmatpush.bf16.msra.mxu0 %v6116
        %6405 = vmatpush.bf16.msra.mxu0 %v6112
        %6406 = vmatpush.bf16.msra.mxu0 %v6108
        %6407 = vmatpush.bf16.msra.mxu0 %v6104
        %6408 = vmatpush.bf16.msra.mxu0 %v6100
        %6409 = vmatmul.bf16.gmra.mxu0 %v5613
        %v6410 = vpop.f32.mrf.mxu0
        %v6411 = vadd.f32 %v6398, %v6410
        %v6412 = vpop.f32.mrf.mxu0
        %6413 = vdwg.mxu0
        %6414 = vmatpush.bf16.msra.mxu0 %v6033
        %6415 = vmatpush.bf16.msra.mxu0 %v6029
        %6416 = vmatpush.bf16.msra.mxu0 %v6025
        %6417 = vmatpush.bf16.msra.mxu0 %v6021
        %6418 = vmatpush.bf16.msra.mxu0 %v6017
        %6419 = vmatpush.bf16.msra.mxu0 %v6013
        %6420 = vmatpush.bf16.msra.mxu0 %v6009
        %6421 = vmatpush.bf16.msra.mxu0 %v6005
        %6422 = vmatmul.bf16.gmra.mxu0 %v5610
        %v6423 = vpop.f32.mrf.mxu0
        %v6424 = vadd.f32 0.0, %v6423
        %v6425 = vpop.f32.mrf.mxu0
        %6426 = vdwg.mxu0
        %6427 = vmatpush.bf16.msra.mxu0 %v6065
        %6428 = vmatpush.bf16.msra.mxu0 %v6061
        %6429 = vmatpush.bf16.msra.mxu0 %v6057
        %6430 = vmatpush.bf16.msra.mxu0 %v6053
        %6431 = vmatpush.bf16.msra.mxu0 %v6049
        %6432 = vmatpush.bf16.msra.mxu0 %v6045
        %6433 = vmatpush.bf16.msra.mxu0 %v6041
        %6434 = vmatpush.bf16.msra.mxu0 %v6037
        %6435 = vmatmul.bf16.gmra.mxu0 %v5611
        %v6436 = vpop.f32.mrf.mxu0
        %v6437 = vadd.f32 %v6424, %v6436
        %v6438 = vpop.f32.mrf.mxu0
        %6439 = vdwg.mxu0
        %6440 = vmatpush.bf16.msra.mxu0 %v6097
        %6441 = vmatpush.bf16.msra.mxu0 %v6093
        %6442 = vmatpush.bf16.msra.mxu0 %v6089
        %6443 = vmatpush.bf16.msra.mxu0 %v6085
        %6444 = vmatpush.bf16.msra.mxu0 %v6081
        %6445 = vmatpush.bf16.msra.mxu0 %v6077
        %6446 = vmatpush.bf16.msra.mxu0 %v6073
        %6447 = vmatpush.bf16.msra.mxu0 %v6069
        %6448 = vmatmul.bf16.gmra.mxu0 %v5612
        %v6449 = vpop.f32.mrf.mxu0
        %v6450 = vadd.f32 %v6437, %v6449
        %v6451 = vpop.f32.mrf.mxu0
        %6452 = vdwg.mxu0
        %6453 = vmatpush.bf16.msra.mxu0 %v6129
        %6454 = vmatpush.bf16.msra.mxu0 %v6125
        %6455 = vmatpush.bf16.msra.mxu0 %v6121
        %6456 = vmatpush.bf16.msra.mxu0 %v6117
        %6457 = vmatpush.bf16.msra.mxu0 %v6113
        %6458 = vmatpush.bf16.msra.mxu0 %v6109
        %6459 = vmatpush.bf16.msra.mxu0 %v6105
        %6460 = vmatpush.bf16.msra.mxu0 %v6101
        %6461 = vmatmul.bf16.gmra.mxu0 %v5613
        %v6462 = vpop.f32.mrf.mxu0
        %v6463 = vadd.f32 %v6450, %v6462
        %v6464 = vpop.f32.mrf.mxu0
        %6465 = vdwg.mxu0
        %v6466 = vadd.f32 %v5461, %v6307
        %v6467 = vadd.f32 %v5462, %v6359
        %v6468 = vadd.f32 %v5463, %v6411
        %v6469 = vadd.f32 %v5464, %v6463
        %v6470 = vrot.slane %v6466, 4
        %v6471 = vadd.f32 %v6466, %v6470
        %v6472 = vrot.slane %v6471, 2
        %v6473 = vadd.f32 %v6471, %v6472
        %v6474 = vrot.slane %v6473, 1
        %v6475 = vadd.f32 %v6473, %v6474
        %v6476 = vrot.slane %v6467, 4
        %v6477 = vadd.f32 %v6467, %v6476
        %v6478 = vrot.slane %v6477, 2
        %v6479 = vadd.f32 %v6477, %v6478
        %v6480 = vrot.slane %v6479, 1
        %v6481 = vadd.f32 %v6479, %v6480
        %v6482 = vrot.slane %v6468, 4
        %v6483 = vadd.f32 %v6468, %v6482
        %v6484 = vrot.slane %v6483, 2
        %v6485 = vadd.f32 %v6483, %v6484
        %v6486 = vrot.slane %v6485, 1
        %v6487 = vadd.f32 %v6485, %v6486
        %v6488 = vrot.slane %v6469, 4
        %v6489 = vadd.f32 %v6469, %v6488
        %v6490 = vrot.slane %v6489, 2
        %v6491 = vadd.f32 %v6489, %v6490
        %v6492 = vrot.slane %v6491, 1
        %v6493 = vadd.f32 %v6491, %v6492
        %v6494 = vld [vmem:[%s5] sm:$0xff]
        %v6495 = vld [vmem:[%s5 + $0x8] sm:$0xff]
        %v6496 = vld [vmem:[%s5 + $0x10] sm:$0xff]
        %v6497 = vld [vmem:[%s5 + $0x18] sm:$0xff]
        %v6498 = vld [vmem:[%s5 + $0x20] sm:$0xff]
        %v6499 = vld [vmem:[%s5 + $0x28] sm:$0xff]
        %v6500 = vld [vmem:[%s5 + $0x30] sm:$0xff]
        %v6501 = vld [vmem:[%s5 + $0x38] sm:$0xff]
        %v6502 = vld [vmem:[%s5 + $0x40] sm:$0xff]
        %v6503 = vld [vmem:[%s5 + $0x48] sm:$0xff]
        %v6504 = vld [vmem:[%s5 + $0x50] sm:$0xff]
        %v6505 = vld [vmem:[%s5 + $0x58] sm:$0xff]
        %v6506 = vld [vmem:[%s5 + $0x60] sm:$0xff]
        %v6507 = vld [vmem:[%s5 + $0x68] sm:$0xff]
        %v6508 = vld [vmem:[%s5 + $0x70] sm:$0xff]
        %v6509 = vld [vmem:[%s5 + $0x78] sm:$0xff]
        %v6510 = vld [vmem:[%s5 + $0x80] sm:$0xff]
        %v6511 = vld [vmem:[%s5 + $0x88] sm:$0xff]
        %v6512 = vld [vmem:[%s5 + $0x90] sm:$0xff]
        %v6513 = vld [vmem:[%s5 + $0x98] sm:$0xff]
        %v6514 = vld [vmem:[%s5 + $0xa0] sm:$0xff]
        %v6515 = vld [vmem:[%s5 + $0xa8] sm:$0xff]
        %v6516 = vld [vmem:[%s5 + $0xb0] sm:$0xff]
        %v6517 = vld [vmem:[%s5 + $0xb8] sm:$0xff]
        %v6518 = vld [vmem:[%s5 + $0xc0] sm:$0xff]
        %v6519 = vld [vmem:[%s5 + $0xc8] sm:$0xff]
        %v6520 = vld [vmem:[%s5 + $0xd0] sm:$0xff]
        %v6521 = vld [vmem:[%s5 + $0xd8] sm:$0xff]
        %v6522 = vld [vmem:[%s5 + $0xe0] sm:$0xff]
        %v6523 = vld [vmem:[%s5 + $0xe8] sm:$0xff]
        %v6524 = vld [vmem:[%s5 + $0xf0] sm:$0xff]
        %v6525 = vld [vmem:[%s5 + $0xf8] sm:$0xff]
        %v6526 = vld [vmem:[%s5 + $0x100] sm:$0xff]
        %v6527 = vld [vmem:[%s5 + $0x108] sm:$0xff]
        %v6528 = vld [vmem:[%s5 + $0x110] sm:$0xff]
        %v6529 = vld [vmem:[%s5 + $0x118] sm:$0xff]
        %v6530 = vld [vmem:[%s5 + $0x120] sm:$0xff]
        %v6531 = vld [vmem:[%s5 + $0x128] sm:$0xff]
        %v6532 = vld [vmem:[%s5 + $0x130] sm:$0xff]
        %v6533 = vld [vmem:[%s5 + $0x138] sm:$0xff]
        %v6534 = vld [vmem:[%s5 + $0x140] sm:$0xff]
        %v6535 = vld [vmem:[%s5 + $0x148] sm:$0xff]
        %v6536 = vld [vmem:[%s5 + $0x150] sm:$0xff]
        %v6537 = vld [vmem:[%s5 + $0x158] sm:$0xff]
        %v6538 = vld [vmem:[%s5 + $0x160] sm:$0xff]
        %v6539 = vld [vmem:[%s5 + $0x168] sm:$0xff]
        %v6540 = vld [vmem:[%s5 + $0x170] sm:$0xff]
        %v6541 = vld [vmem:[%s5 + $0x178] sm:$0xff]
        %v6542 = vld [vmem:[%s5 + $0x180] sm:$0xff]
        %v6543 = vld [vmem:[%s5 + $0x188] sm:$0xff]
        %v6544 = vld [vmem:[%s5 + $0x190] sm:$0xff]
        %v6545 = vld [vmem:[%s5 + $0x198] sm:$0xff]
        %v6546 = vld [vmem:[%s5 + $0x1a0] sm:$0xff]
        %v6547 = vld [vmem:[%s5 + $0x1a8] sm:$0xff]
        %v6548 = vld [vmem:[%s5 + $0x1b0] sm:$0xff]
        %v6549 = vld [vmem:[%s5 + $0x1b8] sm:$0xff]
        %v6550 = vld [vmem:[%s5 + $0x1c0] sm:$0xff]
        %v6551 = vld [vmem:[%s5 + $0x1c8] sm:$0xff]
        %v6552 = vld [vmem:[%s5 + $0x1d0] sm:$0xff]
        %v6553 = vld [vmem:[%s5 + $0x1d8] sm:$0xff]
        %v6554 = vld [vmem:[%s5 + $0x1e0] sm:$0xff]
        %v6555 = vld [vmem:[%s5 + $0x1e8] sm:$0xff]
        %v6556 = vld [vmem:[%s5 + $0x1f0] sm:$0xff]
        %v6557 = vld [vmem:[%s5 + $0x1f8] sm:$0xff]
        %6558 = vmatpush.msra.mxu0 %v6509
        %6559 = vmatpush.msra.mxu0 %v6508
        %6560 = vmatpush.msra.mxu0 %v6507
        %6561 = vmatpush.msra.mxu0 %v6506
        %6562 = vmatpush.msra.mxu0 %v6505
        %6563 = vmatpush.msra.mxu0 %v6504
        %6564 = vmatpush.msra.mxu0 %v6503
        %6565 = vmatpush.msra.mxu0 %v6502
        %6566 = vmatpush.msra.mxu0 %v6501
        %6567 = vmatpush.msra.mxu0 %v6500
        %6568 = vmatpush.msra.mxu0 %v6499
        %6569 = vmatpush.msra.mxu0 %v6498
        %6570 = vmatpush.msra.mxu0 %v6497
        %6571 = vmatpush.msra.mxu0 %v6496
        %6572 = vmatpush.msra.mxu0 %v6495
        %6573 = vmatpush.msra.mxu0 %v6494
        %6574 = vmatmul.f32.gmra.mxu0 %v6475
        %v6575 = vpop.f32.mrf.mxu0
        %v6576 = vadd.f32 0.0, %v6575
        %6577 = vdwg.mxu0
        %6578 = vmatpush.msra.mxu0 %v6525
        %6579 = vmatpush.msra.mxu0 %v6524
        %6580 = vmatpush.msra.mxu0 %v6523
        %6581 = vmatpush.msra.mxu0 %v6522
        %6582 = vmatpush.msra.mxu0 %v6521
        %6583 = vmatpush.msra.mxu0 %v6520
        %6584 = vmatpush.msra.mxu0 %v6519
        %6585 = vmatpush.msra.mxu0 %v6518
        %6586 = vmatpush.msra.mxu0 %v6517
        %6587 = vmatpush.msra.mxu0 %v6516
        %6588 = vmatpush.msra.mxu0 %v6515
        %6589 = vmatpush.msra.mxu0 %v6514
        %6590 = vmatpush.msra.mxu0 %v6513
        %6591 = vmatpush.msra.mxu0 %v6512
        %6592 = vmatpush.msra.mxu0 %v6511
        %6593 = vmatpush.msra.mxu0 %v6510
        %6594 = vmatmul.f32.gmra.mxu0 %v6481
        %v6595 = vpop.f32.mrf.mxu0
        %v6596 = vadd.f32 %v6576, %v6595
        %6597 = vdwg.mxu0
        %6598 = vmatpush.msra.mxu0 %v6541
        %6599 = vmatpush.msra.mxu0 %v6540
        %6600 = vmatpush.msra.mxu0 %v6539
        %6601 = vmatpush.msra.mxu0 %v6538
        %6602 = vmatpush.msra.mxu0 %v6537
        %6603 = vmatpush.msra.mxu0 %v6536
        %6604 = vmatpush.msra.mxu0 %v6535
        %6605 = vmatpush.msra.mxu0 %v6534
        %6606 = vmatpush.msra.mxu0 %v6533
        %6607 = vmatpush.msra.mxu0 %v6532
        %6608 = vmatpush.msra.mxu0 %v6531
        %6609 = vmatpush.msra.mxu0 %v6530
        %6610 = vmatpush.msra.mxu0 %v6529
        %6611 = vmatpush.msra.mxu0 %v6528
        %6612 = vmatpush.msra.mxu0 %v6527
        %6613 = vmatpush.msra.mxu0 %v6526
        %6614 = vmatmul.f32.gmra.mxu0 %v6487
        %v6615 = vpop.f32.mrf.mxu0
        %v6616 = vadd.f32 %v6596, %v6615
        %6617 = vdwg.mxu0
        %6618 = vmatpush.msra.mxu0 %v6557
        %6619 = vmatpush.msra.mxu0 %v6556
        %6620 = vmatpush.msra.mxu0 %v6555
        %6621 = vmatpush.msra.mxu0 %v6554
        %6622 = vmatpush.msra.mxu0 %v6553
        %6623 = vmatpush.msra.mxu0 %v6552
        %6624 = vmatpush.msra.mxu0 %v6551
        %6625 = vmatpush.msra.mxu0 %v6550
        %6626 = vmatpush.msra.mxu0 %v6549
        %6627 = vmatpush.msra.mxu0 %v6548
        %6628 = vmatpush.msra.mxu0 %v6547
        %6629 = vmatpush.msra.mxu0 %v6546
        %6630 = vmatpush.msra.mxu0 %v6545
        %6631 = vmatpush.msra.mxu0 %v6544
        %6632 = vmatpush.msra.mxu0 %v6543
        %6633 = vmatpush.msra.mxu0 %v6542
        %6634 = vmatmul.f32.gmra.mxu0 %v6493
        %v6635 = vpop.f32.mrf.mxu0
        %v6636 = vadd.f32 %v6616, %v6635
        %6637 = vdwg.mxu0
        %v6638 = vld [vmem:[#allocation12] sm:$0xff]
        %v6639 = vld [vmem:[#allocation12 + $0x8] sm:$0xff]
        %v6640 = vld [vmem:[#allocation12 + $0x10] sm:$0xff]
        %v6641 = vld [vmem:[#allocation12 + $0x18] sm:$0xff]
        %v6643 = vsel %vm3078, %v6636, 0
        %6645 = vmatpush.msra.mxu0 0.0
        %6646 = vmatpush.msra.mxu0 0.0
        %6647 = vmatpush.msra.mxu0 0.0
        %6648 = vmatpush.msra.mxu0 0.0
        %6649 = vmatpush.msra.mxu0 0.0
        %6650 = vmatpush.msra.mxu0 0.0
        %6651 = vmatpush.msra.mxu0 0.0
        %6652 = vmatpush.msra.mxu0 0.0
        %6653 = vmatpush.msra.mxu0 0.0
        %6654 = vmatpush.msra.mxu0 0.0
        %6655 = vmatpush.msra.mxu0 0.0
        %6656 = vmatpush.msra.mxu0 0.0
        %6657 = vmatpush.msra.mxu0 0.0
        %6658 = vmatpush.msra.mxu0 0.0
        %6659 = vmatpush.msra.mxu0 0.0
        %6660 = vmatpush.msra.mxu0 %v6638
        %6661 = vmatmul.f32.gmra.mxu0 %v6643
        %v6662 = vpop.f32.mrf.mxu0
        %v6663 = vadd.f32 0.0, %v6662
        %6664 = vdwg.mxu0
        %6665 = vmatpush.msra.mxu0 0.0
        %6666 = vmatpush.msra.mxu0 0.0
        %6667 = vmatpush.msra.mxu0 0.0
        %6668 = vmatpush.msra.mxu0 0.0
        %6669 = vmatpush.msra.mxu0 0.0
        %6670 = vmatpush.msra.mxu0 0.0
        %6671 = vmatpush.msra.mxu0 0.0
        %6672 = vmatpush.msra.mxu0 0.0
        %6673 = vmatpush.msra.mxu0 0.0
        %6674 = vmatpush.msra.mxu0 0.0
        %6675 = vmatpush.msra.mxu0 0.0
        %6676 = vmatpush.msra.mxu0 0.0
        %6677 = vmatpush.msra.mxu0 0.0
        %6678 = vmatpush.msra.mxu0 0.0
        %6679 = vmatpush.msra.mxu0 0.0
        %6680 = vmatpush.msra.mxu0 %v6639
        %6681 = vmatmul.f32.gmra.mxu0 %v6643
        %v6682 = vpop.f32.mrf.mxu0
        %v6683 = vadd.f32 0.0, %v6682
        %6684 = vdwg.mxu0
        %6685 = vmatpush.msra.mxu0 0.0
        %6686 = vmatpush.msra.mxu0 0.0
        %6687 = vmatpush.msra.mxu0 0.0
        %6688 = vmatpush.msra.mxu0 0.0
        %6689 = vmatpush.msra.mxu0 0.0
        %6690 = vmatpush.msra.mxu0 0.0
        %6691 = vmatpush.msra.mxu0 0.0
        %6692 = vmatpush.msra.mxu0 0.0
        %6693 = vmatpush.msra.mxu0 0.0
        %6694 = vmatpush.msra.mxu0 0.0
        %6695 = vmatpush.msra.mxu0 0.0
        %6696 = vmatpush.msra.mxu0 0.0
        %6697 = vmatpush.msra.mxu0 0.0
        %6698 = vmatpush.msra.mxu0 0.0
        %6699 = vmatpush.msra.mxu0 0.0
        %6700 = vmatpush.msra.mxu0 %v6640
        %6701 = vmatmul.f32.gmra.mxu0 %v6643
        %v6702 = vpop.f32.mrf.mxu0
        %v6703 = vadd.f32 0.0, %v6702
        %6704 = vdwg.mxu0
        %6705 = vmatpush.msra.mxu0 0.0
        %6706 = vmatpush.msra.mxu0 0.0
        %6707 = vmatpush.msra.mxu0 0.0
        %6708 = vmatpush.msra.mxu0 0.0
        %6709 = vmatpush.msra.mxu0 0.0
        %6710 = vmatpush.msra.mxu0 0.0
        %6711 = vmatpush.msra.mxu0 0.0
        %6712 = vmatpush.msra.mxu0 0.0
        %6713 = vmatpush.msra.mxu0 0.0
        %6714 = vmatpush.msra.mxu0 0.0
        %6715 = vmatpush.msra.mxu0 0.0
        %6716 = vmatpush.msra.mxu0 0.0
        %6717 = vmatpush.msra.mxu0 0.0
        %6718 = vmatpush.msra.mxu0 0.0
        %6719 = vmatpush.msra.mxu0 0.0
        %6720 = vmatpush.msra.mxu0 %v6641
        %6721 = vmatmul.f32.gmra.mxu0 %v6643
        %v6722 = vpop.f32.mrf.mxu0
        %v6723 = vadd.f32 0.0, %v6722
        %6724 = vdwg.mxu0
        %v6725 = vperm.slane %v6663, 0
        %v6726 = vperm.slane %v6683, 0
        %v6727 = vperm.slane %v6703, 0
        %v6728 = vperm.slane %v6723, 0
        %v6729 = vsub.f32 %v6466, %v6725
        %v6730 = vsub.f32 %v6467, %v6726
        %v6731 = vsub.f32 %v6468, %v6727
        %v6732 = vsub.f32 %v6469, %v6728
        %v6733 = vmul.f32 %v6729, %v6729
        %v6734 = vmul.f32 %v6730, %v6730
        %v6735 = vmul.f32 %v6731, %v6731
        %v6736 = vmul.f32 %v6732, %v6732
        %v6737 = vrot.slane %v6733, 4
        %v6738 = vadd.f32 %v6733, %v6737
        %v6739 = vrot.slane %v6738, 2
        %v6740 = vadd.f32 %v6738, %v6739
        %v6741 = vrot.slane %v6740, 1
        %v6742 = vadd.f32 %v6740, %v6741
        %v6743 = vrot.slane %v6734, 4
        %v6744 = vadd.f32 %v6734, %v6743
        %v6745 = vrot.slane %v6744, 2
        %v6746 = vadd.f32 %v6744, %v6745
        %v6747 = vrot.slane %v6746, 1
        %v6748 = vadd.f32 %v6746, %v6747
        %v6749 = vrot.slane %v6735, 4
        %v6750 = vadd.f32 %v6735, %v6749
        %v6751 = vrot.slane %v6750, 2
        %v6752 = vadd.f32 %v6750, %v6751
        %v6753 = vrot.slane %v6752, 1
        %v6754 = vadd.f32 %v6752, %v6753
        %v6755 = vrot.slane %v6736, 4
        %v6756 = vadd.f32 %v6736, %v6755
        %v6757 = vrot.slane %v6756, 2
        %v6758 = vadd.f32 %v6756, %v6757
        %v6759 = vrot.slane %v6758, 1
        %v6760 = vadd.f32 %v6758, %v6759
        %6761 = vmatpush.msra.mxu0 %v6509
        %6762 = vmatpush.msra.mxu0 %v6508
        %6763 = vmatpush.msra.mxu0 %v6507
        %6764 = vmatpush.msra.mxu0 %v6506
        %6765 = vmatpush.msra.mxu0 %v6505
        %6766 = vmatpush.msra.mxu0 %v6504
        %6767 = vmatpush.msra.mxu0 %v6503
        %6768 = vmatpush.msra.mxu0 %v6502
        %6769 = vmatpush.msra.mxu0 %v6501
        %6770 = vmatpush.msra.mxu0 %v6500
        %6771 = vmatpush.msra.mxu0 %v6499
        %6772 = vmatpush.msra.mxu0 %v6498
        %6773 = vmatpush.msra.mxu0 %v6497
        %6774 = vmatpush.msra.mxu0 %v6496
        %6775 = vmatpush.msra.mxu0 %v6495
        %6776 = vmatpush.msra.mxu0 %v6494
        %6777 = vmatmul.f32.gmra.mxu0 %v6742
        %v6778 = vpop.f32.mrf.mxu0
        %v6779 = vadd.f32 0.0, %v6778
        %6780 = vdwg.mxu0
        %6781 = vmatpush.msra.mxu0 %v6525
        %6782 = vmatpush.msra.mxu0 %v6524
        %6783 = vmatpush.msra.mxu0 %v6523
        %6784 = vmatpush.msra.mxu0 %v6522
        %6785 = vmatpush.msra.mxu0 %v6521
        %6786 = vmatpush.msra.mxu0 %v6520
        %6787 = vmatpush.msra.mxu0 %v6519
        %6788 = vmatpush.msra.mxu0 %v6518
        %6789 = vmatpush.msra.mxu0 %v6517
        %6790 = vmatpush.msra.mxu0 %v6516
        %6791 = vmatpush.msra.mxu0 %v6515
        %6792 = vmatpush.msra.mxu0 %v6514
        %6793 = vmatpush.msra.mxu0 %v6513
        %6794 = vmatpush.msra.mxu0 %v6512
        %6795 = vmatpush.msra.mxu0 %v6511
        %6796 = vmatpush.msra.mxu0 %v6510
        %6797 = vmatmul.f32.gmra.mxu0 %v6748
        %v6798 = vpop.f32.mrf.mxu0
        %v6799 = vadd.f32 %v6779, %v6798
        %6800 = vdwg.mxu0
        %6801 = vmatpush.msra.mxu0 %v6541
        %6802 = vmatpush.msra.mxu0 %v6540
        %6803 = vmatpush.msra.mxu0 %v6539
        %6804 = vmatpush.msra.mxu0 %v6538
        %6805 = vmatpush.msra.mxu0 %v6537
        %6806 = vmatpush.msra.mxu0 %v6536
        %6807 = vmatpush.msra.mxu0 %v6535
        %6808 = vmatpush.msra.mxu0 %v6534
        %6809 = vmatpush.msra.mxu0 %v6533
        %6810 = vmatpush.msra.mxu0 %v6532
        %6811 = vmatpush.msra.mxu0 %v6531
        %6812 = vmatpush.msra.mxu0 %v6530
        %6813 = vmatpush.msra.mxu0 %v6529
        %6814 = vmatpush.msra.mxu0 %v6528
        %6815 = vmatpush.msra.mxu0 %v6527
        %6816 = vmatpush.msra.mxu0 %v6526
        %6817 = vmatmul.f32.gmra.mxu0 %v6754
        %v6818 = vpop.f32.mrf.mxu0
        %v6819 = vadd.f32 %v6799, %v6818
        %6820 = vdwg.mxu0
        %6821 = vmatpush.msra.mxu0 %v6557
        %6822 = vmatpush.msra.mxu0 %v6556
        %6823 = vmatpush.msra.mxu0 %v6555
        %6824 = vmatpush.msra.mxu0 %v6554
        %6825 = vmatpush.msra.mxu0 %v6553
        %6826 = vmatpush.msra.mxu0 %v6552
        %6827 = vmatpush.msra.mxu0 %v6551
        %6828 = vmatpush.msra.mxu0 %v6550
        %6829 = vmatpush.msra.mxu0 %v6549
        %6830 = vmatpush.msra.mxu0 %v6548
        %6831 = vmatpush.msra.mxu0 %v6547
        %6832 = vmatpush.msra.mxu0 %v6546
        %6833 = vmatpush.msra.mxu0 %v6545
        %6834 = vmatpush.msra.mxu0 %v6544
        %6835 = vmatpush.msra.mxu0 %v6543
        %6836 = vmatpush.msra.mxu0 %v6542
        %6837 = vmatmul.f32.gmra.mxu0 %v6760
        %v6838 = vpop.f32.mrf.mxu0
        %v6839 = vadd.f32 %v6819, %v6838
        %6840 = vdwg.mxu0
        %v6842 = vsel %vm3078, %v6839, 0
        %6844 = vmatpush.msra.mxu0 0.0
        %6845 = vmatpush.msra.mxu0 0.0
        %6846 = vmatpush.msra.mxu0 0.0
        %6847 = vmatpush.msra.mxu0 0.0
        %6848 = vmatpush.msra.mxu0 0.0
        %6849 = vmatpush.msra.mxu0 0.0
        %6850 = vmatpush.msra.mxu0 0.0
        %6851 = vmatpush.msra.mxu0 0.0
        %6852 = vmatpush.msra.mxu0 0.0
        %6853 = vmatpush.msra.mxu0 0.0
        %6854 = vmatpush.msra.mxu0 0.0
        %6855 = vmatpush.msra.mxu0 0.0
        %6856 = vmatpush.msra.mxu0 0.0
        %6857 = vmatpush.msra.mxu0 0.0
        %6858 = vmatpush.msra.mxu0 0.0
        %6859 = vmatpush.msra.mxu0 %v6638
        %6860 = vmatmul.f32.gmra.mxu0 %v6842
        %v6861 = vpop.f32.mrf.mxu0
        %v6862 = vadd.f32 1e-05, %v6861
        %6863 = vdwg.mxu0
        %6864 = vmatpush.msra.mxu0 0.0
        %6865 = vmatpush.msra.mxu0 0.0
        %6866 = vmatpush.msra.mxu0 0.0
        %6867 = vmatpush.msra.mxu0 0.0
        %6868 = vmatpush.msra.mxu0 0.0
        %6869 = vmatpush.msra.mxu0 0.0
        %6870 = vmatpush.msra.mxu0 0.0
        %6871 = vmatpush.msra.mxu0 0.0
        %6872 = vmatpush.msra.mxu0 0.0
        %6873 = vmatpush.msra.mxu0 0.0
        %6874 = vmatpush.msra.mxu0 0.0
        %6875 = vmatpush.msra.mxu0 0.0
        %6876 = vmatpush.msra.mxu0 0.0
        %6877 = vmatpush.msra.mxu0 0.0
        %6878 = vmatpush.msra.mxu0 0.0
        %6879 = vmatpush.msra.mxu0 %v6639
        %6880 = vmatmul.f32.gmra.mxu0 %v6842
        %v6881 = vpop.f32.mrf.mxu0
        %v6882 = vadd.f32 1e-05, %v6881
        %6883 = vdwg.mxu0
        %6884 = vmatpush.msra.mxu0 0.0
        %6885 = vmatpush.msra.mxu0 0.0
        %6886 = vmatpush.msra.mxu0 0.0
        %6887 = vmatpush.msra.mxu0 0.0
        %6888 = vmatpush.msra.mxu0 0.0
        %6889 = vmatpush.msra.mxu0 0.0
        %6890 = vmatpush.msra.mxu0 0.0
        %6891 = vmatpush.msra.mxu0 0.0
        %6892 = vmatpush.msra.mxu0 0.0
        %6893 = vmatpush.msra.mxu0 0.0
        %6894 = vmatpush.msra.mxu0 0.0
        %6895 = vmatpush.msra.mxu0 0.0
        %6896 = vmatpush.msra.mxu0 0.0
        %6897 = vmatpush.msra.mxu0 0.0
        %6898 = vmatpush.msra.mxu0 0.0
        %6899 = vmatpush.msra.mxu0 %v6640
        %6900 = vmatmul.f32.gmra.mxu0 %v6842
        %v6901 = vpop.f32.mrf.mxu0
        %v6902 = vadd.f32 1e-05, %v6901
        %6903 = vdwg.mxu0
        %6904 = vmatpush.msra.mxu0 0.0
        %6905 = vmatpush.msra.mxu0 0.0
        %6906 = vmatpush.msra.mxu0 0.0
        %6907 = vmatpush.msra.mxu0 0.0
        %6908 = vmatpush.msra.mxu0 0.0
        %6909 = vmatpush.msra.mxu0 0.0
        %6910 = vmatpush.msra.mxu0 0.0
        %6911 = vmatpush.msra.mxu0 0.0
        %6912 = vmatpush.msra.mxu0 0.0
        %6913 = vmatpush.msra.mxu0 0.0
        %6914 = vmatpush.msra.mxu0 0.0
        %6915 = vmatpush.msra.mxu0 0.0
        %6916 = vmatpush.msra.mxu0 0.0
        %6917 = vmatpush.msra.mxu0 0.0
        %6918 = vmatpush.msra.mxu0 0.0
        %6919 = vmatpush.msra.mxu0 %v6641
        %6920 = vmatmul.f32.gmra.mxu0 %v6842
        %v6921 = vpop.f32.mrf.mxu0
        %v6922 = vadd.f32 1e-05, %v6921
        %6923 = vdwg.mxu0
        %v6924 = vrsqrt.pop %v6862
        %v6925 = vmul.f32 %v6924, %v6862
        %v6926 = vmul.f32 %v6925, %v6924
        %v6927 = vmul.f32 0.5, %v6926
        %v6928 = vsub.f32 1.5, %v6927
        %v6929 = vmul.f32 %v6924, %v6928
        %vm6930 = vweird.f32 %v6862
        %vm6931 = vweird.f32 %v6924
        %vm6932 = vmor %vm6930, %vm6931
        %v6933 = vsel %vm6932, %v6924, %v6929
        %v6934 = vrsqrt.pop %v6882
        %v6935 = vmul.f32 %v6934, %v6882
        %v6936 = vmul.f32 %v6935, %v6934
        %v6937 = vmul.f32 0.5, %v6936
        %v6938 = vsub.f32 1.5, %v6937
        %v6939 = vmul.f32 %v6934, %v6938
        %vm6940 = vweird.f32 %v6882
        %vm6941 = vweird.f32 %v6934
        %vm6942 = vmor %vm6940, %vm6941
        %v6943 = vsel %vm6942, %v6934, %v6939
        %v6944 = vrsqrt.pop %v6902
        %v6945 = vmul.f32 %v6944, %v6902
        %v6946 = vmul.f32 %v6945, %v6944
        %v6947 = vmul.f32 0.5, %v6946
        %v6948 = vsub.f32 1.5, %v6947
        %v6949 = vmul.f32 %v6944, %v6948
        %vm6950 = vweird.f32 %v6902
        %vm6951 = vweird.f32 %v6944
        %vm6952 = vmor %vm6950, %vm6951
        %v6953 = vsel %vm6952, %v6944, %v6949
        %v6954 = vrsqrt.pop %v6922
        %v6955 = vmul.f32 %v6954, %v6922
        %v6956 = vmul.f32 %v6955, %v6954
        %v6957 = vmul.f32 0.5, %v6956
        %v6958 = vsub.f32 1.5, %v6957
        %v6959 = vmul.f32 %v6954, %v6958
        %vm6960 = vweird.f32 %v6922
        %vm6961 = vweird.f32 %v6954
        %vm6962 = vmor %vm6960, %vm6961
        %v6963 = vsel %vm6962, %v6954, %v6959
        %v6964 = vperm.slane %v6933, 0
        %v6965 = vperm.slane %v6943, 0
        %v6966 = vperm.slane %v6953, 0
        %v6967 = vperm.slane %v6963, 0
        %v6968 = vmul.f32 %v6729, %v6964
        %v6969 = vmul.f32 %v6730, %v6965
        %v6970 = vmul.f32 %v6731, %v6966
        %v6971 = vmul.f32 %v6732, %v6967
        %v6972 = vmax.f32 %v6968, 0.0
        %v6973 = vmax.f32 %v6969, 0.0
        %v6974 = vmax.f32 %v6970, 0.0
        %v6975 = vmax.f32 %v6971, 0.0
        %v6976 = vmax.f32 %v6972, %v6973
        %v6977 = vmax.f32 %v6976, %v6974
        %v6978 = vmax.f32 %v6977, %v6975
        %6979 = vst [vmem:[#allocation3] sm:$0xff] %v6978
        %v6980 = vld [vmem:[#allocation3] ss:$2 sm:$0xf]
        %s6981 = scalar_lea.vmem [#allocation3], 1
        %v6982 = vld [vmem:[%s6981] ss:$2 sm:$0xf]
        %v6983 = vmax.f32 %v6980, %v6982
        %6984 = vst [vmem:[%s348] sm:$0xf] %v6983
        %s6985 = sand.u32 %s184, 1
        %s6986 = scalar_lea.sflag [#allocation6], %s6985
        %s6987 = sand.u32 %s184, 1
        %s6988 = smul.addr %s6987, 4
        %s6989 = scalar_lea.vmem [#allocation13], %s6988
        // Predicated region
        $region69: #{tpu_custom_call.1} parent=47 // pred_check
          %p6990 = pneg %p194
        $region70: #{tpu_custom_call.1} parent=47 // pred_check_branch
          %6992 = sbr.rel (%p6990) target = $region72
        $region71: #{tpu_custom_call.1} parent=47 // pred_region
          %6994 = vsyncadd %s6986, 0
          %s6995 = smul.addr %s24, 4
          %s6996 = scalar_lea.hbm %s7, %s6995
          %s6998 = sshll.u32 %s6989, 4
          %s6999 = int_to_ptr.vmem [resolvable:$true] %s6998
          %s7000 = sshll.u32 %s6996, 4
          %s7001 = int_to_ptr.hbm [resolvable:$true] %s7000
          %7003 = dma.vmem_to_hbm [thread:$0]  %s6999, 64, %s7001, %s6986
        $region72: #{tpu_custom_call.1} parent=47 // pred_fallthru
          _
      $region48: #{tpu_custom_call.1} parent=5 // pred_fallthru
        _
      %p7004 = scmp.le.s32.totalorder 2, %s19
      // Predicated region
      $region73: #{tpu_custom_call.1} parent=5 // pred_check
        %p7005 = pneg %p7004
      $region74: #{tpu_custom_call.1} parent=5 // pred_check_branch
        %7007 = sbr.rel (%p7005) target = $region76
      $region75: #{tpu_custom_call.1} parent=5 // pred_region
        %s7008 = ssub.s32 %s19, 2
        // Predicated region
        $region77: #{tpu_custom_call.1} parent=75 // pred_check
          %p7009 = pneg %p200
        $region78: #{tpu_custom_call.1} parent=75 // pred_check_branch
          %7011 = sbr.rel (%p7009) target = $region80
        $region79: #{tpu_custom_call.1} parent=75 // pred_region
          %s7012 = sand.u32 %s185, 1
          %s7013 = scalar_lea.sflag [#allocation6], %s7012
          %s7014 = sand.u32 %s185, 1
          %s7015 = smul.addr %s7014, 4
          %s7016 = scalar_lea.vmem [#allocation13], %s7015
          %7018 = dma.done %s7013, 64
        $region80: #{tpu_custom_call.1} parent=75 // pred_fallthru
          _
      $region76: #{tpu_custom_call.1} parent=5 // pred_fallthru
        _
    $region6: #{tpu_custom_call.1} parent=1 // loop_footer
      %s23 = sadd.s32 1, %s19
    $region7: #{tpu_custom_call.1} parent=1 // loop_footer_branch
      %18 = sbr.rel target = $region3
    $region8: #{tpu_custom_call.1} parent=1 // loop_exit
      _
    %7019 = vsyncpa [#allocation5], 1
    %s7020 = scalar_lea.sflag [#allocation5], 1
    %7021 = vsyncpa %s7020, 1
    %7022 = vsyncpa [#allocation8], 1
    %7023 = vsyncpa [#allocation11], 1
    %7024 = vsyncpa [#allocation6], 1
    %s7025 = scalar_lea.sflag [#allocation6], 1
    %7026 = vsyncpa %s7025, 1

</llo_original>
